<compile_context>
chip_gen: v5e
topology: v5e:2x2
jax: 0.10.0
libtpu: 0.0.40
codegen_flags: <defaults>
</compile_context>

<pallas_src>
import jax
import jax.numpy as jnp
from jax.experimental import pallas as pl
from jax.experimental.pallas import tpu as pltpu


D_IN = 784
H1 = 784
H2 = 784
H3 = 256
D_OUT = 1

# Lane-aligned padded sizes (applied once, to the parameters only).
D_PAD = 896        # 7 * 128: pads the 784-wide *output* dims of l1 / l2
OUT_PAD = 128      # pads the final 1-wide output dim of `out`

# Offsets into the concatenated bias row (all 128-aligned).
_B1_LO, _B1_HI = 0, D_PAD                      # l1 bias (784 real + zero pad)
_B2_LO, _B2_HI = _B1_HI, _B1_HI + D_PAD        # l2 bias
_B3_LO, _B3_HI = _B2_HI, _B2_HI + H3           # l3 bias (256, no pad)
_B4_LO, _B4_HI = _B3_HI, _B3_HI + OUT_PAD      # out bias (1 real + zero pad)
_B_TOTAL = _B4_HI                              # 2176 = 17 * 128


def d_kernel(x_ref, w1_ref, w2_ref, w3_ref, w4_ref, b_ref, o_ref):
    # x_ref: (tb, 784) f32; weights: bf16, stored (in, out); b_ref: (1, 2176) f32.
    x = x_ref[...].astype(jnp.bfloat16)

    b1 = b_ref[:, _B1_LO:_B1_HI]
    b2 = b_ref[:, _B2_LO:_B2_HI]
    b3 = b_ref[:, _B3_LO:_B3_HI]
    b4 = b_ref[:, _B4_LO:_B4_LO + D_OUT]       # only the real output column

    # f32 MXU accumulation + f32 bias add, then bf16 ReLU (bf16 VALU on v6e/v7x).
    h = jnp.dot(x, w1_ref[...], preferred_element_type=jnp.float32) + b1
    h = jnp.maximum(h.astype(jnp.bfloat16), 0.0)

    h = jnp.dot(h, w2_ref[...], preferred_element_type=jnp.float32) + b2
    h = jnp.maximum(h.astype(jnp.bfloat16), 0.0)

    h = jnp.dot(h, w3_ref[...], preferred_element_type=jnp.float32) + b3
    h = jnp.maximum(h.astype(jnp.bfloat16), 0.0)

    logit = jnp.dot(h, w4_ref[...], preferred_element_type=jnp.float32)
    logit = logit[:, :D_OUT] + b4              # drop the padded output lanes
    o_ref[...] = jax.nn.sigmoid(logit).astype(o_ref.dtype)


def _pad_to(a, shape):
    pads = [(0, s - d) for d, s in zip(a.shape, shape)]
    return jnp.pad(a, pads)


def prepare_params(params):
    """One-time parameter prep (call once per parameter update, NOT per forward).

    Pads weight *output* dims to lane multiples, casts weights to bf16, and
    concatenates all biases into a single (1, 2176) f32 row.
    Weights must be stored (in, out) — transpose PyTorch (out, in) first.
    """
    w1, b1, w2, b2, w3, b3, w4, b4 = params
    assert w1.shape == (D_IN, H1), w1.shape
    assert w2.shape == (H1, H2), w2.shape
    assert w3.shape == (H2, H3), w3.shape
    assert w4.shape == (H3, D_OUT), w4.shape

    w1p = _pad_to(w1, (D_IN, D_PAD)).astype(jnp.bfloat16)    # (784, 896)
    w2p = _pad_to(w2, (D_PAD, D_PAD)).astype(jnp.bfloat16)   # (896, 896)
    w3p = _pad_to(w3, (D_PAD, H3)).astype(jnp.bfloat16)      # (896, 256)
    w4p = _pad_to(w4, (H3, OUT_PAD)).astype(jnp.bfloat16)    # (256, 128)
    b_all = jnp.concatenate(
        [
            _pad_to(b1.reshape(1, -1), (1, D_PAD)),
            _pad_to(b2.reshape(1, -1), (1, D_PAD)),
            b3.reshape(1, -1),
            _pad_to(b4.reshape(1, -1), (1, OUT_PAD)),
        ],
        axis=1,
    ).astype(jnp.float32)
    return w1p, w2p, w3p, w4p, b_all


def _pick_tiling(B, tb_max=512):
    """Return (B_pad, tb).

    Small batches (<=256): a single tile padded only to the 8-row sublane
    multiple.  Large batches: tb grows up to tb_max while keeping at least
    2 grid steps so both v7x TensorCores get work.
    """
    B8 = ((B + 7) // 8) * 8
    if B8 <= 256:
        return B8, B8
    tb = 256
    while tb * 2 <= tb_max and B8 >= tb * 4:
        tb *= 2
    B_pad = ((B8 + tb - 1) // tb) * tb
    return B_pad, tb


def discriminator_forward(x, prepared, *, tb_max=512):
    """x: (B, 784) float32, prepared = prepare_params(...) -> (B, 1) float32."""
    B = x.shape[0]
    w1p, w2p, w3p, w4p, b_all = prepared

    B_pad, tb = _pick_tiling(B, tb_max)
    x = x.astype(jnp.float32)
    if B_pad != B:
        x = jnp.pad(x, ((0, B_pad - B), (0, 0)))   # batch rows only; no feature pad

    def resident(shape):
        # Whole-array block, same block every grid step (stays VMEM-resident).
        return pl.BlockSpec(shape, lambda i: (0, 0))

    grid = (B_pad // tb,)
    out = pl.pallas_call(
        d_kernel,
        out_shape=jax.ShapeDtypeStruct((B_pad, D_OUT), jnp.float32),
        grid_spec=pltpu.PrefetchScalarGridSpec(
            num_scalar_prefetch=0,
            grid=grid,
            in_specs=[
                pl.BlockSpec((tb, D_IN), lambda i: (i, 0)),   # x (full 784 last dim)
                resident((D_IN, D_PAD)),                      # w1
                resident((D_PAD, D_PAD)),                     # w2
                resident((D_PAD, H3)),                        # w3
                resident((H3, OUT_PAD)),                      # w4
                resident((1, _B_TOTAL)),                      # all biases
            ],
            out_specs=pl.BlockSpec((tb, D_OUT), lambda i: (i, 0)),
        ),
        compiler_params=pltpu.CompilerParams(
            dimension_semantics=("parallel",),
            vmem_limit_bytes=32 * 1024 * 1024,
        ),
    )(x, w1p, w2p, w3p, w4p, b_all)

    return out if B_pad == B else out[:B]


def init_params(key):
    """Deterministic parameter init (PyTorch-Linear-style uniform fan-in)."""
    def linear(key, fan_in, fan_out):
        kw, kb = jax.random.split(key)
        bound = 1.0 / jnp.sqrt(fan_in)
        # stored as (in, out) == W.T relative to PyTorch's (out, in)
        w = jax.random.uniform(kw, (fan_in, fan_out), jnp.float32, -bound, bound)
        b = jax.random.uniform(kb, (1, fan_out), jnp.float32, -bound, bound)
        return w, b

    k1, k2, k3, k4 = jax.random.split(key, 4)
    w1, b1 = linear(k1, D_IN, H1)
    w2, b2 = linear(k2, H1, H2)
    w3, b3 = linear(k3, H2, H3)
    w4, b4 = linear(k4, H3, D_OUT)
    return (w1, b1, w2, b2, w3, b3, w4, b4)


def reference_forward(x, params):
    """Pure-JAX f32 reference (matches the PyTorch module)."""
    w1, b1, w2, b2, w3, b3, w4, b4 = params
    h = jax.nn.relu(x @ w1 + b1)
    h = jax.nn.relu(h @ w2 + b2)
    h = jax.nn.relu(h @ w3 + b3)
    return jax.nn.sigmoid(h @ w4 + b4)


if __name__ == "__main__":
    key = jax.random.PRNGKey(0)
    kx, kx2, kp = jax.random.split(key, 3)

    params = init_params(kp)
    prepared = prepare_params(params)          # hoisted: once per param update
    fwd = jax.jit(discriminator_forward)

    # Small inference-style batch (single small tile, no batch padding).
    B = 8
    x = jax.random.normal(kx, (B, D_IN), jnp.float32)
    out = jax.block_until_ready(fwd(x, prepared))
    ref = reference_forward(x, params)
    assert out.shape == (B, D_OUT), out.shape
    # bf16 MXU inputs vs f32 reference -> ~1e-3 error on the probabilities.
    assert jnp.allclose(out, ref, atol=2e-2, rtol=0.0), "mismatch vs reference (B=8)"

    # Larger batch exercising the multi-tile grid + batch-row padding path.
    B2 = 520
    x2 = jax.random.normal(kx2, (B2, D_IN), jnp.float32)
    out2 = jax.block_until_ready(fwd(x2, prepared))
    ref2 = reference_forward(x2, params)
    assert out2.shape == (B2, D_OUT), out2.shape
    assert jnp.allclose(out2, ref2, atol=2e-2, rtol=0.0), "mismatch vs reference (B=520)"

    print("KERNEL_OK")
</pallas_src>

<mosaic_0001>
module attributes {stable_mosaic.version = 11 : i64} {
  func.func @d_kernel(%arg0: i32, %arg1: memref<8x784xf32, #tpu.memory_space<vmem>>, %arg2: memref<784x896xbf16, #tpu.memory_space<vmem>>, %arg3: memref<896x896xbf16, #tpu.memory_space<vmem>>, %arg4: memref<896x256xbf16, #tpu.memory_space<vmem>>, %arg5: memref<256x128xbf16, #tpu.memory_space<vmem>>, %arg6: memref<1x2176xf32, #tpu.memory_space<vmem>>, %arg7: memref<8x1xf32, #tpu.memory_space<vmem>>) attributes {dimension_semantics = [#tpu.dimension_semantics<parallel>], iteration_bounds = array<i64: 1>, scalar_prefetch = 0 : i64, scratch_operands = 0 : i64, tpu.core_type = #tpu.core_type<tc>, window_params = [{transform_indices = @transform_0, window_bounds = array<i64: 8, 784>}, {pipeline_mode = #tpu.pipeline_mode<synchronous>, transform_indices = @transform_1, window_bounds = array<i64: 784, 896>}, {pipeline_mode = #tpu.pipeline_mode<synchronous>, transform_indices = @transform_2, window_bounds = array<i64: 896, 896>}, {pipeline_mode = #tpu.pipeline_mode<synchronous>, transform_indices = @transform_3, window_bounds = array<i64: 896, 256>}, {pipeline_mode = #tpu.pipeline_mode<synchronous>, transform_indices = @transform_4, window_bounds = array<i64: 256, 128>}, {pipeline_mode = #tpu.pipeline_mode<synchronous>, transform_indices = @transform_5, window_bounds = array<i64: 1, 2176>}, {transform_indices = @transform_6, window_bounds = array<i64: 8, 1>}]} {
    %c0 = arith.constant 0 : index
    %c0_0 = arith.constant 0 : index
    %0 = vector.load %arg1[%c0, %c0_0] : memref<8x784xf32, #tpu.memory_space<vmem>>, vector<8x784xf32>
    %1 = arith.truncf %0 : vector<8x784xf32> to vector<8x784xbf16>
    %c0_1 = arith.constant 0 : index
    %c0_2 = arith.constant 0 : index
    %2 = vector.load %arg6[%c0_1, %c0_2] : memref<1x2176xf32, #tpu.memory_space<vmem>>, vector<1x896xf32>
    %c0_3 = arith.constant 0 : index
    %c896 = arith.constant 896 : index
    %3 = vector.load %arg6[%c0_3, %c896] : memref<1x2176xf32, #tpu.memory_space<vmem>>, vector<1x896xf32>
    %c0_4 = arith.constant 0 : index
    %c1792 = arith.constant 1792 : index
    %4 = vector.load %arg6[%c0_4, %c1792] : memref<1x2176xf32, #tpu.memory_space<vmem>>, vector<1x256xf32>
    %c0_5 = arith.constant 0 : index
    %c2048 = arith.constant 2048 : index
    %5 = vector.load %arg6[%c0_5, %c2048] : memref<1x2176xf32, #tpu.memory_space<vmem>>, vector<1x1xf32>
    %c0_6 = arith.constant 0 : index
    %c0_7 = arith.constant 0 : index
    %6 = vector.load %arg2[%c0_6, %c0_7] : memref<784x896xbf16, #tpu.memory_space<vmem>>, vector<784x896xbf16>
    %cst = arith.constant dense<0.000000e+00> : vector<8x896xf32>
    %7 = tpu.matmul %1, %6, %cst {dimension_numbers = #tpu.dot_dimension_numbers<[1], [0], [0], [1], [0, 0, 1, 1], [], []>} : vector<8x784xbf16>, vector<784x896xbf16>, vector<8x896xf32> -> vector<8x896xf32>
    %8 = vector.broadcast %2 : vector<1x896xf32> to vector<8x896xf32>
    %9 = arith.addf %7, %8 : vector<8x896xf32>
    %10 = arith.truncf %9 : vector<8x896xf32> to vector<8x896xbf16>
    %cst_8 = arith.constant 0.000000e+00 : bf16
    %11 = vector.broadcast %cst_8 : bf16 to vector<8x896xbf16>
    %12 = arith.maximumf %10, %11 : vector<8x896xbf16>
    %c0_9 = arith.constant 0 : index
    %c0_10 = arith.constant 0 : index
    %13 = vector.load %arg3[%c0_9, %c0_10] : memref<896x896xbf16, #tpu.memory_space<vmem>>, vector<896x896xbf16>
    %cst_11 = arith.constant dense<0.000000e+00> : vector<8x896xf32>
    %14 = tpu.matmul %12, %13, %cst_11 {dimension_numbers = #tpu.dot_dimension_numbers<[1], [0], [0], [1], [0, 0, 1, 1], [], []>} : vector<8x896xbf16>, vector<896x896xbf16>, vector<8x896xf32> -> vector<8x896xf32>
    %15 = vector.broadcast %3 : vector<1x896xf32> to vector<8x896xf32>
    %16 = arith.addf %14, %15 : vector<8x896xf32>
    %17 = arith.truncf %16 : vector<8x896xf32> to vector<8x896xbf16>
    %cst_12 = arith.constant 0.000000e+00 : bf16
    %18 = vector.broadcast %cst_12 : bf16 to vector<8x896xbf16>
    %19 = arith.maximumf %17, %18 : vector<8x896xbf16>
    %c0_13 = arith.constant 0 : index
    %c0_14 = arith.constant 0 : index
    %20 = vector.load %arg4[%c0_13, %c0_14] : memref<896x256xbf16, #tpu.memory_space<vmem>>, vector<896x256xbf16>
    %cst_15 = arith.constant dense<0.000000e+00> : vector<8x256xf32>
    %21 = tpu.matmul %19, %20, %cst_15 {dimension_numbers = #tpu.dot_dimension_numbers<[1], [0], [0], [1], [0, 0, 1, 1], [], []>} : vector<8x896xbf16>, vector<896x256xbf16>, vector<8x256xf32> -> vector<8x256xf32>
    %22 = vector.broadcast %4 : vector<1x256xf32> to vector<8x256xf32>
    %23 = arith.addf %21, %22 : vector<8x256xf32>
    %24 = arith.truncf %23 : vector<8x256xf32> to vector<8x256xbf16>
    %cst_16 = arith.constant 0.000000e+00 : bf16
    %25 = vector.broadcast %cst_16 : bf16 to vector<8x256xbf16>
    %26 = arith.maximumf %24, %25 : vector<8x256xbf16>
    %c0_17 = arith.constant 0 : index
    %c0_18 = arith.constant 0 : index
    %27 = vector.load %arg5[%c0_17, %c0_18] : memref<256x128xbf16, #tpu.memory_space<vmem>>, vector<256x128xbf16>
    %cst_19 = arith.constant dense<0.000000e+00> : vector<8x128xf32>
    %28 = tpu.matmul %26, %27, %cst_19 {dimension_numbers = #tpu.dot_dimension_numbers<[1], [0], [0], [1], [0, 0, 1, 1], [], []>} : vector<8x256xbf16>, vector<256x128xbf16>, vector<8x128xf32> -> vector<8x128xf32>
    %29 = vector.extract_strided_slice %28 {offsets = [0, 0], sizes = [8, 1], strides = [1, 1]} : vector<8x128xf32> to vector<8x1xf32>
    %30 = vector.broadcast %5 : vector<1x1xf32> to vector<8x1xf32>
    %31 = arith.addf %29, %30 : vector<8x1xf32>
    %32 = arith.negf %31 : vector<8x1xf32>
    %33 = math.exp %32 : vector<8x1xf32>
    %cst_20 = arith.constant 1.000000e+00 : f32
    %34 = vector.broadcast %cst_20 : f32 to vector<8x1xf32>
    %35 = arith.addf %34, %33 : vector<8x1xf32>
    %36 = arith.divf %34, %35 : vector<8x1xf32>
    %c0_21 = arith.constant 0 : index
    %c0_22 = arith.constant 0 : index
    %37 = vector.load %arg7[%c0_21, %c0_22] : memref<8x1xf32, #tpu.memory_space<vmem>>, vector<8x1xf32>
    tpu.vector_store %arg7[%c0_21, %c0_22], %36 {strides = array<i32>} : memref<8x1xf32, #tpu.memory_space<vmem>>, vector<8x1xf32>,
    return
  }
  func.func @transform_0(%arg0: i32) -> (i32, i32) {
    %c0_i32 = arith.constant 0 : i32
    %c0_i32_0 = arith.constant 0 : i32
    return %arg0, %c0_i32 : i32, i32
  }
  func.func @transform_1(%arg0: i32) -> (i32, i32) {
    %c0_i32 = arith.constant 0 : i32
    %c0_i32_0 = arith.constant 0 : i32
    %c0_i32_1 = arith.constant 0 : i32
    return %c0_i32, %c0_i32_0 : i32, i32
  }
  func.func @transform_2(%arg0: i32) -> (i32, i32) {
    %c0_i32 = arith.constant 0 : i32
    %c0_i32_0 = arith.constant 0 : i32
    %c0_i32_1 = arith.constant 0 : i32
    return %c0_i32, %c0_i32_0 : i32, i32
  }
  func.func @transform_3(%arg0: i32) -> (i32, i32) {
    %c0_i32 = arith.constant 0 : i32
    %c0_i32_0 = arith.constant 0 : i32
    %c0_i32_1 = arith.constant 0 : i32
    return %c0_i32, %c0_i32_0 : i32, i32
  }
  func.func @transform_4(%arg0: i32) -> (i32, i32) {
    %c0_i32 = arith.constant 0 : i32
    %c0_i32_0 = arith.constant 0 : i32
    %c0_i32_1 = arith.constant 0 : i32
    return %c0_i32, %c0_i32_0 : i32, i32
  }
  func.func @transform_5(%arg0: i32) -> (i32, i32) {
    %c0_i32 = arith.constant 0 : i32
    %c0_i32_0 = arith.constant 0 : i32
    %c0_i32_1 = arith.constant 0 : i32
    return %c0_i32, %c0_i32_0 : i32, i32
  }
  func.func @transform_6(%arg0: i32) -> (i32, i32) {
    %c0_i32 = arith.constant 0 : i32
    %c0_i32_0 = arith.constant 0 : i32
    return %arg0, %c0_i32 : i32, i32
  }
}

</mosaic_0001>

<llo_original>
// kernel: discriminator_forward.1
$region0: #{discriminator_forward.1}
  #allocation0 [shape = 'u32[]', space=smem, size = 0x4, offset = 0x4, fixed_abs, tag = 'smem constant byte address 0x4 - core index']
  #allocation1 [shape = 'u32[72,128]{1,0:T(1,128)}', space=vmem, size = 0x9000, scoped, tag = 'internal scratch']
  %s0 = inlined_call_operand.hbm [shape: f32[8,784], index: 0, kind: input, shape index: {}]
  %s1 = inlined_call_operand.hbm [shape: bf16[784,896], index: 1, kind: input, shape index: {}]
  %s2 = inlined_call_operand.hbm [shape: bf16[896,896], index: 2, kind: input, shape index: {}]
  %s3 = inlined_call_operand.hbm [shape: bf16[896,256], index: 3, kind: input, shape index: {}]
  %s4 = inlined_call_operand.hbm [shape: bf16[256,128], index: 4, kind: input, shape index: {}]
  %s5 = inlined_call_operand.hbm [shape: f32[1,2176], index: 5, kind: input, shape index: {}]
  %s6 = inlined_call_operand.vmem [shape: f32[8,1], index: 6, kind: output, shape index: {}]
  %s7 = sld [smem:[#allocation0]]
  $region58: #{discriminator_forward.1} parent=0
    _
  %s9 = ssub.s32 1, %s7
  %s10 = scalar_select 0, %s9, %s7
  $region1: #{discriminator_forward.1} parent=0
    #allocation2 [shape = 'u8[28672]{0}', space=vmem, size = 0x7000, scoped, tag = 'input window, operand 0, single buffered']
    #allocation3 [shape = 's32[1]{0}', space=sflag, size = 0x4, scoped, tag = 'scoped memory for discriminator_forward.1']
    #allocation4 [shape = 'u8[1404928]{0}', space=vmem, size = 0x157000, scoped, tag = 'input window, operand 1, single buffered']
    #allocation5 [shape = 's32[1]{0}', space=sflag, size = 0x4, scoped, tag = 'scoped memory for discriminator_forward.1']
    #allocation6 [shape = 'u8[1605632]{0}', space=vmem, size = 0x188000, scoped, tag = 'input window, operand 2, single buffered']
    #allocation7 [shape = 'u8[458752]{0}', space=vmem, size = 0x70000, scoped, tag = 'input window, operand 3, single buffered']
    #allocation8 [shape = 's32[1]{0}', space=sflag, size = 0x4, scoped, tag = 'scoped memory for discriminator_forward.1']
    #allocation9 [shape = 'u8[65536]{0}', space=vmem, size = 0x10000, scoped, tag = 'input window, operand 4, single buffered']
    #allocation10 [shape = 'u8[8704]{0}', space=vmem, size = 0x2400, scoped, tag = 'input window, operand 5, single buffered']
    #allocation11 [shape = 's32[1]{0}', space=sflag, size = 0x4, scoped, tag = 'scoped memory for discriminator_forward.1']
    %11 = vsyncpa [#allocation3], 0
    %12 = vsyncpa [#allocation5], 0
    %13 = vsyncpa [#allocation8], 0
    %14 = vsyncpa [#allocation11], 0
    // Predicated region
    $region2: #{discriminator_forward.1} parent=1 // pred_check
      _
    $region3: #{discriminator_forward.1} parent=1 // pred_check_branch
      %16 = sbr.rel (0) target = $region5
    $region4: #{discriminator_forward.1} parent=1 // pred_region
      %18 = vsyncadd [#allocation3], 0
      %s20 = sshll.u32 %s0, 4
      %s21 = int_to_ptr.hbm [resolvable:$true] %s20
      %s22 = sshll.u32 [#allocation2], 4
      %s23 = int_to_ptr.vmem [resolvable:$true] %s22
      %25 = dma.hbm_to_vmem [thread:$0]  %s21, 896, %s23, [#allocation3]
    $region5: #{discriminator_forward.1} parent=1 // pred_fallthru
      _
    // Predicated region
    $region6: #{discriminator_forward.1} parent=1 // pred_check
      _
    $region7: #{discriminator_forward.1} parent=1 // pred_check_branch
      %27 = sbr.rel (0) target = $region9
    $region8: #{discriminator_forward.1} parent=1 // pred_region
      %29 = vsyncadd [#allocation5], 0
      %s30 = sshll.u32 %s1, 4
      %s31 = int_to_ptr.hbm [resolvable:$true] %s30
      %s32 = sshll.u32 [#allocation4], 4
      %s33 = int_to_ptr.vmem [resolvable:$true] %s32
      %38 = dma.hbm_to_vmem [thread:$0]  %s31, 43904, %s33, [#allocation5], 448, 448, 28
    $region9: #{discriminator_forward.1} parent=1 // pred_fallthru
      _
    // Predicated region
    $region10: #{discriminator_forward.1} parent=1 // pred_check
      _
    $region11: #{discriminator_forward.1} parent=1 // pred_check_branch
      %40 = sbr.rel (0) target = $region13
    $region12: #{discriminator_forward.1} parent=1 // pred_region
      %42 = vsyncadd [#allocation5], 0
      %s43 = sshll.u32 %s2, 4
      %s44 = int_to_ptr.hbm [resolvable:$true] %s43
      %s45 = sshll.u32 [#allocation6], 4
      %s46 = int_to_ptr.vmem [resolvable:$true] %s45
      %51 = dma.hbm_to_vmem [thread:$0]  %s44, 50176, %s46, [#allocation5], 448, 448, 28
    $region13: #{discriminator_forward.1} parent=1 // pred_fallthru
      _
    // Predicated region
    $region14: #{discriminator_forward.1} parent=1 // pred_check
      _
    $region15: #{discriminator_forward.1} parent=1 // pred_check_branch
      %53 = sbr.rel (0) target = $region17
    $region16: #{discriminator_forward.1} parent=1 // pred_region
      %55 = vsyncadd [#allocation8], 0
      %s56 = sshll.u32 %s3, 4
      %s57 = int_to_ptr.hbm [resolvable:$true] %s56
      %s58 = sshll.u32 [#allocation7], 4
      %s59 = int_to_ptr.vmem [resolvable:$true] %s58
      %64 = dma.hbm_to_vmem [thread:$0]  %s57, 14336, %s59, [#allocation8], 128, 128, 8
    $region17: #{discriminator_forward.1} parent=1 // pred_fallthru
      _
    // Predicated region
    $region18: #{discriminator_forward.1} parent=1 // pred_check
      _
    $region19: #{discriminator_forward.1} parent=1 // pred_check_branch
      %66 = sbr.rel (0) target = $region21
    $region20: #{discriminator_forward.1} parent=1 // pred_region
      %68 = vsyncadd [#allocation8], 0
      %s69 = sshll.u32 %s4, 4
      %s70 = int_to_ptr.hbm [resolvable:$true] %s69
      %s71 = sshll.u32 [#allocation9], 4
      %s72 = int_to_ptr.vmem [resolvable:$true] %s71
      %77 = dma.hbm_to_vmem [thread:$0]  %s70, 2048, %s72, [#allocation8], 64, 64, 4
    $region21: #{discriminator_forward.1} parent=1 // pred_fallthru
      _
    // Predicated region
    $region22: #{discriminator_forward.1} parent=1 // pred_check
      _
    $region23: #{discriminator_forward.1} parent=1 // pred_check_branch
      %79 = sbr.rel (0) target = $region25
    $region24: #{discriminator_forward.1} parent=1 // pred_region
      %81 = vsyncadd [#allocation11], 0
      %s83 = sshll.u32 %s5, 4
      %s84 = int_to_ptr.hbm [resolvable:$true] %s83
      %s85 = sshll.u32 [#allocation10], 4
      %s86 = int_to_ptr.vmem [resolvable:$true] %s85
      %88 = dma.hbm_to_vmem [thread:$0]  %s84, 272, %s86, [#allocation11]
    $region25: #{discriminator_forward.1} parent=1 // pred_fallthru
      _
    // Predicated region
    $region26: #{discriminator_forward.1} parent=1 // pred_check
      _
    $region27: #{discriminator_forward.1} parent=1 // pred_check_branch
      %90 = sbr.rel (0) target = $region29
    $region28: #{discriminator_forward.1} parent=1 // pred_region
      %92 = dma.done [#allocation3], 896
    $region29: #{discriminator_forward.1} parent=1 // pred_fallthru
      _
    // Predicated region
    $region30: #{discriminator_forward.1} parent=1 // pred_check
      _
    $region31: #{discriminator_forward.1} parent=1 // pred_check_branch
      %94 = sbr.rel (0) target = $region33
    $region32: #{discriminator_forward.1} parent=1 // pred_region
      %96 = dma.done [#allocation5], 43904
    $region33: #{discriminator_forward.1} parent=1 // pred_fallthru
      _
    // Predicated region
    $region34: #{discriminator_forward.1} parent=1 // pred_check
      _
    $region35: #{discriminator_forward.1} parent=1 // pred_check_branch
      %98 = sbr.rel (0) target = $region37
    $region36: #{discriminator_forward.1} parent=1 // pred_region
      %100 = dma.done [#allocation5], 50176
    $region37: #{discriminator_forward.1} parent=1 // pred_fallthru
      _
    // Predicated region
    $region38: #{discriminator_forward.1} parent=1 // pred_check
      _
    $region39: #{discriminator_forward.1} parent=1 // pred_check_branch
      %102 = sbr.rel (0) target = $region41
    $region40: #{discriminator_forward.1} parent=1 // pred_region
      %104 = dma.done [#allocation8], 14336
    $region41: #{discriminator_forward.1} parent=1 // pred_fallthru
      _
    // Predicated region
    $region42: #{discriminator_forward.1} parent=1 // pred_check
      _
    $region43: #{discriminator_forward.1} parent=1 // pred_check_branch
      %106 = sbr.rel (0) target = $region45
    $region44: #{discriminator_forward.1} parent=1 // pred_region
      %108 = dma.done [#allocation8], 2048
    $region45: #{discriminator_forward.1} parent=1 // pred_fallthru
      _
    // Predicated region
    $region46: #{discriminator_forward.1} parent=1 // pred_check
      _
    $region47: #{discriminator_forward.1} parent=1 // pred_check_branch
      %110 = sbr.rel (0) target = $region49
    $region48: #{discriminator_forward.1} parent=1 // pred_region
      %112 = dma.done [#allocation11], 272
    $region49: #{discriminator_forward.1} parent=1 // pred_fallthru
      _
    %v114 = vld [vmem:[#allocation2] sm:$0xff]
    %v115 = vld [vmem:[#allocation2 + $0x8] sm:$0xff]
    %v116 = vld [vmem:[#allocation2 + $0x10] sm:$0xff]
    %v117 = vld [vmem:[#allocation2 + $0x18] sm:$0xff]
    %v118 = vld [vmem:[#allocation2 + $0x20] sm:$0xff]
    %v119 = vld [vmem:[#allocation2 + $0x28] sm:$0xff]
    %v120 = vld [vmem:[#allocation2 + $0x30] sm:$0xff]
    %v121 = vpack.c.bf16 %v114, %v114
    %v122 = vpack.c.bf16 %v115, %v115
    %v123 = vpack.c.bf16 %v116, %v116
    %v124 = vpack.c.bf16 %v117, %v117
    %v125 = vpack.c.bf16 %v118, %v118
    %v126 = vpack.c.bf16 %v119, %v119
    %v127 = vpack.c.bf16 %v120, %v120
    %v128 = vld [vmem:[#allocation10] sm:$0xff]
    %v129 = vld [vmem:[#allocation10 + $0x7] sm:$0xff]
    %v130 = vld [vmem:[#allocation10 + $0xe] sm:$0x3]
    %v131 = vld [vmem:[#allocation10 + $0x10] sm:$0x1]
    %v132 = vld [vmem:[#allocation4] sm:$0xff]
    %v133 = vld [vmem:[#allocation4 + $0x8] sm:$0xff]
    %v134 = vld [vmem:[#allocation4 + $0x10] sm:$0xff]
    %v135 = vld [vmem:[#allocation4 + $0x18] sm:$0xf]
    %v136 = vld [vmem:[#allocation4 + $0x1c] sm:$0xff]
    %v137 = vld [vmem:[#allocation4 + $0x24] sm:$0xff]
    %v138 = vld [vmem:[#allocation4 + $0x2c] sm:$0xff]
    %v139 = vld [vmem:[#allocation4 + $0x34] sm:$0xf]
    %v140 = vld [vmem:[#allocation4 + $0x38] sm:$0xff]
    %v141 = vld [vmem:[#allocation4 + $0x40] sm:$0xff]
    %v142 = vld [vmem:[#allocation4 + $0x48] sm:$0xff]
    %v143 = vld [vmem:[#allocation4 + $0x50] sm:$0xf]
    %v144 = vld [vmem:[#allocation4 + $0x54] sm:$0xff]
    %v145 = vld [vmem:[#allocation4 + $0x5c] sm:$0xff]
    %v146 = vld [vmem:[#allocation4 + $0x64] sm:$0xff]
    %v147 = vld [vmem:[#allocation4 + $0x6c] sm:$0xf]
    %v148 = vld [vmem:[#allocation4 + $0x70] sm:$0xff]
    %v149 = vld [vmem:[#allocation4 + $0x78] sm:$0xff]
    %v150 = vld [vmem:[#allocation4 + $0x80] sm:$0xff]
    %v151 = vld [vmem:[#allocation4 + $0x88] sm:$0xf]
    %v152 = vld [vmem:[#allocation4 + $0x8c] sm:$0xff]
    %v153 = vld [vmem:[#allocation4 + $0x94] sm:$0xff]
    %v154 = vld [vmem:[#allocation4 + $0x9c] sm:$0xff]
    %v155 = vld [vmem:[#allocation4 + $0xa4] sm:$0xf]
    %v156 = vld [vmem:[#allocation4 + $0xa8] sm:$0xff]
    %v157 = vld [vmem:[#allocation4 + $0xb0] sm:$0xff]
    %v158 = vld [vmem:[#allocation4 + $0xb8] sm:$0xff]
    %v159 = vld [vmem:[#allocation4 + $0xc0] sm:$0xf]
    %v160 = vld [vmem:[#allocation4 + $0xc4] sm:$0xff]
    %v161 = vld [vmem:[#allocation4 + $0xcc] sm:$0xff]
    %v162 = vld [vmem:[#allocation4 + $0xd4] sm:$0xff]
    %v163 = vld [vmem:[#allocation4 + $0xdc] sm:$0xf]
    %v164 = vld [vmem:[#allocation4 + $0xe0] sm:$0xff]
    %v165 = vld [vmem:[#allocation4 + $0xe8] sm:$0xff]
    %v166 = vld [vmem:[#allocation4 + $0xf0] sm:$0xff]
    %v167 = vld [vmem:[#allocation4 + $0xf8] sm:$0xf]
    %v168 = vld [vmem:[#allocation4 + $0xfc] sm:$0xff]
    %v169 = vld [vmem:[#allocation4 + $0x104] sm:$0xff]
    %v170 = vld [vmem:[#allocation4 + $0x10c] sm:$0xff]
    %v171 = vld [vmem:[#allocation4 + $0x114] sm:$0xf]
    %v172 = vld [vmem:[#allocation4 + $0x118] sm:$0xff]
    %v173 = vld [vmem:[#allocation4 + $0x120] sm:$0xff]
    %v174 = vld [vmem:[#allocation4 + $0x128] sm:$0xff]
    %v175 = vld [vmem:[#allocation4 + $0x130] sm:$0xf]
    %v176 = vld [vmem:[#allocation4 + $0x134] sm:$0xff]
    %v177 = vld [vmem:[#allocation4 + $0x13c] sm:$0xff]
    %v178 = vld [vmem:[#allocation4 + $0x144] sm:$0xff]
    %v179 = vld [vmem:[#allocation4 + $0x14c] sm:$0xf]
    %v180 = vld [vmem:[#allocation4 + $0x150] sm:$0xff]
    %v181 = vld [vmem:[#allocation4 + $0x158] sm:$0xff]
    %v182 = vld [vmem:[#allocation4 + $0x160] sm:$0xff]
    %v183 = vld [vmem:[#allocation4 + $0x168] sm:$0xf]
    %v184 = vld [vmem:[#allocation4 + $0x16c] sm:$0xff]
    %v185 = vld [vmem:[#allocation4 + $0x174] sm:$0xff]
    %v186 = vld [vmem:[#allocation4 + $0x17c] sm:$0xff]
    %v187 = vld [vmem:[#allocation4 + $0x184] sm:$0xf]
    %v188 = vld [vmem:[#allocation4 + $0x188] sm:$0xff]
    %v189 = vld [vmem:[#allocation4 + $0x190] sm:$0xff]
    %v190 = vld [vmem:[#allocation4 + $0x198] sm:$0xff]
    %v191 = vld [vmem:[#allocation4 + $0x1a0] sm:$0xf]
    %v192 = vld [vmem:[#allocation4 + $0x1a4] sm:$0xff]
    %v193 = vld [vmem:[#allocation4 + $0x1ac] sm:$0xff]
    %v194 = vld [vmem:[#allocation4 + $0x1b4] sm:$0xff]
    %v195 = vld [vmem:[#allocation4 + $0x1bc] sm:$0xf]
    %v196 = vld [vmem:[#allocation4 + $0x1c0] sm:$0xff]
    %v197 = vld [vmem:[#allocation4 + $0x1c8] sm:$0xff]
    %v198 = vld [vmem:[#allocation4 + $0x1d0] sm:$0xff]
    %v199 = vld [vmem:[#allocation4 + $0x1d8] sm:$0xf]
    %v200 = vld [vmem:[#allocation4 + $0x1dc] sm:$0xff]
    %v201 = vld [vmem:[#allocation4 + $0x1e4] sm:$0xff]
    %v202 = vld [vmem:[#allocation4 + $0x1ec] sm:$0xff]
    %v203 = vld [vmem:[#allocation4 + $0x1f4] sm:$0xf]
    %v204 = vld [vmem:[#allocation4 + $0x1f8] sm:$0xff]
    %v205 = vld [vmem:[#allocation4 + $0x200] sm:$0xff]
    %v206 = vld [vmem:[#allocation4 + $0x208] sm:$0xff]
    %v207 = vld [vmem:[#allocation4 + $0x210] sm:$0xf]
    %v208 = vld [vmem:[#allocation4 + $0x214] sm:$0xff]
    %v209 = vld [vmem:[#allocation4 + $0x21c] sm:$0xff]
    %v210 = vld [vmem:[#allocation4 + $0x224] sm:$0xff]
    %v211 = vld [vmem:[#allocation4 + $0x22c] sm:$0xf]
    %v212 = vld [vmem:[#allocation4 + $0x230] sm:$0xff]
    %v213 = vld [vmem:[#allocation4 + $0x238] sm:$0xff]
    %v214 = vld [vmem:[#allocation4 + $0x240] sm:$0xff]
    %v215 = vld [vmem:[#allocation4 + $0x248] sm:$0xf]
    %v216 = vld [vmem:[#allocation4 + $0x24c] sm:$0xff]
    %v217 = vld [vmem:[#allocation4 + $0x254] sm:$0xff]
    %v218 = vld [vmem:[#allocation4 + $0x25c] sm:$0xff]
    %v219 = vld [vmem:[#allocation4 + $0x264] sm:$0xf]
    %v220 = vld [vmem:[#allocation4 + $0x268] sm:$0xff]
    %v221 = vld [vmem:[#allocation4 + $0x270] sm:$0xff]
    %v222 = vld [vmem:[#allocation4 + $0x278] sm:$0xff]
    %v223 = vld [vmem:[#allocation4 + $0x280] sm:$0xf]
    %v224 = vld [vmem:[#allocation4 + $0x284] sm:$0xff]
    %v225 = vld [vmem:[#allocation4 + $0x28c] sm:$0xff]
    %v226 = vld [vmem:[#allocation4 + $0x294] sm:$0xff]
    %v227 = vld [vmem:[#allocation4 + $0x29c] sm:$0xf]
    %v228 = vld [vmem:[#allocation4 + $0x2a0] sm:$0xff]
    %v229 = vld [vmem:[#allocation4 + $0x2a8] sm:$0xff]
    %v230 = vld [vmem:[#allocation4 + $0x2b0] sm:$0xff]
    %v231 = vld [vmem:[#allocation4 + $0x2b8] sm:$0xf]
    %v232 = vld [vmem:[#allocation4 + $0x2bc] sm:$0xff]
    %v233 = vld [vmem:[#allocation4 + $0x2c4] sm:$0xff]
    %v234 = vld [vmem:[#allocation4 + $0x2cc] sm:$0xff]
    %v235 = vld [vmem:[#allocation4 + $0x2d4] sm:$0xf]
    %v236 = vld [vmem:[#allocation4 + $0x2d8] sm:$0xff]
    %v237 = vld [vmem:[#allocation4 + $0x2e0] sm:$0xff]
    %v238 = vld [vmem:[#allocation4 + $0x2e8] sm:$0xff]
    %v239 = vld [vmem:[#allocation4 + $0x2f0] sm:$0xf]
    %v240 = vld [vmem:[#allocation4 + $0x2f4] sm:$0xff]
    %v241 = vld [vmem:[#allocation4 + $0x2fc] sm:$0xff]
    %v242 = vld [vmem:[#allocation4 + $0x304] sm:$0xff]
    %v243 = vld [vmem:[#allocation4 + $0x30c] sm:$0xf]
    %v244 = vld [vmem:[#allocation4 + $0x310] sm:$0xff]
    %v245 = vld [vmem:[#allocation4 + $0x318] sm:$0xff]
    %v246 = vld [vmem:[#allocation4 + $0x320] sm:$0xff]
    %v247 = vld [vmem:[#allocation4 + $0x328] sm:$0xf]
    %v248 = vld [vmem:[#allocation4 + $0x32c] sm:$0xff]
    %v249 = vld [vmem:[#allocation4 + $0x334] sm:$0xff]
    %v250 = vld [vmem:[#allocation4 + $0x33c] sm:$0xff]
    %v251 = vld [vmem:[#allocation4 + $0x344] sm:$0xf]
    %v252 = vld [vmem:[#allocation4 + $0x348] sm:$0xff]
    %v253 = vld [vmem:[#allocation4 + $0x350] sm:$0xff]
    %v254 = vld [vmem:[#allocation4 + $0x358] sm:$0xff]
    %v255 = vld [vmem:[#allocation4 + $0x360] sm:$0xf]
    %v256 = vld [vmem:[#allocation4 + $0x364] sm:$0xff]
    %v257 = vld [vmem:[#allocation4 + $0x36c] sm:$0xff]
    %v258 = vld [vmem:[#allocation4 + $0x374] sm:$0xff]
    %v259 = vld [vmem:[#allocation4 + $0x37c] sm:$0xf]
    %v260 = vld [vmem:[#allocation4 + $0x380] sm:$0xff]
    %v261 = vld [vmem:[#allocation4 + $0x388] sm:$0xff]
    %v262 = vld [vmem:[#allocation4 + $0x390] sm:$0xff]
    %v263 = vld [vmem:[#allocation4 + $0x398] sm:$0xf]
    %v264 = vld [vmem:[#allocation4 + $0x39c] sm:$0xff]
    %v265 = vld [vmem:[#allocation4 + $0x3a4] sm:$0xff]
    %v266 = vld [vmem:[#allocation4 + $0x3ac] sm:$0xff]
    %v267 = vld [vmem:[#allocation4 + $0x3b4] sm:$0xf]
    %v268 = vld [vmem:[#allocation4 + $0x3b8] sm:$0xff]
    %v269 = vld [vmem:[#allocation4 + $0x3c0] sm:$0xff]
    %v270 = vld [vmem:[#allocation4 + $0x3c8] sm:$0xff]
    %v271 = vld [vmem:[#allocation4 + $0x3d0] sm:$0xf]
    %v272 = vld [vmem:[#allocation4 + $0x3d4] sm:$0xff]
    %v273 = vld [vmem:[#allocation4 + $0x3dc] sm:$0xff]
    %v274 = vld [vmem:[#allocation4 + $0x3e4] sm:$0xff]
    %v275 = vld [vmem:[#allocation4 + $0x3ec] sm:$0xf]
    %v276 = vld [vmem:[#allocation4 + $0x3f0] sm:$0xff]
    %v277 = vld [vmem:[#allocation4 + $0x3f8] sm:$0xff]
    %v278 = vld [vmem:[#allocation4 + $0x400] sm:$0xff]
    %v279 = vld [vmem:[#allocation4 + $0x408] sm:$0xf]
    %v280 = vld [vmem:[#allocation4 + $0x40c] sm:$0xff]
    %v281 = vld [vmem:[#allocation4 + $0x414] sm:$0xff]
    %v282 = vld [vmem:[#allocation4 + $0x41c] sm:$0xff]
    %v283 = vld [vmem:[#allocation4 + $0x424] sm:$0xf]
    %v284 = vld [vmem:[#allocation4 + $0x428] sm:$0xff]
    %v285 = vld [vmem:[#allocation4 + $0x430] sm:$0xff]
    %v286 = vld [vmem:[#allocation4 + $0x438] sm:$0xff]
    %v287 = vld [vmem:[#allocation4 + $0x440] sm:$0xf]
    %v288 = vld [vmem:[#allocation4 + $0x444] sm:$0xff]
    %v289 = vld [vmem:[#allocation4 + $0x44c] sm:$0xff]
    %v290 = vld [vmem:[#allocation4 + $0x454] sm:$0xff]
    %v291 = vld [vmem:[#allocation4 + $0x45c] sm:$0xf]
    %v292 = vld [vmem:[#allocation4 + $0x460] sm:$0xff]
    %v293 = vld [vmem:[#allocation4 + $0x468] sm:$0xff]
    %v294 = vld [vmem:[#allocation4 + $0x470] sm:$0xff]
    %v295 = vld [vmem:[#allocation4 + $0x478] sm:$0xf]
    %v296 = vld [vmem:[#allocation4 + $0x47c] sm:$0xff]
    %v297 = vld [vmem:[#allocation4 + $0x484] sm:$0xff]
    %v298 = vld [vmem:[#allocation4 + $0x48c] sm:$0xff]
    %v299 = vld [vmem:[#allocation4 + $0x494] sm:$0xf]
    %v300 = vld [vmem:[#allocation4 + $0x498] sm:$0xff]
    %v301 = vld [vmem:[#allocation4 + $0x4a0] sm:$0xff]
    %v302 = vld [vmem:[#allocation4 + $0x4a8] sm:$0xff]
    %v303 = vld [vmem:[#allocation4 + $0x4b0] sm:$0xf]
    %v304 = vld [vmem:[#allocation4 + $0x4b4] sm:$0xff]
    %v305 = vld [vmem:[#allocation4 + $0x4bc] sm:$0xff]
    %v306 = vld [vmem:[#allocation4 + $0x4c4] sm:$0xff]
    %v307 = vld [vmem:[#allocation4 + $0x4cc] sm:$0xf]
    %v308 = vld [vmem:[#allocation4 + $0x4d0] sm:$0xff]
    %v309 = vld [vmem:[#allocation4 + $0x4d8] sm:$0xff]
    %v310 = vld [vmem:[#allocation4 + $0x4e0] sm:$0xff]
    %v311 = vld [vmem:[#allocation4 + $0x4e8] sm:$0xf]
    %v312 = vld [vmem:[#allocation4 + $0x4ec] sm:$0xff]
    %v313 = vld [vmem:[#allocation4 + $0x4f4] sm:$0xff]
    %v314 = vld [vmem:[#allocation4 + $0x4fc] sm:$0xff]
    %v315 = vld [vmem:[#allocation4 + $0x504] sm:$0xf]
    %v316 = vld [vmem:[#allocation4 + $0x508] sm:$0xff]
    %v317 = vld [vmem:[#allocation4 + $0x510] sm:$0xff]
    %v318 = vld [vmem:[#allocation4 + $0x518] sm:$0xff]
    %v319 = vld [vmem:[#allocation4 + $0x520] sm:$0xf]
    %v320 = vld [vmem:[#allocation4 + $0x524] sm:$0xff]
    %v321 = vld [vmem:[#allocation4 + $0x52c] sm:$0xff]
    %v322 = vld [vmem:[#allocation4 + $0x534] sm:$0xff]
    %v323 = vld [vmem:[#allocation4 + $0x53c] sm:$0xf]
    %v324 = vld [vmem:[#allocation4 + $0x540] sm:$0xff]
    %v325 = vld [vmem:[#allocation4 + $0x548] sm:$0xff]
    %v326 = vld [vmem:[#allocation4 + $0x550] sm:$0xff]
    %v327 = vld [vmem:[#allocation4 + $0x558] sm:$0xf]
    %v328 = vld [vmem:[#allocation4 + $0x55c] sm:$0xff]
    %v329 = vld [vmem:[#allocation4 + $0x564] sm:$0xff]
    %v330 = vld [vmem:[#allocation4 + $0x56c] sm:$0xff]
    %v331 = vld [vmem:[#allocation4 + $0x574] sm:$0xf]
    %v332 = vld [vmem:[#allocation4 + $0x578] sm:$0xff]
    %v333 = vld [vmem:[#allocation4 + $0x580] sm:$0xff]
    %v334 = vld [vmem:[#allocation4 + $0x588] sm:$0xff]
    %v335 = vld [vmem:[#allocation4 + $0x590] sm:$0xf]
    %v336 = vld [vmem:[#allocation4 + $0x594] sm:$0xff]
    %v337 = vld [vmem:[#allocation4 + $0x59c] sm:$0xff]
    %v338 = vld [vmem:[#allocation4 + $0x5a4] sm:$0xff]
    %v339 = vld [vmem:[#allocation4 + $0x5ac] sm:$0xf]
    %v340 = vld [vmem:[#allocation4 + $0x5b0] sm:$0xff]
    %v341 = vld [vmem:[#allocation4 + $0x5b8] sm:$0xff]
    %v342 = vld [vmem:[#allocation4 + $0x5c0] sm:$0xff]
    %v343 = vld [vmem:[#allocation4 + $0x5c8] sm:$0xf]
    %v344 = vld [vmem:[#allocation4 + $0x5cc] sm:$0xff]
    %v345 = vld [vmem:[#allocation4 + $0x5d4] sm:$0xff]
    %v346 = vld [vmem:[#allocation4 + $0x5dc] sm:$0xff]
    %v347 = vld [vmem:[#allocation4 + $0x5e4] sm:$0xf]
    %v348 = vld [vmem:[#allocation4 + $0x5e8] sm:$0xff]
    %v349 = vld [vmem:[#allocation4 + $0x5f0] sm:$0xff]
    %v350 = vld [vmem:[#allocation4 + $0x5f8] sm:$0xff]
    %v351 = vld [vmem:[#allocation4 + $0x600] sm:$0xf]
    %v352 = vld [vmem:[#allocation4 + $0x604] sm:$0xff]
    %v353 = vld [vmem:[#allocation4 + $0x60c] sm:$0xff]
    %v354 = vld [vmem:[#allocation4 + $0x614] sm:$0xff]
    %v355 = vld [vmem:[#allocation4 + $0x61c] sm:$0xf]
    %v356 = vld [vmem:[#allocation4 + $0x620] sm:$0xff]
    %v357 = vld [vmem:[#allocation4 + $0x628] sm:$0xff]
    %v358 = vld [vmem:[#allocation4 + $0x630] sm:$0xff]
    %v359 = vld [vmem:[#allocation4 + $0x638] sm:$0xf]
    %v360 = vld [vmem:[#allocation4 + $0x63c] sm:$0xff]
    %v361 = vld [vmem:[#allocation4 + $0x644] sm:$0xff]
    %v362 = vld [vmem:[#allocation4 + $0x64c] sm:$0xff]
    %v363 = vld [vmem:[#allocation4 + $0x654] sm:$0xf]
    %v364 = vld [vmem:[#allocation4 + $0x658] sm:$0xff]
    %v365 = vld [vmem:[#allocation4 + $0x660] sm:$0xff]
    %v366 = vld [vmem:[#allocation4 + $0x668] sm:$0xff]
    %v367 = vld [vmem:[#allocation4 + $0x670] sm:$0xf]
    %v368 = vld [vmem:[#allocation4 + $0x674] sm:$0xff]
    %v369 = vld [vmem:[#allocation4 + $0x67c] sm:$0xff]
    %v370 = vld [vmem:[#allocation4 + $0x684] sm:$0xff]
    %v371 = vld [vmem:[#allocation4 + $0x68c] sm:$0xf]
    %v372 = vld [vmem:[#allocation4 + $0x690] sm:$0xff]
    %v373 = vld [vmem:[#allocation4 + $0x698] sm:$0xff]
    %v374 = vld [vmem:[#allocation4 + $0x6a0] sm:$0xff]
    %v375 = vld [vmem:[#allocation4 + $0x6a8] sm:$0xf]
    %v376 = vld [vmem:[#allocation4 + $0x6ac] sm:$0xff]
    %v377 = vld [vmem:[#allocation4 + $0x6b4] sm:$0xff]
    %v378 = vld [vmem:[#allocation4 + $0x6bc] sm:$0xff]
    %v379 = vld [vmem:[#allocation4 + $0x6c4] sm:$0xf]
    %v380 = vld [vmem:[#allocation4 + $0x6c8] sm:$0xff]
    %v381 = vld [vmem:[#allocation4 + $0x6d0] sm:$0xff]
    %v382 = vld [vmem:[#allocation4 + $0x6d8] sm:$0xff]
    %v383 = vld [vmem:[#allocation4 + $0x6e0] sm:$0xf]
    %v384 = vld [vmem:[#allocation4 + $0x6e4] sm:$0xff]
    %v385 = vld [vmem:[#allocation4 + $0x6ec] sm:$0xff]
    %v386 = vld [vmem:[#allocation4 + $0x6f4] sm:$0xff]
    %v387 = vld [vmem:[#allocation4 + $0x6fc] sm:$0xf]
    %v388 = vld [vmem:[#allocation4 + $0x700] sm:$0xff]
    %v389 = vld [vmem:[#allocation4 + $0x708] sm:$0xff]
    %v390 = vld [vmem:[#allocation4 + $0x710] sm:$0xff]
    %v391 = vld [vmem:[#allocation4 + $0x718] sm:$0xf]
    %v392 = vld [vmem:[#allocation4 + $0x71c] sm:$0xff]
    %v393 = vld [vmem:[#allocation4 + $0x724] sm:$0xff]
    %v394 = vld [vmem:[#allocation4 + $0x72c] sm:$0xff]
    %v395 = vld [vmem:[#allocation4 + $0x734] sm:$0xf]
    %v396 = vld [vmem:[#allocation4 + $0x738] sm:$0xff]
    %v397 = vld [vmem:[#allocation4 + $0x740] sm:$0xff]
    %v398 = vld [vmem:[#allocation4 + $0x748] sm:$0xff]
    %v399 = vld [vmem:[#allocation4 + $0x750] sm:$0xf]
    %v400 = vld [vmem:[#allocation4 + $0x754] sm:$0xff]
    %v401 = vld [vmem:[#allocation4 + $0x75c] sm:$0xff]
    %v402 = vld [vmem:[#allocation4 + $0x764] sm:$0xff]
    %v403 = vld [vmem:[#allocation4 + $0x76c] sm:$0xf]
    %v404 = vld [vmem:[#allocation4 + $0x770] sm:$0xff]
    %v405 = vld [vmem:[#allocation4 + $0x778] sm:$0xff]
    %v406 = vld [vmem:[#allocation4 + $0x780] sm:$0xff]
    %v407 = vld [vmem:[#allocation4 + $0x788] sm:$0xf]
    %v408 = vld [vmem:[#allocation4 + $0x78c] sm:$0xff]
    %v409 = vld [vmem:[#allocation4 + $0x794] sm:$0xff]
    %v410 = vld [vmem:[#allocation4 + $0x79c] sm:$0xff]
    %v411 = vld [vmem:[#allocation4 + $0x7a4] sm:$0xf]
    %v412 = vld [vmem:[#allocation4 + $0x7a8] sm:$0xff]
    %v413 = vld [vmem:[#allocation4 + $0x7b0] sm:$0xff]
    %v414 = vld [vmem:[#allocation4 + $0x7b8] sm:$0xff]
    %v415 = vld [vmem:[#allocation4 + $0x7c0] sm:$0xf]
    %v416 = vld [vmem:[#allocation4 + $0x7c4] sm:$0xff]
    %v417 = vld [vmem:[#allocation4 + $0x7cc] sm:$0xff]
    %v418 = vld [vmem:[#allocation4 + $0x7d4] sm:$0xff]
    %v419 = vld [vmem:[#allocation4 + $0x7dc] sm:$0xf]
    %v420 = vld [vmem:[#allocation4 + $0x7e0] sm:$0xff]
    %v421 = vld [vmem:[#allocation4 + $0x7e8] sm:$0xff]
    %v422 = vld [vmem:[#allocation4 + $0x7f0] sm:$0xff]
    %v423 = vld [vmem:[#allocation4 + $0x7f8] sm:$0xf]
    %v424 = vld [vmem:[#allocation4 + $0x7fc] sm:$0xff]
    %v425 = vld [vmem:[#allocation4 + $0x804] sm:$0xff]
    %v426 = vld [vmem:[#allocation4 + $0x80c] sm:$0xff]
    %v427 = vld [vmem:[#allocation4 + $0x814] sm:$0xf]
    %v428 = vld [vmem:[#allocation4 + $0x818] sm:$0xff]
    %v429 = vld [vmem:[#allocation4 + $0x820] sm:$0xff]
    %v430 = vld [vmem:[#allocation4 + $0x828] sm:$0xff]
    %v431 = vld [vmem:[#allocation4 + $0x830] sm:$0xf]
    %v432 = vld [vmem:[#allocation4 + $0x834] sm:$0xff]
    %v433 = vld [vmem:[#allocation4 + $0x83c] sm:$0xff]
    %v434 = vld [vmem:[#allocation4 + $0x844] sm:$0xff]
    %v435 = vld [vmem:[#allocation4 + $0x84c] sm:$0xf]
    %v436 = vld [vmem:[#allocation4 + $0x850] sm:$0xff]
    %v437 = vld [vmem:[#allocation4 + $0x858] sm:$0xff]
    %v438 = vld [vmem:[#allocation4 + $0x860] sm:$0xff]
    %v439 = vld [vmem:[#allocation4 + $0x868] sm:$0xf]
    %v440 = vld [vmem:[#allocation4 + $0x86c] sm:$0xff]
    %v441 = vld [vmem:[#allocation4 + $0x874] sm:$0xff]
    %v442 = vld [vmem:[#allocation4 + $0x87c] sm:$0xff]
    %v443 = vld [vmem:[#allocation4 + $0x884] sm:$0xf]
    %v444 = vld [vmem:[#allocation4 + $0x888] sm:$0xff]
    %v445 = vld [vmem:[#allocation4 + $0x890] sm:$0xff]
    %v446 = vld [vmem:[#allocation4 + $0x898] sm:$0xff]
    %v447 = vld [vmem:[#allocation4 + $0x8a0] sm:$0xf]
    %v448 = vld [vmem:[#allocation4 + $0x8a4] sm:$0xff]
    %v449 = vld [vmem:[#allocation4 + $0x8ac] sm:$0xff]
    %v450 = vld [vmem:[#allocation4 + $0x8b4] sm:$0xff]
    %v451 = vld [vmem:[#allocation4 + $0x8bc] sm:$0xf]
    %v452 = vld [vmem:[#allocation4 + $0x8c0] sm:$0xff]
    %v453 = vld [vmem:[#allocation4 + $0x8c8] sm:$0xff]
    %v454 = vld [vmem:[#allocation4 + $0x8d0] sm:$0xff]
    %v455 = vld [vmem:[#allocation4 + $0x8d8] sm:$0xf]
    %v456 = vld [vmem:[#allocation4 + $0x8dc] sm:$0xff]
    %v457 = vld [vmem:[#allocation4 + $0x8e4] sm:$0xff]
    %v458 = vld [vmem:[#allocation4 + $0x8ec] sm:$0xff]
    %v459 = vld [vmem:[#allocation4 + $0x8f4] sm:$0xf]
    %v460 = vld [vmem:[#allocation4 + $0x8f8] sm:$0xff]
    %v461 = vld [vmem:[#allocation4 + $0x900] sm:$0xff]
    %v462 = vld [vmem:[#allocation4 + $0x908] sm:$0xff]
    %v463 = vld [vmem:[#allocation4 + $0x910] sm:$0xf]
    %v464 = vld [vmem:[#allocation4 + $0x914] sm:$0xff]
    %v465 = vld [vmem:[#allocation4 + $0x91c] sm:$0xff]
    %v466 = vld [vmem:[#allocation4 + $0x924] sm:$0xff]
    %v467 = vld [vmem:[#allocation4 + $0x92c] sm:$0xf]
    %v468 = vld [vmem:[#allocation4 + $0x930] sm:$0xff]
    %v469 = vld [vmem:[#allocation4 + $0x938] sm:$0xff]
    %v470 = vld [vmem:[#allocation4 + $0x940] sm:$0xff]
    %v471 = vld [vmem:[#allocation4 + $0x948] sm:$0xf]
    %v472 = vld [vmem:[#allocation4 + $0x94c] sm:$0xff]
    %v473 = vld [vmem:[#allocation4 + $0x954] sm:$0xff]
    %v474 = vld [vmem:[#allocation4 + $0x95c] sm:$0xff]
    %v475 = vld [vmem:[#allocation4 + $0x964] sm:$0xf]
    %v476 = vld [vmem:[#allocation4 + $0x968] sm:$0xff]
    %v477 = vld [vmem:[#allocation4 + $0x970] sm:$0xff]
    %v478 = vld [vmem:[#allocation4 + $0x978] sm:$0xff]
    %v479 = vld [vmem:[#allocation4 + $0x980] sm:$0xf]
    %v480 = vld [vmem:[#allocation4 + $0x984] sm:$0xff]
    %v481 = vld [vmem:[#allocation4 + $0x98c] sm:$0xff]
    %v482 = vld [vmem:[#allocation4 + $0x994] sm:$0xff]
    %v483 = vld [vmem:[#allocation4 + $0x99c] sm:$0xf]
    %v484 = vld [vmem:[#allocation4 + $0x9a0] sm:$0xff]
    %v485 = vld [vmem:[#allocation4 + $0x9a8] sm:$0xff]
    %v486 = vld [vmem:[#allocation4 + $0x9b0] sm:$0xff]
    %v487 = vld [vmem:[#allocation4 + $0x9b8] sm:$0xf]
    %v488 = vld [vmem:[#allocation4 + $0x9bc] sm:$0xff]
    %v489 = vld [vmem:[#allocation4 + $0x9c4] sm:$0xff]
    %v490 = vld [vmem:[#allocation4 + $0x9cc] sm:$0xff]
    %v491 = vld [vmem:[#allocation4 + $0x9d4] sm:$0xf]
    %v492 = vld [vmem:[#allocation4 + $0x9d8] sm:$0xff]
    %v493 = vld [vmem:[#allocation4 + $0x9e0] sm:$0xff]
    %v494 = vld [vmem:[#allocation4 + $0x9e8] sm:$0xff]
    %v495 = vld [vmem:[#allocation4 + $0x9f0] sm:$0xf]
    %v496 = vld [vmem:[#allocation4 + $0x9f4] sm:$0xff]
    %v497 = vld [vmem:[#allocation4 + $0x9fc] sm:$0xff]
    %v498 = vld [vmem:[#allocation4 + $0xa04] sm:$0xff]
    %v499 = vld [vmem:[#allocation4 + $0xa0c] sm:$0xf]
    %v500 = vld [vmem:[#allocation4 + $0xa10] sm:$0xff]
    %v501 = vld [vmem:[#allocation4 + $0xa18] sm:$0xff]
    %v502 = vld [vmem:[#allocation4 + $0xa20] sm:$0xff]
    %v503 = vld [vmem:[#allocation4 + $0xa28] sm:$0xf]
    %v504 = vld [vmem:[#allocation4 + $0xa2c] sm:$0xff]
    %v505 = vld [vmem:[#allocation4 + $0xa34] sm:$0xff]
    %v506 = vld [vmem:[#allocation4 + $0xa3c] sm:$0xff]
    %v507 = vld [vmem:[#allocation4 + $0xa44] sm:$0xf]
    %v508 = vld [vmem:[#allocation4 + $0xa48] sm:$0xff]
    %v509 = vld [vmem:[#allocation4 + $0xa50] sm:$0xff]
    %v510 = vld [vmem:[#allocation4 + $0xa58] sm:$0xff]
    %v511 = vld [vmem:[#allocation4 + $0xa60] sm:$0xf]
    %v512 = vld [vmem:[#allocation4 + $0xa64] sm:$0xff]
    %v513 = vld [vmem:[#allocation4 + $0xa6c] sm:$0xff]
    %v514 = vld [vmem:[#allocation4 + $0xa74] sm:$0xff]
    %v515 = vld [vmem:[#allocation4 + $0xa7c] sm:$0xf]
    %v516 = vld [vmem:[#allocation4 + $0xa80] sm:$0xff]
    %v517 = vld [vmem:[#allocation4 + $0xa88] sm:$0xff]
    %v518 = vld [vmem:[#allocation4 + $0xa90] sm:$0xff]
    %v519 = vld [vmem:[#allocation4 + $0xa98] sm:$0xf]
    %v520 = vld [vmem:[#allocation4 + $0xa9c] sm:$0xff]
    %v521 = vld [vmem:[#allocation4 + $0xaa4] sm:$0xff]
    %v522 = vld [vmem:[#allocation4 + $0xaac] sm:$0xff]
    %v523 = vld [vmem:[#allocation4 + $0xab4] sm:$0xf]
    %v525 = vperm.slane %v128, 0
    %v526 = vperm.slane %v128, 1
    %v527 = vperm.slane %v128, 2
    %v528 = vperm.slane %v128, 3
    %v529 = vperm.slane %v128, 4
    %v530 = vperm.slane %v128, 5
    %v531 = vperm.slane %v128, 6
    %v931 = vunpack.c.l.b16 %v132
    %v932 = vunpack.c.h.b16 %v132
    %v933 = vunpack.c.l.b16 %v133
    %v934 = vunpack.c.h.b16 %v133
    %v935 = vunpack.c.l.b16 %v134
    %v936 = vunpack.c.h.b16 %v134
    %v937 = vunpack.c.l.b16 %v135
    %v938 = vunpack.c.l.b16 %v136
    %v939 = vunpack.c.h.b16 %v136
    %v940 = vunpack.c.l.b16 %v137
    %v941 = vunpack.c.h.b16 %v137
    %v942 = vunpack.c.l.b16 %v138
    %v943 = vunpack.c.h.b16 %v138
    %v944 = vunpack.c.l.b16 %v139
    %v945 = vunpack.c.l.b16 %v140
    %v946 = vunpack.c.h.b16 %v140
    %v947 = vunpack.c.l.b16 %v141
    %v948 = vunpack.c.h.b16 %v141
    %v949 = vunpack.c.l.b16 %v142
    %v950 = vunpack.c.h.b16 %v142
    %v951 = vunpack.c.l.b16 %v143
    %v952 = vunpack.c.l.b16 %v144
    %v953 = vunpack.c.h.b16 %v144
    %v954 = vunpack.c.l.b16 %v145
    %v955 = vunpack.c.h.b16 %v145
    %v956 = vunpack.c.l.b16 %v146
    %v957 = vunpack.c.h.b16 %v146
    %v958 = vunpack.c.l.b16 %v147
    %v959 = vunpack.c.l.b16 %v148
    %v960 = vunpack.c.h.b16 %v148
    %v961 = vunpack.c.l.b16 %v149
    %v962 = vunpack.c.h.b16 %v149
    %v963 = vunpack.c.l.b16 %v150
    %v964 = vunpack.c.h.b16 %v150
    %v965 = vunpack.c.l.b16 %v151
    %v966 = vunpack.c.l.b16 %v152
    %v967 = vunpack.c.h.b16 %v152
    %v968 = vunpack.c.l.b16 %v153
    %v969 = vunpack.c.h.b16 %v153
    %v970 = vunpack.c.l.b16 %v154
    %v971 = vunpack.c.h.b16 %v154
    %v972 = vunpack.c.l.b16 %v155
    %v973 = vunpack.c.l.b16 %v156
    %v974 = vunpack.c.h.b16 %v156
    %v975 = vunpack.c.l.b16 %v157
    %v976 = vunpack.c.h.b16 %v157
    %v977 = vunpack.c.l.b16 %v158
    %v978 = vunpack.c.h.b16 %v158
    %v979 = vunpack.c.l.b16 %v159
    %v980 = vunpack.c.l.b16 %v160
    %v981 = vunpack.c.h.b16 %v160
    %v982 = vunpack.c.l.b16 %v161
    %v983 = vunpack.c.h.b16 %v161
    %v984 = vunpack.c.l.b16 %v162
    %v985 = vunpack.c.h.b16 %v162
    %v986 = vunpack.c.l.b16 %v163
    %v987 = vunpack.c.l.b16 %v164
    %v988 = vunpack.c.h.b16 %v164
    %v989 = vunpack.c.l.b16 %v165
    %v990 = vunpack.c.h.b16 %v165
    %v991 = vunpack.c.l.b16 %v166
    %v992 = vunpack.c.h.b16 %v166
    %v993 = vunpack.c.l.b16 %v167
    %v994 = vunpack.c.l.b16 %v168
    %v995 = vunpack.c.h.b16 %v168
    %v996 = vunpack.c.l.b16 %v169
    %v997 = vunpack.c.h.b16 %v169
    %v998 = vunpack.c.l.b16 %v170
    %v999 = vunpack.c.h.b16 %v170
    %v1000 = vunpack.c.l.b16 %v171
    %v1001 = vunpack.c.l.b16 %v172
    %v1002 = vunpack.c.h.b16 %v172
    %v1003 = vunpack.c.l.b16 %v173
    %v1004 = vunpack.c.h.b16 %v173
    %v1005 = vunpack.c.l.b16 %v174
    %v1006 = vunpack.c.h.b16 %v174
    %v1007 = vunpack.c.l.b16 %v175
    %v1008 = vunpack.c.l.b16 %v176
    %v1009 = vunpack.c.h.b16 %v176
    %v1010 = vunpack.c.l.b16 %v177
    %v1011 = vunpack.c.h.b16 %v177
    %v1012 = vunpack.c.l.b16 %v178
    %v1013 = vunpack.c.h.b16 %v178
    %v1014 = vunpack.c.l.b16 %v179
    %v1015 = vunpack.c.l.b16 %v180
    %v1016 = vunpack.c.h.b16 %v180
    %v1017 = vunpack.c.l.b16 %v181
    %v1018 = vunpack.c.h.b16 %v181
    %v1019 = vunpack.c.l.b16 %v182
    %v1020 = vunpack.c.h.b16 %v182
    %v1021 = vunpack.c.l.b16 %v183
    %v1022 = vunpack.c.l.b16 %v184
    %v1023 = vunpack.c.h.b16 %v184
    %v1024 = vunpack.c.l.b16 %v185
    %v1025 = vunpack.c.h.b16 %v185
    %v1026 = vunpack.c.l.b16 %v186
    %v1027 = vunpack.c.h.b16 %v186
    %v1028 = vunpack.c.l.b16 %v187
    %v1029 = vunpack.c.l.b16 %v188
    %v1030 = vunpack.c.h.b16 %v188
    %v1031 = vunpack.c.l.b16 %v189
    %v1032 = vunpack.c.h.b16 %v189
    %v1033 = vunpack.c.l.b16 %v190
    %v1034 = vunpack.c.h.b16 %v190
    %v1035 = vunpack.c.l.b16 %v191
    %v1036 = vunpack.c.l.b16 %v192
    %v1037 = vunpack.c.h.b16 %v192
    %v1038 = vunpack.c.l.b16 %v193
    %v1039 = vunpack.c.h.b16 %v193
    %v1040 = vunpack.c.l.b16 %v194
    %v1041 = vunpack.c.h.b16 %v194
    %v1042 = vunpack.c.l.b16 %v195
    %v1043 = vunpack.c.l.b16 %v196
    %v1044 = vunpack.c.h.b16 %v196
    %v1045 = vunpack.c.l.b16 %v197
    %v1046 = vunpack.c.h.b16 %v197
    %v1047 = vunpack.c.l.b16 %v198
    %v1048 = vunpack.c.h.b16 %v198
    %v1049 = vunpack.c.l.b16 %v199
    %v1050 = vunpack.c.l.b16 %v200
    %v1051 = vunpack.c.h.b16 %v200
    %v1052 = vunpack.c.l.b16 %v201
    %v1053 = vunpack.c.h.b16 %v201
    %v1054 = vunpack.c.l.b16 %v202
    %v1055 = vunpack.c.h.b16 %v202
    %v1056 = vunpack.c.l.b16 %v203
    %v1057 = vunpack.c.l.b16 %v204
    %v1058 = vunpack.c.h.b16 %v204
    %v1059 = vunpack.c.l.b16 %v205
    %v1060 = vunpack.c.h.b16 %v205
    %v1061 = vunpack.c.l.b16 %v206
    %v1062 = vunpack.c.h.b16 %v206
    %v1063 = vunpack.c.l.b16 %v207
    %v1064 = vunpack.c.l.b16 %v208
    %v1065 = vunpack.c.h.b16 %v208
    %v1066 = vunpack.c.l.b16 %v209
    %v1067 = vunpack.c.h.b16 %v209
    %v1068 = vunpack.c.l.b16 %v210
    %v1069 = vunpack.c.h.b16 %v210
    %v1070 = vunpack.c.l.b16 %v211
    %v1071 = vunpack.c.l.b16 %v212
    %v1072 = vunpack.c.h.b16 %v212
    %v1073 = vunpack.c.l.b16 %v213
    %v1074 = vunpack.c.h.b16 %v213
    %v1075 = vunpack.c.l.b16 %v214
    %v1076 = vunpack.c.h.b16 %v214
    %v1077 = vunpack.c.l.b16 %v215
    %v1078 = vunpack.c.l.b16 %v216
    %v1079 = vunpack.c.h.b16 %v216
    %v1080 = vunpack.c.l.b16 %v217
    %v1081 = vunpack.c.h.b16 %v217
    %v1082 = vunpack.c.l.b16 %v218
    %v1083 = vunpack.c.h.b16 %v218
    %v1084 = vunpack.c.l.b16 %v219
    %v1085 = vunpack.c.l.b16 %v220
    %v1086 = vunpack.c.h.b16 %v220
    %v1087 = vunpack.c.l.b16 %v221
    %v1088 = vunpack.c.h.b16 %v221
    %v1089 = vunpack.c.l.b16 %v222
    %v1090 = vunpack.c.h.b16 %v222
    %v1091 = vunpack.c.l.b16 %v223
    %v1092 = vunpack.c.l.b16 %v224
    %v1093 = vunpack.c.h.b16 %v224
    %v1094 = vunpack.c.l.b16 %v225
    %v1095 = vunpack.c.h.b16 %v225
    %v1096 = vunpack.c.l.b16 %v226
    %v1097 = vunpack.c.h.b16 %v226
    %v1098 = vunpack.c.l.b16 %v227
    %v1099 = vunpack.c.l.b16 %v228
    %v1100 = vunpack.c.h.b16 %v228
    %v1101 = vunpack.c.l.b16 %v229
    %v1102 = vunpack.c.h.b16 %v229
    %v1103 = vunpack.c.l.b16 %v230
    %v1104 = vunpack.c.h.b16 %v230
    %v1105 = vunpack.c.l.b16 %v231
    %v1106 = vunpack.c.l.b16 %v232
    %v1107 = vunpack.c.h.b16 %v232
    %v1108 = vunpack.c.l.b16 %v233
    %v1109 = vunpack.c.h.b16 %v233
    %v1110 = vunpack.c.l.b16 %v234
    %v1111 = vunpack.c.h.b16 %v234
    %v1112 = vunpack.c.l.b16 %v235
    %v1113 = vunpack.c.l.b16 %v236
    %v1114 = vunpack.c.h.b16 %v236
    %v1115 = vunpack.c.l.b16 %v237
    %v1116 = vunpack.c.h.b16 %v237
    %v1117 = vunpack.c.l.b16 %v238
    %v1118 = vunpack.c.h.b16 %v238
    %v1119 = vunpack.c.l.b16 %v239
    %v1120 = vunpack.c.l.b16 %v240
    %v1121 = vunpack.c.h.b16 %v240
    %v1122 = vunpack.c.l.b16 %v241
    %v1123 = vunpack.c.h.b16 %v241
    %v1124 = vunpack.c.l.b16 %v242
    %v1125 = vunpack.c.h.b16 %v242
    %v1126 = vunpack.c.l.b16 %v243
    %v1127 = vunpack.c.l.b16 %v244
    %v1128 = vunpack.c.h.b16 %v244
    %v1129 = vunpack.c.l.b16 %v245
    %v1130 = vunpack.c.h.b16 %v245
    %v1131 = vunpack.c.l.b16 %v246
    %v1132 = vunpack.c.h.b16 %v246
    %v1133 = vunpack.c.l.b16 %v247
    %v1134 = vunpack.c.l.b16 %v248
    %v1135 = vunpack.c.h.b16 %v248
    %v1136 = vunpack.c.l.b16 %v249
    %v1137 = vunpack.c.h.b16 %v249
    %v1138 = vunpack.c.l.b16 %v250
    %v1139 = vunpack.c.h.b16 %v250
    %v1140 = vunpack.c.l.b16 %v251
    %v1141 = vunpack.c.l.b16 %v252
    %v1142 = vunpack.c.h.b16 %v252
    %v1143 = vunpack.c.l.b16 %v253
    %v1144 = vunpack.c.h.b16 %v253
    %v1145 = vunpack.c.l.b16 %v254
    %v1146 = vunpack.c.h.b16 %v254
    %v1147 = vunpack.c.l.b16 %v255
    %v1148 = vunpack.c.l.b16 %v256
    %v1149 = vunpack.c.h.b16 %v256
    %v1150 = vunpack.c.l.b16 %v257
    %v1151 = vunpack.c.h.b16 %v257
    %v1152 = vunpack.c.l.b16 %v258
    %v1153 = vunpack.c.h.b16 %v258
    %v1154 = vunpack.c.l.b16 %v259
    %v1155 = vunpack.c.l.b16 %v260
    %v1156 = vunpack.c.h.b16 %v260
    %v1157 = vunpack.c.l.b16 %v261
    %v1158 = vunpack.c.h.b16 %v261
    %v1159 = vunpack.c.l.b16 %v262
    %v1160 = vunpack.c.h.b16 %v262
    %v1161 = vunpack.c.l.b16 %v263
    %v1162 = vunpack.c.l.b16 %v264
    %v1163 = vunpack.c.h.b16 %v264
    %v1164 = vunpack.c.l.b16 %v265
    %v1165 = vunpack.c.h.b16 %v265
    %v1166 = vunpack.c.l.b16 %v266
    %v1167 = vunpack.c.h.b16 %v266
    %v1168 = vunpack.c.l.b16 %v267
    %v1169 = vunpack.c.l.b16 %v268
    %v1170 = vunpack.c.h.b16 %v268
    %v1171 = vunpack.c.l.b16 %v269
    %v1172 = vunpack.c.h.b16 %v269
    %v1173 = vunpack.c.l.b16 %v270
    %v1174 = vunpack.c.h.b16 %v270
    %v1175 = vunpack.c.l.b16 %v271
    %v1176 = vunpack.c.l.b16 %v272
    %v1177 = vunpack.c.h.b16 %v272
    %v1178 = vunpack.c.l.b16 %v273
    %v1179 = vunpack.c.h.b16 %v273
    %v1180 = vunpack.c.l.b16 %v274
    %v1181 = vunpack.c.h.b16 %v274
    %v1182 = vunpack.c.l.b16 %v275
    %v1183 = vunpack.c.l.b16 %v276
    %v1184 = vunpack.c.h.b16 %v276
    %v1185 = vunpack.c.l.b16 %v277
    %v1186 = vunpack.c.h.b16 %v277
    %v1187 = vunpack.c.l.b16 %v278
    %v1188 = vunpack.c.h.b16 %v278
    %v1189 = vunpack.c.l.b16 %v279
    %v1190 = vunpack.c.l.b16 %v280
    %v1191 = vunpack.c.h.b16 %v280
    %v1192 = vunpack.c.l.b16 %v281
    %v1193 = vunpack.c.h.b16 %v281
    %v1194 = vunpack.c.l.b16 %v282
    %v1195 = vunpack.c.h.b16 %v282
    %v1196 = vunpack.c.l.b16 %v283
    %v1197 = vunpack.c.l.b16 %v284
    %v1198 = vunpack.c.h.b16 %v284
    %v1199 = vunpack.c.l.b16 %v285
    %v1200 = vunpack.c.h.b16 %v285
    %v1201 = vunpack.c.l.b16 %v286
    %v1202 = vunpack.c.h.b16 %v286
    %v1203 = vunpack.c.l.b16 %v287
    %v1204 = vunpack.c.l.b16 %v288
    %v1205 = vunpack.c.h.b16 %v288
    %v1206 = vunpack.c.l.b16 %v289
    %v1207 = vunpack.c.h.b16 %v289
    %v1208 = vunpack.c.l.b16 %v290
    %v1209 = vunpack.c.h.b16 %v290
    %v1210 = vunpack.c.l.b16 %v291
    %v1211 = vunpack.c.l.b16 %v292
    %v1212 = vunpack.c.h.b16 %v292
    %v1213 = vunpack.c.l.b16 %v293
    %v1214 = vunpack.c.h.b16 %v293
    %v1215 = vunpack.c.l.b16 %v294
    %v1216 = vunpack.c.h.b16 %v294
    %v1217 = vunpack.c.l.b16 %v295
    %v1218 = vunpack.c.l.b16 %v296
    %v1219 = vunpack.c.h.b16 %v296
    %v1220 = vunpack.c.l.b16 %v297
    %v1221 = vunpack.c.h.b16 %v297
    %v1222 = vunpack.c.l.b16 %v298
    %v1223 = vunpack.c.h.b16 %v298
    %v1224 = vunpack.c.l.b16 %v299
    %v1225 = vunpack.c.l.b16 %v300
    %v1226 = vunpack.c.h.b16 %v300
    %v1227 = vunpack.c.l.b16 %v301
    %v1228 = vunpack.c.h.b16 %v301
    %v1229 = vunpack.c.l.b16 %v302
    %v1230 = vunpack.c.h.b16 %v302
    %v1231 = vunpack.c.l.b16 %v303
    %v1232 = vunpack.c.l.b16 %v304
    %v1233 = vunpack.c.h.b16 %v304
    %v1234 = vunpack.c.l.b16 %v305
    %v1235 = vunpack.c.h.b16 %v305
    %v1236 = vunpack.c.l.b16 %v306
    %v1237 = vunpack.c.h.b16 %v306
    %v1238 = vunpack.c.l.b16 %v307
    %v1239 = vunpack.c.l.b16 %v308
    %v1240 = vunpack.c.h.b16 %v308
    %v1241 = vunpack.c.l.b16 %v309
    %v1242 = vunpack.c.h.b16 %v309
    %v1243 = vunpack.c.l.b16 %v310
    %v1244 = vunpack.c.h.b16 %v310
    %v1245 = vunpack.c.l.b16 %v311
    %v1246 = vunpack.c.l.b16 %v312
    %v1247 = vunpack.c.h.b16 %v312
    %v1248 = vunpack.c.l.b16 %v313
    %v1249 = vunpack.c.h.b16 %v313
    %v1250 = vunpack.c.l.b16 %v314
    %v1251 = vunpack.c.h.b16 %v314
    %v1252 = vunpack.c.l.b16 %v315
    %v1253 = vunpack.c.l.b16 %v316
    %v1254 = vunpack.c.h.b16 %v316
    %v1255 = vunpack.c.l.b16 %v317
    %v1256 = vunpack.c.h.b16 %v317
    %v1257 = vunpack.c.l.b16 %v318
    %v1258 = vunpack.c.h.b16 %v318
    %v1259 = vunpack.c.l.b16 %v319
    %v1260 = vunpack.c.l.b16 %v320
    %v1261 = vunpack.c.h.b16 %v320
    %v1262 = vunpack.c.l.b16 %v321
    %v1263 = vunpack.c.h.b16 %v321
    %v1264 = vunpack.c.l.b16 %v322
    %v1265 = vunpack.c.h.b16 %v322
    %v1266 = vunpack.c.l.b16 %v323
    %v1267 = vunpack.c.l.b16 %v324
    %v1268 = vunpack.c.h.b16 %v324
    %v1269 = vunpack.c.l.b16 %v325
    %v1270 = vunpack.c.h.b16 %v325
    %v1271 = vunpack.c.l.b16 %v326
    %v1272 = vunpack.c.h.b16 %v326
    %v1273 = vunpack.c.l.b16 %v327
    %v1274 = vunpack.c.l.b16 %v328
    %v1275 = vunpack.c.h.b16 %v328
    %v1276 = vunpack.c.l.b16 %v329
    %v1277 = vunpack.c.h.b16 %v329
    %v1278 = vunpack.c.l.b16 %v330
    %v1279 = vunpack.c.h.b16 %v330
    %v1280 = vunpack.c.l.b16 %v331
    %v1281 = vunpack.c.l.b16 %v332
    %v1282 = vunpack.c.h.b16 %v332
    %v1283 = vunpack.c.l.b16 %v333
    %v1284 = vunpack.c.h.b16 %v333
    %v1285 = vunpack.c.l.b16 %v334
    %v1286 = vunpack.c.h.b16 %v334
    %v1287 = vunpack.c.l.b16 %v335
    %v1288 = vunpack.c.l.b16 %v336
    %v1289 = vunpack.c.h.b16 %v336
    %v1290 = vunpack.c.l.b16 %v337
    %v1291 = vunpack.c.h.b16 %v337
    %v1292 = vunpack.c.l.b16 %v338
    %v1293 = vunpack.c.h.b16 %v338
    %v1294 = vunpack.c.l.b16 %v339
    %v1295 = vunpack.c.l.b16 %v340
    %v1296 = vunpack.c.h.b16 %v340
    %v1297 = vunpack.c.l.b16 %v341
    %v1298 = vunpack.c.h.b16 %v341
    %v1299 = vunpack.c.l.b16 %v342
    %v1300 = vunpack.c.h.b16 %v342
    %v1301 = vunpack.c.l.b16 %v343
    %v1302 = vunpack.c.l.b16 %v344
    %v1303 = vunpack.c.h.b16 %v344
    %v1304 = vunpack.c.l.b16 %v345
    %v1305 = vunpack.c.h.b16 %v345
    %v1306 = vunpack.c.l.b16 %v346
    %v1307 = vunpack.c.h.b16 %v346
    %v1308 = vunpack.c.l.b16 %v347
    %v1309 = vunpack.c.l.b16 %v348
    %v1310 = vunpack.c.h.b16 %v348
    %v1311 = vunpack.c.l.b16 %v349
    %v1312 = vunpack.c.h.b16 %v349
    %v1313 = vunpack.c.l.b16 %v350
    %v1314 = vunpack.c.h.b16 %v350
    %v1315 = vunpack.c.l.b16 %v351
    %v1316 = vunpack.c.l.b16 %v352
    %v1317 = vunpack.c.h.b16 %v352
    %v1318 = vunpack.c.l.b16 %v353
    %v1319 = vunpack.c.h.b16 %v353
    %v1320 = vunpack.c.l.b16 %v354
    %v1321 = vunpack.c.h.b16 %v354
    %v1322 = vunpack.c.l.b16 %v355
    %v1323 = vunpack.c.l.b16 %v356
    %v1324 = vunpack.c.h.b16 %v356
    %v1325 = vunpack.c.l.b16 %v357
    %v1326 = vunpack.c.h.b16 %v357
    %v1327 = vunpack.c.l.b16 %v358
    %v1328 = vunpack.c.h.b16 %v358
    %v1329 = vunpack.c.l.b16 %v359
    %v1330 = vunpack.c.l.b16 %v360
    %v1331 = vunpack.c.h.b16 %v360
    %v1332 = vunpack.c.l.b16 %v361
    %v1333 = vunpack.c.h.b16 %v361
    %v1334 = vunpack.c.l.b16 %v362
    %v1335 = vunpack.c.h.b16 %v362
    %v1336 = vunpack.c.l.b16 %v363
    %v1337 = vunpack.c.l.b16 %v364
    %v1338 = vunpack.c.h.b16 %v364
    %v1339 = vunpack.c.l.b16 %v365
    %v1340 = vunpack.c.h.b16 %v365
    %v1341 = vunpack.c.l.b16 %v366
    %v1342 = vunpack.c.h.b16 %v366
    %v1343 = vunpack.c.l.b16 %v367
    %v1344 = vunpack.c.l.b16 %v368
    %v1345 = vunpack.c.h.b16 %v368
    %v1346 = vunpack.c.l.b16 %v369
    %v1347 = vunpack.c.h.b16 %v369
    %v1348 = vunpack.c.l.b16 %v370
    %v1349 = vunpack.c.h.b16 %v370
    %v1350 = vunpack.c.l.b16 %v371
    %v1351 = vunpack.c.l.b16 %v372
    %v1352 = vunpack.c.h.b16 %v372
    %v1353 = vunpack.c.l.b16 %v373
    %v1354 = vunpack.c.h.b16 %v373
    %v1355 = vunpack.c.l.b16 %v374
    %v1356 = vunpack.c.h.b16 %v374
    %v1357 = vunpack.c.l.b16 %v375
    %v1358 = vunpack.c.l.b16 %v376
    %v1359 = vunpack.c.h.b16 %v376
    %v1360 = vunpack.c.l.b16 %v377
    %v1361 = vunpack.c.h.b16 %v377
    %v1362 = vunpack.c.l.b16 %v378
    %v1363 = vunpack.c.h.b16 %v378
    %v1364 = vunpack.c.l.b16 %v379
    %v1365 = vunpack.c.l.b16 %v380
    %v1366 = vunpack.c.h.b16 %v380
    %v1367 = vunpack.c.l.b16 %v381
    %v1368 = vunpack.c.h.b16 %v381
    %v1369 = vunpack.c.l.b16 %v382
    %v1370 = vunpack.c.h.b16 %v382
    %v1371 = vunpack.c.l.b16 %v383
    %v1372 = vunpack.c.l.b16 %v384
    %v1373 = vunpack.c.h.b16 %v384
    %v1374 = vunpack.c.l.b16 %v385
    %v1375 = vunpack.c.h.b16 %v385
    %v1376 = vunpack.c.l.b16 %v386
    %v1377 = vunpack.c.h.b16 %v386
    %v1378 = vunpack.c.l.b16 %v387
    %v1379 = vunpack.c.l.b16 %v388
    %v1380 = vunpack.c.h.b16 %v388
    %v1381 = vunpack.c.l.b16 %v389
    %v1382 = vunpack.c.h.b16 %v389
    %v1383 = vunpack.c.l.b16 %v390
    %v1384 = vunpack.c.h.b16 %v390
    %v1385 = vunpack.c.l.b16 %v391
    %v1386 = vunpack.c.l.b16 %v392
    %v1387 = vunpack.c.h.b16 %v392
    %v1388 = vunpack.c.l.b16 %v393
    %v1389 = vunpack.c.h.b16 %v393
    %v1390 = vunpack.c.l.b16 %v394
    %v1391 = vunpack.c.h.b16 %v394
    %v1392 = vunpack.c.l.b16 %v395
    %v1393 = vunpack.c.l.b16 %v396
    %v1394 = vunpack.c.h.b16 %v396
    %v1395 = vunpack.c.l.b16 %v397
    %v1396 = vunpack.c.h.b16 %v397
    %v1397 = vunpack.c.l.b16 %v398
    %v1398 = vunpack.c.h.b16 %v398
    %v1399 = vunpack.c.l.b16 %v399
    %v1400 = vunpack.c.l.b16 %v400
    %v1401 = vunpack.c.h.b16 %v400
    %v1402 = vunpack.c.l.b16 %v401
    %v1403 = vunpack.c.h.b16 %v401
    %v1404 = vunpack.c.l.b16 %v402
    %v1405 = vunpack.c.h.b16 %v402
    %v1406 = vunpack.c.l.b16 %v403
    %v1407 = vunpack.c.l.b16 %v404
    %v1408 = vunpack.c.h.b16 %v404
    %v1409 = vunpack.c.l.b16 %v405
    %v1410 = vunpack.c.h.b16 %v405
    %v1411 = vunpack.c.l.b16 %v406
    %v1412 = vunpack.c.h.b16 %v406
    %v1413 = vunpack.c.l.b16 %v407
    %v1414 = vunpack.c.l.b16 %v408
    %v1415 = vunpack.c.h.b16 %v408
    %v1416 = vunpack.c.l.b16 %v409
    %v1417 = vunpack.c.h.b16 %v409
    %v1418 = vunpack.c.l.b16 %v410
    %v1419 = vunpack.c.h.b16 %v410
    %v1420 = vunpack.c.l.b16 %v411
    %v1421 = vunpack.c.l.b16 %v412
    %v1422 = vunpack.c.h.b16 %v412
    %v1423 = vunpack.c.l.b16 %v413
    %v1424 = vunpack.c.h.b16 %v413
    %v1425 = vunpack.c.l.b16 %v414
    %v1426 = vunpack.c.h.b16 %v414
    %v1427 = vunpack.c.l.b16 %v415
    %v1428 = vunpack.c.l.b16 %v416
    %v1429 = vunpack.c.h.b16 %v416
    %v1430 = vunpack.c.l.b16 %v417
    %v1431 = vunpack.c.h.b16 %v417
    %v1432 = vunpack.c.l.b16 %v418
    %v1433 = vunpack.c.h.b16 %v418
    %v1434 = vunpack.c.l.b16 %v419
    %v1435 = vunpack.c.l.b16 %v420
    %v1436 = vunpack.c.h.b16 %v420
    %v1437 = vunpack.c.l.b16 %v421
    %v1438 = vunpack.c.h.b16 %v421
    %v1439 = vunpack.c.l.b16 %v422
    %v1440 = vunpack.c.h.b16 %v422
    %v1441 = vunpack.c.l.b16 %v423
    %v1442 = vunpack.c.l.b16 %v424
    %v1443 = vunpack.c.h.b16 %v424
    %v1444 = vunpack.c.l.b16 %v425
    %v1445 = vunpack.c.h.b16 %v425
    %v1446 = vunpack.c.l.b16 %v426
    %v1447 = vunpack.c.h.b16 %v426
    %v1448 = vunpack.c.l.b16 %v427
    %v1449 = vunpack.c.l.b16 %v428
    %v1450 = vunpack.c.h.b16 %v428
    %v1451 = vunpack.c.l.b16 %v429
    %v1452 = vunpack.c.h.b16 %v429
    %v1453 = vunpack.c.l.b16 %v430
    %v1454 = vunpack.c.h.b16 %v430
    %v1455 = vunpack.c.l.b16 %v431
    %v1456 = vunpack.c.l.b16 %v432
    %v1457 = vunpack.c.h.b16 %v432
    %v1458 = vunpack.c.l.b16 %v433
    %v1459 = vunpack.c.h.b16 %v433
    %v1460 = vunpack.c.l.b16 %v434
    %v1461 = vunpack.c.h.b16 %v434
    %v1462 = vunpack.c.l.b16 %v435
    %v1463 = vunpack.c.l.b16 %v436
    %v1464 = vunpack.c.h.b16 %v436
    %v1465 = vunpack.c.l.b16 %v437
    %v1466 = vunpack.c.h.b16 %v437
    %v1467 = vunpack.c.l.b16 %v438
    %v1468 = vunpack.c.h.b16 %v438
    %v1469 = vunpack.c.l.b16 %v439
    %v1470 = vunpack.c.l.b16 %v440
    %v1471 = vunpack.c.h.b16 %v440
    %v1472 = vunpack.c.l.b16 %v441
    %v1473 = vunpack.c.h.b16 %v441
    %v1474 = vunpack.c.l.b16 %v442
    %v1475 = vunpack.c.h.b16 %v442
    %v1476 = vunpack.c.l.b16 %v443
    %v1477 = vunpack.c.l.b16 %v444
    %v1478 = vunpack.c.h.b16 %v444
    %v1479 = vunpack.c.l.b16 %v445
    %v1480 = vunpack.c.h.b16 %v445
    %v1481 = vunpack.c.l.b16 %v446
    %v1482 = vunpack.c.h.b16 %v446
    %v1483 = vunpack.c.l.b16 %v447
    %v1484 = vunpack.c.l.b16 %v448
    %v1485 = vunpack.c.h.b16 %v448
    %v1486 = vunpack.c.l.b16 %v449
    %v1487 = vunpack.c.h.b16 %v449
    %v1488 = vunpack.c.l.b16 %v450
    %v1489 = vunpack.c.h.b16 %v450
    %v1490 = vunpack.c.l.b16 %v451
    %v1491 = vunpack.c.l.b16 %v452
    %v1492 = vunpack.c.h.b16 %v452
    %v1493 = vunpack.c.l.b16 %v453
    %v1494 = vunpack.c.h.b16 %v453
    %v1495 = vunpack.c.l.b16 %v454
    %v1496 = vunpack.c.h.b16 %v454
    %v1497 = vunpack.c.l.b16 %v455
    %v1498 = vunpack.c.l.b16 %v456
    %v1499 = vunpack.c.h.b16 %v456
    %v1500 = vunpack.c.l.b16 %v457
    %v1501 = vunpack.c.h.b16 %v457
    %v1502 = vunpack.c.l.b16 %v458
    %v1503 = vunpack.c.h.b16 %v458
    %v1504 = vunpack.c.l.b16 %v459
    %v1505 = vunpack.c.l.b16 %v460
    %v1506 = vunpack.c.h.b16 %v460
    %v1507 = vunpack.c.l.b16 %v461
    %v1508 = vunpack.c.h.b16 %v461
    %v1509 = vunpack.c.l.b16 %v462
    %v1510 = vunpack.c.h.b16 %v462
    %v1511 = vunpack.c.l.b16 %v463
    %v1512 = vunpack.c.l.b16 %v464
    %v1513 = vunpack.c.h.b16 %v464
    %v1514 = vunpack.c.l.b16 %v465
    %v1515 = vunpack.c.h.b16 %v465
    %v1516 = vunpack.c.l.b16 %v466
    %v1517 = vunpack.c.h.b16 %v466
    %v1518 = vunpack.c.l.b16 %v467
    %v1519 = vunpack.c.l.b16 %v468
    %v1520 = vunpack.c.h.b16 %v468
    %v1521 = vunpack.c.l.b16 %v469
    %v1522 = vunpack.c.h.b16 %v469
    %v1523 = vunpack.c.l.b16 %v470
    %v1524 = vunpack.c.h.b16 %v470
    %v1525 = vunpack.c.l.b16 %v471
    %v1526 = vunpack.c.l.b16 %v472
    %v1527 = vunpack.c.h.b16 %v472
    %v1528 = vunpack.c.l.b16 %v473
    %v1529 = vunpack.c.h.b16 %v473
    %v1530 = vunpack.c.l.b16 %v474
    %v1531 = vunpack.c.h.b16 %v474
    %v1532 = vunpack.c.l.b16 %v475
    %v1533 = vunpack.c.l.b16 %v476
    %v1534 = vunpack.c.h.b16 %v476
    %v1535 = vunpack.c.l.b16 %v477
    %v1536 = vunpack.c.h.b16 %v477
    %v1537 = vunpack.c.l.b16 %v478
    %v1538 = vunpack.c.h.b16 %v478
    %v1539 = vunpack.c.l.b16 %v479
    %v1540 = vunpack.c.l.b16 %v480
    %v1541 = vunpack.c.h.b16 %v480
    %v1542 = vunpack.c.l.b16 %v481
    %v1543 = vunpack.c.h.b16 %v481
    %v1544 = vunpack.c.l.b16 %v482
    %v1545 = vunpack.c.h.b16 %v482
    %v1546 = vunpack.c.l.b16 %v483
    %v1547 = vunpack.c.l.b16 %v484
    %v1548 = vunpack.c.h.b16 %v484
    %v1549 = vunpack.c.l.b16 %v485
    %v1550 = vunpack.c.h.b16 %v485
    %v1551 = vunpack.c.l.b16 %v486
    %v1552 = vunpack.c.h.b16 %v486
    %v1553 = vunpack.c.l.b16 %v487
    %v1554 = vunpack.c.l.b16 %v488
    %v1555 = vunpack.c.h.b16 %v488
    %v1556 = vunpack.c.l.b16 %v489
    %v1557 = vunpack.c.h.b16 %v489
    %v1558 = vunpack.c.l.b16 %v490
    %v1559 = vunpack.c.h.b16 %v490
    %v1560 = vunpack.c.l.b16 %v491
    %v1561 = vunpack.c.l.b16 %v492
    %v1562 = vunpack.c.h.b16 %v492
    %v1563 = vunpack.c.l.b16 %v493
    %v1564 = vunpack.c.h.b16 %v493
    %v1565 = vunpack.c.l.b16 %v494
    %v1566 = vunpack.c.h.b16 %v494
    %v1567 = vunpack.c.l.b16 %v495
    %v1568 = vunpack.c.l.b16 %v496
    %v1569 = vunpack.c.h.b16 %v496
    %v1570 = vunpack.c.l.b16 %v497
    %v1571 = vunpack.c.h.b16 %v497
    %v1572 = vunpack.c.l.b16 %v498
    %v1573 = vunpack.c.h.b16 %v498
    %v1574 = vunpack.c.l.b16 %v499
    %v1575 = vunpack.c.l.b16 %v500
    %v1576 = vunpack.c.h.b16 %v500
    %v1577 = vunpack.c.l.b16 %v501
    %v1578 = vunpack.c.h.b16 %v501
    %v1579 = vunpack.c.l.b16 %v502
    %v1580 = vunpack.c.h.b16 %v502
    %v1581 = vunpack.c.l.b16 %v503
    %v1582 = vunpack.c.l.b16 %v504
    %v1583 = vunpack.c.h.b16 %v504
    %v1584 = vunpack.c.l.b16 %v505
    %v1585 = vunpack.c.h.b16 %v505
    %v1586 = vunpack.c.l.b16 %v506
    %v1587 = vunpack.c.h.b16 %v506
    %v1588 = vunpack.c.l.b16 %v507
    %v1589 = vunpack.c.l.b16 %v508
    %v1590 = vunpack.c.h.b16 %v508
    %v1591 = vunpack.c.l.b16 %v509
    %v1592 = vunpack.c.h.b16 %v509
    %v1593 = vunpack.c.l.b16 %v510
    %v1594 = vunpack.c.h.b16 %v510
    %v1595 = vunpack.c.l.b16 %v511
    %v1596 = vunpack.c.l.b16 %v512
    %v1597 = vunpack.c.h.b16 %v512
    %v1598 = vunpack.c.l.b16 %v513
    %v1599 = vunpack.c.h.b16 %v513
    %v1600 = vunpack.c.l.b16 %v514
    %v1601 = vunpack.c.h.b16 %v514
    %v1602 = vunpack.c.l.b16 %v515
    %v1603 = vunpack.c.l.b16 %v516
    %v1604 = vunpack.c.h.b16 %v516
    %v1605 = vunpack.c.l.b16 %v517
    %v1606 = vunpack.c.h.b16 %v517
    %v1607 = vunpack.c.l.b16 %v518
    %v1608 = vunpack.c.h.b16 %v518
    %v1609 = vunpack.c.l.b16 %v519
    %v1610 = vunpack.c.l.b16 %v520
    %v1611 = vunpack.c.h.b16 %v520
    %v1612 = vunpack.c.l.b16 %v521
    %v1613 = vunpack.c.h.b16 %v521
    %v1614 = vunpack.c.l.b16 %v522
    %v1615 = vunpack.c.h.b16 %v522
    %v1616 = vunpack.c.l.b16 %v523
    %v1617 = vpack.c.b16 %v938, %v931
    %v1618 = vpack.c.b16 %v939, %v932
    %v1619 = vpack.c.b16 %v940, %v933
    %v1620 = vpack.c.b16 %v941, %v934
    %v1621 = vpack.c.b16 %v942, %v935
    %v1622 = vpack.c.b16 %v943, %v936
    %v1623 = vpack.c.b16 %v944, %v937
    %v1624 = vpack.c.b16 %v952, %v945
    %v1625 = vpack.c.b16 %v953, %v946
    %v1626 = vpack.c.b16 %v954, %v947
    %v1627 = vpack.c.b16 %v955, %v948
    %v1628 = vpack.c.b16 %v956, %v949
    %v1629 = vpack.c.b16 %v957, %v950
    %v1630 = vpack.c.b16 %v958, %v951
    %v1631 = vpack.c.b16 %v966, %v959
    %v1632 = vpack.c.b16 %v967, %v960
    %v1633 = vpack.c.b16 %v968, %v961
    %v1634 = vpack.c.b16 %v969, %v962
    %v1635 = vpack.c.b16 %v970, %v963
    %v1636 = vpack.c.b16 %v971, %v964
    %v1637 = vpack.c.b16 %v972, %v965
    %v1638 = vpack.c.b16 %v980, %v973
    %v1639 = vpack.c.b16 %v981, %v974
    %v1640 = vpack.c.b16 %v982, %v975
    %v1641 = vpack.c.b16 %v983, %v976
    %v1642 = vpack.c.b16 %v984, %v977
    %v1643 = vpack.c.b16 %v985, %v978
    %v1644 = vpack.c.b16 %v986, %v979
    %v1645 = vpack.c.b16 %v994, %v987
    %v1646 = vpack.c.b16 %v995, %v988
    %v1647 = vpack.c.b16 %v996, %v989
    %v1648 = vpack.c.b16 %v997, %v990
    %v1649 = vpack.c.b16 %v998, %v991
    %v1650 = vpack.c.b16 %v999, %v992
    %v1651 = vpack.c.b16 %v1000, %v993
    %v1652 = vpack.c.b16 %v1008, %v1001
    %v1653 = vpack.c.b16 %v1009, %v1002
    %v1654 = vpack.c.b16 %v1010, %v1003
    %v1655 = vpack.c.b16 %v1011, %v1004
    %v1656 = vpack.c.b16 %v1012, %v1005
    %v1657 = vpack.c.b16 %v1013, %v1006
    %v1658 = vpack.c.b16 %v1014, %v1007
    %v1659 = vpack.c.b16 %v1022, %v1015
    %v1660 = vpack.c.b16 %v1023, %v1016
    %v1661 = vpack.c.b16 %v1024, %v1017
    %v1662 = vpack.c.b16 %v1025, %v1018
    %v1663 = vpack.c.b16 %v1026, %v1019
    %v1664 = vpack.c.b16 %v1027, %v1020
    %v1665 = vpack.c.b16 %v1028, %v1021
    %v1666 = vpack.c.b16 %v1036, %v1029
    %v1667 = vpack.c.b16 %v1037, %v1030
    %v1668 = vpack.c.b16 %v1038, %v1031
    %v1669 = vpack.c.b16 %v1039, %v1032
    %v1670 = vpack.c.b16 %v1040, %v1033
    %v1671 = vpack.c.b16 %v1041, %v1034
    %v1672 = vpack.c.b16 %v1042, %v1035
    %v1673 = vpack.c.b16 %v1050, %v1043
    %v1674 = vpack.c.b16 %v1051, %v1044
    %v1675 = vpack.c.b16 %v1052, %v1045
    %v1676 = vpack.c.b16 %v1053, %v1046
    %v1677 = vpack.c.b16 %v1054, %v1047
    %v1678 = vpack.c.b16 %v1055, %v1048
    %v1679 = vpack.c.b16 %v1056, %v1049
    %v1680 = vpack.c.b16 %v1064, %v1057
    %v1681 = vpack.c.b16 %v1065, %v1058
    %v1682 = vpack.c.b16 %v1066, %v1059
    %v1683 = vpack.c.b16 %v1067, %v1060
    %v1684 = vpack.c.b16 %v1068, %v1061
    %v1685 = vpack.c.b16 %v1069, %v1062
    %v1686 = vpack.c.b16 %v1070, %v1063
    %v1687 = vpack.c.b16 %v1078, %v1071
    %v1688 = vpack.c.b16 %v1079, %v1072
    %v1689 = vpack.c.b16 %v1080, %v1073
    %v1690 = vpack.c.b16 %v1081, %v1074
    %v1691 = vpack.c.b16 %v1082, %v1075
    %v1692 = vpack.c.b16 %v1083, %v1076
    %v1693 = vpack.c.b16 %v1084, %v1077
    %v1694 = vpack.c.b16 %v1092, %v1085
    %v1695 = vpack.c.b16 %v1093, %v1086
    %v1696 = vpack.c.b16 %v1094, %v1087
    %v1697 = vpack.c.b16 %v1095, %v1088
    %v1698 = vpack.c.b16 %v1096, %v1089
    %v1699 = vpack.c.b16 %v1097, %v1090
    %v1700 = vpack.c.b16 %v1098, %v1091
    %v1701 = vpack.c.b16 %v1106, %v1099
    %v1702 = vpack.c.b16 %v1107, %v1100
    %v1703 = vpack.c.b16 %v1108, %v1101
    %v1704 = vpack.c.b16 %v1109, %v1102
    %v1705 = vpack.c.b16 %v1110, %v1103
    %v1706 = vpack.c.b16 %v1111, %v1104
    %v1707 = vpack.c.b16 %v1112, %v1105
    %v1708 = vpack.c.b16 %v1120, %v1113
    %v1709 = vpack.c.b16 %v1121, %v1114
    %v1710 = vpack.c.b16 %v1122, %v1115
    %v1711 = vpack.c.b16 %v1123, %v1116
    %v1712 = vpack.c.b16 %v1124, %v1117
    %v1713 = vpack.c.b16 %v1125, %v1118
    %v1714 = vpack.c.b16 %v1126, %v1119
    %v1715 = vpack.c.b16 %v1134, %v1127
    %v1716 = vpack.c.b16 %v1135, %v1128
    %v1717 = vpack.c.b16 %v1136, %v1129
    %v1718 = vpack.c.b16 %v1137, %v1130
    %v1719 = vpack.c.b16 %v1138, %v1131
    %v1720 = vpack.c.b16 %v1139, %v1132
    %v1721 = vpack.c.b16 %v1140, %v1133
    %v1722 = vpack.c.b16 %v1148, %v1141
    %v1723 = vpack.c.b16 %v1149, %v1142
    %v1724 = vpack.c.b16 %v1150, %v1143
    %v1725 = vpack.c.b16 %v1151, %v1144
    %v1726 = vpack.c.b16 %v1152, %v1145
    %v1727 = vpack.c.b16 %v1153, %v1146
    %v1728 = vpack.c.b16 %v1154, %v1147
    %v1729 = vpack.c.b16 %v1162, %v1155
    %v1730 = vpack.c.b16 %v1163, %v1156
    %v1731 = vpack.c.b16 %v1164, %v1157
    %v1732 = vpack.c.b16 %v1165, %v1158
    %v1733 = vpack.c.b16 %v1166, %v1159
    %v1734 = vpack.c.b16 %v1167, %v1160
    %v1735 = vpack.c.b16 %v1168, %v1161
    %v1736 = vpack.c.b16 %v1176, %v1169
    %v1737 = vpack.c.b16 %v1177, %v1170
    %v1738 = vpack.c.b16 %v1178, %v1171
    %v1739 = vpack.c.b16 %v1179, %v1172
    %v1740 = vpack.c.b16 %v1180, %v1173
    %v1741 = vpack.c.b16 %v1181, %v1174
    %v1742 = vpack.c.b16 %v1182, %v1175
    %v1743 = vpack.c.b16 %v1190, %v1183
    %v1744 = vpack.c.b16 %v1191, %v1184
    %v1745 = vpack.c.b16 %v1192, %v1185
    %v1746 = vpack.c.b16 %v1193, %v1186
    %v1747 = vpack.c.b16 %v1194, %v1187
    %v1748 = vpack.c.b16 %v1195, %v1188
    %v1749 = vpack.c.b16 %v1196, %v1189
    %v1750 = vpack.c.b16 %v1204, %v1197
    %v1751 = vpack.c.b16 %v1205, %v1198
    %v1752 = vpack.c.b16 %v1206, %v1199
    %v1753 = vpack.c.b16 %v1207, %v1200
    %v1754 = vpack.c.b16 %v1208, %v1201
    %v1755 = vpack.c.b16 %v1209, %v1202
    %v1756 = vpack.c.b16 %v1210, %v1203
    %v1757 = vpack.c.b16 %v1218, %v1211
    %v1758 = vpack.c.b16 %v1219, %v1212
    %v1759 = vpack.c.b16 %v1220, %v1213
    %v1760 = vpack.c.b16 %v1221, %v1214
    %v1761 = vpack.c.b16 %v1222, %v1215
    %v1762 = vpack.c.b16 %v1223, %v1216
    %v1763 = vpack.c.b16 %v1224, %v1217
    %v1764 = vpack.c.b16 %v1232, %v1225
    %v1765 = vpack.c.b16 %v1233, %v1226
    %v1766 = vpack.c.b16 %v1234, %v1227
    %v1767 = vpack.c.b16 %v1235, %v1228
    %v1768 = vpack.c.b16 %v1236, %v1229
    %v1769 = vpack.c.b16 %v1237, %v1230
    %v1770 = vpack.c.b16 %v1238, %v1231
    %v1771 = vpack.c.b16 %v1246, %v1239
    %v1772 = vpack.c.b16 %v1247, %v1240
    %v1773 = vpack.c.b16 %v1248, %v1241
    %v1774 = vpack.c.b16 %v1249, %v1242
    %v1775 = vpack.c.b16 %v1250, %v1243
    %v1776 = vpack.c.b16 %v1251, %v1244
    %v1777 = vpack.c.b16 %v1252, %v1245
    %v1778 = vpack.c.b16 %v1260, %v1253
    %v1779 = vpack.c.b16 %v1261, %v1254
    %v1780 = vpack.c.b16 %v1262, %v1255
    %v1781 = vpack.c.b16 %v1263, %v1256
    %v1782 = vpack.c.b16 %v1264, %v1257
    %v1783 = vpack.c.b16 %v1265, %v1258
    %v1784 = vpack.c.b16 %v1266, %v1259
    %v1785 = vpack.c.b16 %v1274, %v1267
    %v1786 = vpack.c.b16 %v1275, %v1268
    %v1787 = vpack.c.b16 %v1276, %v1269
    %v1788 = vpack.c.b16 %v1277, %v1270
    %v1789 = vpack.c.b16 %v1278, %v1271
    %v1790 = vpack.c.b16 %v1279, %v1272
    %v1791 = vpack.c.b16 %v1280, %v1273
    %v1792 = vpack.c.b16 %v1288, %v1281
    %v1793 = vpack.c.b16 %v1289, %v1282
    %v1794 = vpack.c.b16 %v1290, %v1283
    %v1795 = vpack.c.b16 %v1291, %v1284
    %v1796 = vpack.c.b16 %v1292, %v1285
    %v1797 = vpack.c.b16 %v1293, %v1286
    %v1798 = vpack.c.b16 %v1294, %v1287
    %v1799 = vpack.c.b16 %v1302, %v1295
    %v1800 = vpack.c.b16 %v1303, %v1296
    %v1801 = vpack.c.b16 %v1304, %v1297
    %v1802 = vpack.c.b16 %v1305, %v1298
    %v1803 = vpack.c.b16 %v1306, %v1299
    %v1804 = vpack.c.b16 %v1307, %v1300
    %v1805 = vpack.c.b16 %v1308, %v1301
    %v1806 = vpack.c.b16 %v1316, %v1309
    %v1807 = vpack.c.b16 %v1317, %v1310
    %v1808 = vpack.c.b16 %v1318, %v1311
    %v1809 = vpack.c.b16 %v1319, %v1312
    %v1810 = vpack.c.b16 %v1320, %v1313
    %v1811 = vpack.c.b16 %v1321, %v1314
    %v1812 = vpack.c.b16 %v1322, %v1315
    %v1813 = vpack.c.b16 %v1330, %v1323
    %v1814 = vpack.c.b16 %v1331, %v1324
    %v1815 = vpack.c.b16 %v1332, %v1325
    %v1816 = vpack.c.b16 %v1333, %v1326
    %v1817 = vpack.c.b16 %v1334, %v1327
    %v1818 = vpack.c.b16 %v1335, %v1328
    %v1819 = vpack.c.b16 %v1336, %v1329
    %v1820 = vpack.c.b16 %v1344, %v1337
    %v1821 = vpack.c.b16 %v1345, %v1338
    %v1822 = vpack.c.b16 %v1346, %v1339
    %v1823 = vpack.c.b16 %v1347, %v1340
    %v1824 = vpack.c.b16 %v1348, %v1341
    %v1825 = vpack.c.b16 %v1349, %v1342
    %v1826 = vpack.c.b16 %v1350, %v1343
    %v1827 = vpack.c.b16 %v1358, %v1351
    %v1828 = vpack.c.b16 %v1359, %v1352
    %v1829 = vpack.c.b16 %v1360, %v1353
    %v1830 = vpack.c.b16 %v1361, %v1354
    %v1831 = vpack.c.b16 %v1362, %v1355
    %v1832 = vpack.c.b16 %v1363, %v1356
    %v1833 = vpack.c.b16 %v1364, %v1357
    %v1834 = vpack.c.b16 %v1372, %v1365
    %v1835 = vpack.c.b16 %v1373, %v1366
    %v1836 = vpack.c.b16 %v1374, %v1367
    %v1837 = vpack.c.b16 %v1375, %v1368
    %v1838 = vpack.c.b16 %v1376, %v1369
    %v1839 = vpack.c.b16 %v1377, %v1370
    %v1840 = vpack.c.b16 %v1378, %v1371
    %v1841 = vpack.c.b16 %v1386, %v1379
    %v1842 = vpack.c.b16 %v1387, %v1380
    %v1843 = vpack.c.b16 %v1388, %v1381
    %v1844 = vpack.c.b16 %v1389, %v1382
    %v1845 = vpack.c.b16 %v1390, %v1383
    %v1846 = vpack.c.b16 %v1391, %v1384
    %v1847 = vpack.c.b16 %v1392, %v1385
    %v1848 = vpack.c.b16 %v1400, %v1393
    %v1849 = vpack.c.b16 %v1401, %v1394
    %v1850 = vpack.c.b16 %v1402, %v1395
    %v1851 = vpack.c.b16 %v1403, %v1396
    %v1852 = vpack.c.b16 %v1404, %v1397
    %v1853 = vpack.c.b16 %v1405, %v1398
    %v1854 = vpack.c.b16 %v1406, %v1399
    %v1855 = vpack.c.b16 %v1414, %v1407
    %v1856 = vpack.c.b16 %v1415, %v1408
    %v1857 = vpack.c.b16 %v1416, %v1409
    %v1858 = vpack.c.b16 %v1417, %v1410
    %v1859 = vpack.c.b16 %v1418, %v1411
    %v1860 = vpack.c.b16 %v1419, %v1412
    %v1861 = vpack.c.b16 %v1420, %v1413
    %v1862 = vpack.c.b16 %v1428, %v1421
    %v1863 = vpack.c.b16 %v1429, %v1422
    %v1864 = vpack.c.b16 %v1430, %v1423
    %v1865 = vpack.c.b16 %v1431, %v1424
    %v1866 = vpack.c.b16 %v1432, %v1425
    %v1867 = vpack.c.b16 %v1433, %v1426
    %v1868 = vpack.c.b16 %v1434, %v1427
    %v1869 = vpack.c.b16 %v1442, %v1435
    %v1870 = vpack.c.b16 %v1443, %v1436
    %v1871 = vpack.c.b16 %v1444, %v1437
    %v1872 = vpack.c.b16 %v1445, %v1438
    %v1873 = vpack.c.b16 %v1446, %v1439
    %v1874 = vpack.c.b16 %v1447, %v1440
    %v1875 = vpack.c.b16 %v1448, %v1441
    %v1876 = vpack.c.b16 %v1456, %v1449
    %v1877 = vpack.c.b16 %v1457, %v1450
    %v1878 = vpack.c.b16 %v1458, %v1451
    %v1879 = vpack.c.b16 %v1459, %v1452
    %v1880 = vpack.c.b16 %v1460, %v1453
    %v1881 = vpack.c.b16 %v1461, %v1454
    %v1882 = vpack.c.b16 %v1462, %v1455
    %v1883 = vpack.c.b16 %v1470, %v1463
    %v1884 = vpack.c.b16 %v1471, %v1464
    %v1885 = vpack.c.b16 %v1472, %v1465
    %v1886 = vpack.c.b16 %v1473, %v1466
    %v1887 = vpack.c.b16 %v1474, %v1467
    %v1888 = vpack.c.b16 %v1475, %v1468
    %v1889 = vpack.c.b16 %v1476, %v1469
    %v1890 = vpack.c.b16 %v1484, %v1477
    %v1891 = vpack.c.b16 %v1485, %v1478
    %v1892 = vpack.c.b16 %v1486, %v1479
    %v1893 = vpack.c.b16 %v1487, %v1480
    %v1894 = vpack.c.b16 %v1488, %v1481
    %v1895 = vpack.c.b16 %v1489, %v1482
    %v1896 = vpack.c.b16 %v1490, %v1483
    %v1897 = vpack.c.b16 %v1498, %v1491
    %v1898 = vpack.c.b16 %v1499, %v1492
    %v1899 = vpack.c.b16 %v1500, %v1493
    %v1900 = vpack.c.b16 %v1501, %v1494
    %v1901 = vpack.c.b16 %v1502, %v1495
    %v1902 = vpack.c.b16 %v1503, %v1496
    %v1903 = vpack.c.b16 %v1504, %v1497
    %v1904 = vpack.c.b16 %v1512, %v1505
    %v1905 = vpack.c.b16 %v1513, %v1506
    %v1906 = vpack.c.b16 %v1514, %v1507
    %v1907 = vpack.c.b16 %v1515, %v1508
    %v1908 = vpack.c.b16 %v1516, %v1509
    %v1909 = vpack.c.b16 %v1517, %v1510
    %v1910 = vpack.c.b16 %v1518, %v1511
    %v1911 = vpack.c.b16 %v1526, %v1519
    %v1912 = vpack.c.b16 %v1527, %v1520
    %v1913 = vpack.c.b16 %v1528, %v1521
    %v1914 = vpack.c.b16 %v1529, %v1522
    %v1915 = vpack.c.b16 %v1530, %v1523
    %v1916 = vpack.c.b16 %v1531, %v1524
    %v1917 = vpack.c.b16 %v1532, %v1525
    %v1918 = vpack.c.b16 %v1540, %v1533
    %v1919 = vpack.c.b16 %v1541, %v1534
    %v1920 = vpack.c.b16 %v1542, %v1535
    %v1921 = vpack.c.b16 %v1543, %v1536
    %v1922 = vpack.c.b16 %v1544, %v1537
    %v1923 = vpack.c.b16 %v1545, %v1538
    %v1924 = vpack.c.b16 %v1546, %v1539
    %v1925 = vpack.c.b16 %v1554, %v1547
    %v1926 = vpack.c.b16 %v1555, %v1548
    %v1927 = vpack.c.b16 %v1556, %v1549
    %v1928 = vpack.c.b16 %v1557, %v1550
    %v1929 = vpack.c.b16 %v1558, %v1551
    %v1930 = vpack.c.b16 %v1559, %v1552
    %v1931 = vpack.c.b16 %v1560, %v1553
    %v1932 = vpack.c.b16 %v1568, %v1561
    %v1933 = vpack.c.b16 %v1569, %v1562
    %v1934 = vpack.c.b16 %v1570, %v1563
    %v1935 = vpack.c.b16 %v1571, %v1564
    %v1936 = vpack.c.b16 %v1572, %v1565
    %v1937 = vpack.c.b16 %v1573, %v1566
    %v1938 = vpack.c.b16 %v1574, %v1567
    %v1939 = vpack.c.b16 %v1582, %v1575
    %v1940 = vpack.c.b16 %v1583, %v1576
    %v1941 = vpack.c.b16 %v1584, %v1577
    %v1942 = vpack.c.b16 %v1585, %v1578
    %v1943 = vpack.c.b16 %v1586, %v1579
    %v1944 = vpack.c.b16 %v1587, %v1580
    %v1945 = vpack.c.b16 %v1588, %v1581
    %v1946 = vpack.c.b16 %v1596, %v1589
    %v1947 = vpack.c.b16 %v1597, %v1590
    %v1948 = vpack.c.b16 %v1598, %v1591
    %v1949 = vpack.c.b16 %v1599, %v1592
    %v1950 = vpack.c.b16 %v1600, %v1593
    %v1951 = vpack.c.b16 %v1601, %v1594
    %v1952 = vpack.c.b16 %v1602, %v1595
    %v1953 = vpack.c.b16 %v1610, %v1603
    %v1954 = vpack.c.b16 %v1611, %v1604
    %v1955 = vpack.c.b16 %v1612, %v1605
    %v1956 = vpack.c.b16 %v1613, %v1606
    %v1957 = vpack.c.b16 %v1614, %v1607
    %v1958 = vpack.c.b16 %v1615, %v1608
    %v1959 = vpack.c.b16 %v1616, %v1609
    %vm2303 = vcmask 130048
    %v2305 = vsel %vm2303, %v127, 0
    %2307 = vmatpush.bf16.msra.mxu0 %v1666
    %2308 = vmatpush.bf16.msra.mxu0 %v1659
    %2309 = vmatpush.bf16.msra.mxu0 %v1652
    %2310 = vmatpush.bf16.msra.mxu0 %v1645
    %2311 = vmatpush.bf16.msra.mxu0 %v1638
    %2312 = vmatpush.bf16.msra.mxu0 %v1631
    %2313 = vmatpush.bf16.msra.mxu0 %v1624
    %2314 = vmatpush.bf16.msra.mxu0 %v1617
    %2315 = vmatmul.bf16.gmra.mxu0 %v121
    %v2316 = vpop.f32.mrf.mxu0
    %v2317 = vadd.f32 %v525, %v2316
    %v2318 = vpop.f32.mrf.mxu0
    %2319 = vdwg.mxu0
    %2320 = vmatpush.bf16.msra.mxu0 %v1722
    %2321 = vmatpush.bf16.msra.mxu0 %v1715
    %2322 = vmatpush.bf16.msra.mxu0 %v1708
    %2323 = vmatpush.bf16.msra.mxu0 %v1701
    %2324 = vmatpush.bf16.msra.mxu0 %v1694
    %2325 = vmatpush.bf16.msra.mxu0 %v1687
    %2326 = vmatpush.bf16.msra.mxu0 %v1680
    %2327 = vmatpush.bf16.msra.mxu0 %v1673
    %2328 = vmatmul.bf16.gmra.mxu0 %v122
    %v2329 = vpop.f32.mrf.mxu0
    %v2330 = vadd.f32 %v2317, %v2329
    %v2331 = vpop.f32.mrf.mxu0
    %2332 = vdwg.mxu0
    %2333 = vmatpush.bf16.msra.mxu0 %v1778
    %2334 = vmatpush.bf16.msra.mxu0 %v1771
    %2335 = vmatpush.bf16.msra.mxu0 %v1764
    %2336 = vmatpush.bf16.msra.mxu0 %v1757
    %2337 = vmatpush.bf16.msra.mxu0 %v1750
    %2338 = vmatpush.bf16.msra.mxu0 %v1743
    %2339 = vmatpush.bf16.msra.mxu0 %v1736
    %2340 = vmatpush.bf16.msra.mxu0 %v1729
    %2341 = vmatmul.bf16.gmra.mxu0 %v123
    %v2342 = vpop.f32.mrf.mxu0
    %v2343 = vadd.f32 %v2330, %v2342
    %v2344 = vpop.f32.mrf.mxu0
    %2345 = vdwg.mxu0
    %2346 = vmatpush.bf16.msra.mxu0 %v1834
    %2347 = vmatpush.bf16.msra.mxu0 %v1827
    %2348 = vmatpush.bf16.msra.mxu0 %v1820
    %2349 = vmatpush.bf16.msra.mxu0 %v1813
    %2350 = vmatpush.bf16.msra.mxu0 %v1806
    %2351 = vmatpush.bf16.msra.mxu0 %v1799
    %2352 = vmatpush.bf16.msra.mxu0 %v1792
    %2353 = vmatpush.bf16.msra.mxu0 %v1785
    %2354 = vmatmul.bf16.gmra.mxu0 %v124
    %v2355 = vpop.f32.mrf.mxu0
    %v2356 = vadd.f32 %v2343, %v2355
    %v2357 = vpop.f32.mrf.mxu0
    %2358 = vdwg.mxu0
    %2359 = vmatpush.bf16.msra.mxu0 %v1890
    %2360 = vmatpush.bf16.msra.mxu0 %v1883
    %2361 = vmatpush.bf16.msra.mxu0 %v1876
    %2362 = vmatpush.bf16.msra.mxu0 %v1869
    %2363 = vmatpush.bf16.msra.mxu0 %v1862
    %2364 = vmatpush.bf16.msra.mxu0 %v1855
    %2365 = vmatpush.bf16.msra.mxu0 %v1848
    %2366 = vmatpush.bf16.msra.mxu0 %v1841
    %2367 = vmatmul.bf16.gmra.mxu0 %v125
    %v2368 = vpop.f32.mrf.mxu0
    %v2369 = vadd.f32 %v2356, %v2368
    %v2370 = vpop.f32.mrf.mxu0
    %2371 = vdwg.mxu0
    %2372 = vmatpush.bf16.msra.mxu0 %v1946
    %2373 = vmatpush.bf16.msra.mxu0 %v1939
    %2374 = vmatpush.bf16.msra.mxu0 %v1932
    %2375 = vmatpush.bf16.msra.mxu0 %v1925
    %2376 = vmatpush.bf16.msra.mxu0 %v1918
    %2377 = vmatpush.bf16.msra.mxu0 %v1911
    %2378 = vmatpush.bf16.msra.mxu0 %v1904
    %2379 = vmatpush.bf16.msra.mxu0 %v1897
    %2380 = vmatmul.bf16.gmra.mxu0 %v126
    %v2381 = vpop.f32.mrf.mxu0
    %v2382 = vadd.f32 %v2369, %v2381
    %v2383 = vpop.f32.mrf.mxu0
    %2384 = vdwg.mxu0
    %2385 = vmatpush.bf16.msra.mxu0 0
    %2386 = vmatpush.bf16.msra.mxu0 0
    %2387 = vmatpush.bf16.msra.mxu0 0
    %2388 = vmatpush.bf16.msra.mxu0 0
    %2389 = vmatpush.bf16.msra.mxu0 0
    %2390 = vmatpush.bf16.msra.mxu0 0
    %2391 = vmatpush.bf16.msra.mxu0 0
    %2392 = vmatpush.bf16.msra.mxu0 %v1953
    %2393 = vmatmul.bf16.gmra.mxu0 %v2305
    %v2394 = vpop.f32.mrf.mxu0
    %v2395 = vadd.f32 %v2382, %v2394
    %v2396 = vpop.f32.mrf.mxu0
    %2397 = vdwg.mxu0
    %2398 = vmatpush.bf16.msra.mxu0 %v1667
    %2399 = vmatpush.bf16.msra.mxu0 %v1660
    %2400 = vmatpush.bf16.msra.mxu0 %v1653
    %2401 = vmatpush.bf16.msra.mxu0 %v1646
    %2402 = vmatpush.bf16.msra.mxu0 %v1639
    %2403 = vmatpush.bf16.msra.mxu0 %v1632
    %2404 = vmatpush.bf16.msra.mxu0 %v1625
    %2405 = vmatpush.bf16.msra.mxu0 %v1618
    %2406 = vmatmul.bf16.gmra.mxu0 %v121
    %v2407 = vpop.f32.mrf.mxu0
    %v2408 = vadd.f32 %v526, %v2407
    %v2409 = vpop.f32.mrf.mxu0
    %2410 = vdwg.mxu0
    %2411 = vmatpush.bf16.msra.mxu0 %v1723
    %2412 = vmatpush.bf16.msra.mxu0 %v1716
    %2413 = vmatpush.bf16.msra.mxu0 %v1709
    %2414 = vmatpush.bf16.msra.mxu0 %v1702
    %2415 = vmatpush.bf16.msra.mxu0 %v1695
    %2416 = vmatpush.bf16.msra.mxu0 %v1688
    %2417 = vmatpush.bf16.msra.mxu0 %v1681
    %2418 = vmatpush.bf16.msra.mxu0 %v1674
    %2419 = vmatmul.bf16.gmra.mxu0 %v122
    %v2420 = vpop.f32.mrf.mxu0
    %v2421 = vadd.f32 %v2408, %v2420
    %v2422 = vpop.f32.mrf.mxu0
    %2423 = vdwg.mxu0
    %2424 = vmatpush.bf16.msra.mxu0 %v1779
    %2425 = vmatpush.bf16.msra.mxu0 %v1772
    %2426 = vmatpush.bf16.msra.mxu0 %v1765
    %2427 = vmatpush.bf16.msra.mxu0 %v1758
    %2428 = vmatpush.bf16.msra.mxu0 %v1751
    %2429 = vmatpush.bf16.msra.mxu0 %v1744
    %2430 = vmatpush.bf16.msra.mxu0 %v1737
    %2431 = vmatpush.bf16.msra.mxu0 %v1730
    %2432 = vmatmul.bf16.gmra.mxu0 %v123
    %v2433 = vpop.f32.mrf.mxu0
    %v2434 = vadd.f32 %v2421, %v2433
    %v2435 = vpop.f32.mrf.mxu0
    %2436 = vdwg.mxu0
    %2437 = vmatpush.bf16.msra.mxu0 %v1835
    %2438 = vmatpush.bf16.msra.mxu0 %v1828
    %2439 = vmatpush.bf16.msra.mxu0 %v1821
    %2440 = vmatpush.bf16.msra.mxu0 %v1814
    %2441 = vmatpush.bf16.msra.mxu0 %v1807
    %2442 = vmatpush.bf16.msra.mxu0 %v1800
    %2443 = vmatpush.bf16.msra.mxu0 %v1793
    %2444 = vmatpush.bf16.msra.mxu0 %v1786
    %2445 = vmatmul.bf16.gmra.mxu0 %v124
    %v2446 = vpop.f32.mrf.mxu0
    %v2447 = vadd.f32 %v2434, %v2446
    %v2448 = vpop.f32.mrf.mxu0
    %2449 = vdwg.mxu0
    %2450 = vmatpush.bf16.msra.mxu0 %v1891
    %2451 = vmatpush.bf16.msra.mxu0 %v1884
    %2452 = vmatpush.bf16.msra.mxu0 %v1877
    %2453 = vmatpush.bf16.msra.mxu0 %v1870
    %2454 = vmatpush.bf16.msra.mxu0 %v1863
    %2455 = vmatpush.bf16.msra.mxu0 %v1856
    %2456 = vmatpush.bf16.msra.mxu0 %v1849
    %2457 = vmatpush.bf16.msra.mxu0 %v1842
    %2458 = vmatmul.bf16.gmra.mxu0 %v125
    %v2459 = vpop.f32.mrf.mxu0
    %v2460 = vadd.f32 %v2447, %v2459
    %v2461 = vpop.f32.mrf.mxu0
    %2462 = vdwg.mxu0
    %2463 = vmatpush.bf16.msra.mxu0 %v1947
    %2464 = vmatpush.bf16.msra.mxu0 %v1940
    %2465 = vmatpush.bf16.msra.mxu0 %v1933
    %2466 = vmatpush.bf16.msra.mxu0 %v1926
    %2467 = vmatpush.bf16.msra.mxu0 %v1919
    %2468 = vmatpush.bf16.msra.mxu0 %v1912
    %2469 = vmatpush.bf16.msra.mxu0 %v1905
    %2470 = vmatpush.bf16.msra.mxu0 %v1898
    %2471 = vmatmul.bf16.gmra.mxu0 %v126
    %v2472 = vpop.f32.mrf.mxu0
    %v2473 = vadd.f32 %v2460, %v2472
    %v2474 = vpop.f32.mrf.mxu0
    %2475 = vdwg.mxu0
    %2476 = vmatpush.bf16.msra.mxu0 0
    %2477 = vmatpush.bf16.msra.mxu0 0
    %2478 = vmatpush.bf16.msra.mxu0 0
    %2479 = vmatpush.bf16.msra.mxu0 0
    %2480 = vmatpush.bf16.msra.mxu0 0
    %2481 = vmatpush.bf16.msra.mxu0 0
    %2482 = vmatpush.bf16.msra.mxu0 0
    %2483 = vmatpush.bf16.msra.mxu0 %v1954
    %2484 = vmatmul.bf16.gmra.mxu0 %v2305
    %v2485 = vpop.f32.mrf.mxu0
    %v2486 = vadd.f32 %v2473, %v2485
    %v2487 = vpop.f32.mrf.mxu0
    %2488 = vdwg.mxu0
    %2489 = vmatpush.bf16.msra.mxu0 %v1668
    %2490 = vmatpush.bf16.msra.mxu0 %v1661
    %2491 = vmatpush.bf16.msra.mxu0 %v1654
    %2492 = vmatpush.bf16.msra.mxu0 %v1647
    %2493 = vmatpush.bf16.msra.mxu0 %v1640
    %2494 = vmatpush.bf16.msra.mxu0 %v1633
    %2495 = vmatpush.bf16.msra.mxu0 %v1626
    %2496 = vmatpush.bf16.msra.mxu0 %v1619
    %2497 = vmatmul.bf16.gmra.mxu0 %v121
    %v2498 = vpop.f32.mrf.mxu0
    %v2499 = vadd.f32 %v527, %v2498
    %v2500 = vpop.f32.mrf.mxu0
    %2501 = vdwg.mxu0
    %2502 = vmatpush.bf16.msra.mxu0 %v1724
    %2503 = vmatpush.bf16.msra.mxu0 %v1717
    %2504 = vmatpush.bf16.msra.mxu0 %v1710
    %2505 = vmatpush.bf16.msra.mxu0 %v1703
    %2506 = vmatpush.bf16.msra.mxu0 %v1696
    %2507 = vmatpush.bf16.msra.mxu0 %v1689
    %2508 = vmatpush.bf16.msra.mxu0 %v1682
    %2509 = vmatpush.bf16.msra.mxu0 %v1675
    %2510 = vmatmul.bf16.gmra.mxu0 %v122
    %v2511 = vpop.f32.mrf.mxu0
    %v2512 = vadd.f32 %v2499, %v2511
    %v2513 = vpop.f32.mrf.mxu0
    %2514 = vdwg.mxu0
    %2515 = vmatpush.bf16.msra.mxu0 %v1780
    %2516 = vmatpush.bf16.msra.mxu0 %v1773
    %2517 = vmatpush.bf16.msra.mxu0 %v1766
    %2518 = vmatpush.bf16.msra.mxu0 %v1759
    %2519 = vmatpush.bf16.msra.mxu0 %v1752
    %2520 = vmatpush.bf16.msra.mxu0 %v1745
    %2521 = vmatpush.bf16.msra.mxu0 %v1738
    %2522 = vmatpush.bf16.msra.mxu0 %v1731
    %2523 = vmatmul.bf16.gmra.mxu0 %v123
    %v2524 = vpop.f32.mrf.mxu0
    %v2525 = vadd.f32 %v2512, %v2524
    %v2526 = vpop.f32.mrf.mxu0
    %2527 = vdwg.mxu0
    %2528 = vmatpush.bf16.msra.mxu0 %v1836
    %2529 = vmatpush.bf16.msra.mxu0 %v1829
    %2530 = vmatpush.bf16.msra.mxu0 %v1822
    %2531 = vmatpush.bf16.msra.mxu0 %v1815
    %2532 = vmatpush.bf16.msra.mxu0 %v1808
    %2533 = vmatpush.bf16.msra.mxu0 %v1801
    %2534 = vmatpush.bf16.msra.mxu0 %v1794
    %2535 = vmatpush.bf16.msra.mxu0 %v1787
    %2536 = vmatmul.bf16.gmra.mxu0 %v124
    %v2537 = vpop.f32.mrf.mxu0
    %v2538 = vadd.f32 %v2525, %v2537
    %v2539 = vpop.f32.mrf.mxu0
    %2540 = vdwg.mxu0
    %2541 = vmatpush.bf16.msra.mxu0 %v1892
    %2542 = vmatpush.bf16.msra.mxu0 %v1885
    %2543 = vmatpush.bf16.msra.mxu0 %v1878
    %2544 = vmatpush.bf16.msra.mxu0 %v1871
    %2545 = vmatpush.bf16.msra.mxu0 %v1864
    %2546 = vmatpush.bf16.msra.mxu0 %v1857
    %2547 = vmatpush.bf16.msra.mxu0 %v1850
    %2548 = vmatpush.bf16.msra.mxu0 %v1843
    %2549 = vmatmul.bf16.gmra.mxu0 %v125
    %v2550 = vpop.f32.mrf.mxu0
    %v2551 = vadd.f32 %v2538, %v2550
    %v2552 = vpop.f32.mrf.mxu0
    %2553 = vdwg.mxu0
    %2554 = vmatpush.bf16.msra.mxu0 %v1948
    %2555 = vmatpush.bf16.msra.mxu0 %v1941
    %2556 = vmatpush.bf16.msra.mxu0 %v1934
    %2557 = vmatpush.bf16.msra.mxu0 %v1927
    %2558 = vmatpush.bf16.msra.mxu0 %v1920
    %2559 = vmatpush.bf16.msra.mxu0 %v1913
    %2560 = vmatpush.bf16.msra.mxu0 %v1906
    %2561 = vmatpush.bf16.msra.mxu0 %v1899
    %2562 = vmatmul.bf16.gmra.mxu0 %v126
    %v2563 = vpop.f32.mrf.mxu0
    %v2564 = vadd.f32 %v2551, %v2563
    %v2565 = vpop.f32.mrf.mxu0
    %2566 = vdwg.mxu0
    %2567 = vmatpush.bf16.msra.mxu0 0
    %2568 = vmatpush.bf16.msra.mxu0 0
    %2569 = vmatpush.bf16.msra.mxu0 0
    %2570 = vmatpush.bf16.msra.mxu0 0
    %2571 = vmatpush.bf16.msra.mxu0 0
    %2572 = vmatpush.bf16.msra.mxu0 0
    %2573 = vmatpush.bf16.msra.mxu0 0
    %2574 = vmatpush.bf16.msra.mxu0 %v1955
    %2575 = vmatmul.bf16.gmra.mxu0 %v2305
    %v2576 = vpop.f32.mrf.mxu0
    %v2577 = vadd.f32 %v2564, %v2576
    %v2578 = vpop.f32.mrf.mxu0
    %2579 = vdwg.mxu0
    %2580 = vmatpush.bf16.msra.mxu0 %v1669
    %2581 = vmatpush.bf16.msra.mxu0 %v1662
    %2582 = vmatpush.bf16.msra.mxu0 %v1655
    %2583 = vmatpush.bf16.msra.mxu0 %v1648
    %2584 = vmatpush.bf16.msra.mxu0 %v1641
    %2585 = vmatpush.bf16.msra.mxu0 %v1634
    %2586 = vmatpush.bf16.msra.mxu0 %v1627
    %2587 = vmatpush.bf16.msra.mxu0 %v1620
    %2588 = vmatmul.bf16.gmra.mxu0 %v121
    %v2589 = vpop.f32.mrf.mxu0
    %v2590 = vadd.f32 %v528, %v2589
    %v2591 = vpop.f32.mrf.mxu0
    %2592 = vdwg.mxu0
    %2593 = vmatpush.bf16.msra.mxu0 %v1725
    %2594 = vmatpush.bf16.msra.mxu0 %v1718
    %2595 = vmatpush.bf16.msra.mxu0 %v1711
    %2596 = vmatpush.bf16.msra.mxu0 %v1704
    %2597 = vmatpush.bf16.msra.mxu0 %v1697
    %2598 = vmatpush.bf16.msra.mxu0 %v1690
    %2599 = vmatpush.bf16.msra.mxu0 %v1683
    %2600 = vmatpush.bf16.msra.mxu0 %v1676
    %2601 = vmatmul.bf16.gmra.mxu0 %v122
    %v2602 = vpop.f32.mrf.mxu0
    %v2603 = vadd.f32 %v2590, %v2602
    %v2604 = vpop.f32.mrf.mxu0
    %2605 = vdwg.mxu0
    %2606 = vmatpush.bf16.msra.mxu0 %v1781
    %2607 = vmatpush.bf16.msra.mxu0 %v1774
    %2608 = vmatpush.bf16.msra.mxu0 %v1767
    %2609 = vmatpush.bf16.msra.mxu0 %v1760
    %2610 = vmatpush.bf16.msra.mxu0 %v1753
    %2611 = vmatpush.bf16.msra.mxu0 %v1746
    %2612 = vmatpush.bf16.msra.mxu0 %v1739
    %2613 = vmatpush.bf16.msra.mxu0 %v1732
    %2614 = vmatmul.bf16.gmra.mxu0 %v123
    %v2615 = vpop.f32.mrf.mxu0
    %v2616 = vadd.f32 %v2603, %v2615
    %v2617 = vpop.f32.mrf.mxu0
    %2618 = vdwg.mxu0
    %2619 = vmatpush.bf16.msra.mxu0 %v1837
    %2620 = vmatpush.bf16.msra.mxu0 %v1830
    %2621 = vmatpush.bf16.msra.mxu0 %v1823
    %2622 = vmatpush.bf16.msra.mxu0 %v1816
    %2623 = vmatpush.bf16.msra.mxu0 %v1809
    %2624 = vmatpush.bf16.msra.mxu0 %v1802
    %2625 = vmatpush.bf16.msra.mxu0 %v1795
    %2626 = vmatpush.bf16.msra.mxu0 %v1788
    %2627 = vmatmul.bf16.gmra.mxu0 %v124
    %v2628 = vpop.f32.mrf.mxu0
    %v2629 = vadd.f32 %v2616, %v2628
    %v2630 = vpop.f32.mrf.mxu0
    %2631 = vdwg.mxu0
    %2632 = vmatpush.bf16.msra.mxu0 %v1893
    %2633 = vmatpush.bf16.msra.mxu0 %v1886
    %2634 = vmatpush.bf16.msra.mxu0 %v1879
    %2635 = vmatpush.bf16.msra.mxu0 %v1872
    %2636 = vmatpush.bf16.msra.mxu0 %v1865
    %2637 = vmatpush.bf16.msra.mxu0 %v1858
    %2638 = vmatpush.bf16.msra.mxu0 %v1851
    %2639 = vmatpush.bf16.msra.mxu0 %v1844
    %2640 = vmatmul.bf16.gmra.mxu0 %v125
    %v2641 = vpop.f32.mrf.mxu0
    %v2642 = vadd.f32 %v2629, %v2641
    %v2643 = vpop.f32.mrf.mxu0
    %2644 = vdwg.mxu0
    %2645 = vmatpush.bf16.msra.mxu0 %v1949
    %2646 = vmatpush.bf16.msra.mxu0 %v1942
    %2647 = vmatpush.bf16.msra.mxu0 %v1935
    %2648 = vmatpush.bf16.msra.mxu0 %v1928
    %2649 = vmatpush.bf16.msra.mxu0 %v1921
    %2650 = vmatpush.bf16.msra.mxu0 %v1914
    %2651 = vmatpush.bf16.msra.mxu0 %v1907
    %2652 = vmatpush.bf16.msra.mxu0 %v1900
    %2653 = vmatmul.bf16.gmra.mxu0 %v126
    %v2654 = vpop.f32.mrf.mxu0
    %v2655 = vadd.f32 %v2642, %v2654
    %v2656 = vpop.f32.mrf.mxu0
    %2657 = vdwg.mxu0
    %2658 = vmatpush.bf16.msra.mxu0 0
    %2659 = vmatpush.bf16.msra.mxu0 0
    %2660 = vmatpush.bf16.msra.mxu0 0
    %2661 = vmatpush.bf16.msra.mxu0 0
    %2662 = vmatpush.bf16.msra.mxu0 0
    %2663 = vmatpush.bf16.msra.mxu0 0
    %2664 = vmatpush.bf16.msra.mxu0 0
    %2665 = vmatpush.bf16.msra.mxu0 %v1956
    %2666 = vmatmul.bf16.gmra.mxu0 %v2305
    %v2667 = vpop.f32.mrf.mxu0
    %v2668 = vadd.f32 %v2655, %v2667
    %v2669 = vpop.f32.mrf.mxu0
    %2670 = vdwg.mxu0
    %2671 = vmatpush.bf16.msra.mxu0 %v1670
    %2672 = vmatpush.bf16.msra.mxu0 %v1663
    %2673 = vmatpush.bf16.msra.mxu0 %v1656
    %2674 = vmatpush.bf16.msra.mxu0 %v1649
    %2675 = vmatpush.bf16.msra.mxu0 %v1642
    %2676 = vmatpush.bf16.msra.mxu0 %v1635
    %2677 = vmatpush.bf16.msra.mxu0 %v1628
    %2678 = vmatpush.bf16.msra.mxu0 %v1621
    %2679 = vmatmul.bf16.gmra.mxu0 %v121
    %v2680 = vpop.f32.mrf.mxu0
    %v2681 = vadd.f32 %v529, %v2680
    %v2682 = vpop.f32.mrf.mxu0
    %2683 = vdwg.mxu0
    %2684 = vmatpush.bf16.msra.mxu0 %v1726
    %2685 = vmatpush.bf16.msra.mxu0 %v1719
    %2686 = vmatpush.bf16.msra.mxu0 %v1712
    %2687 = vmatpush.bf16.msra.mxu0 %v1705
    %2688 = vmatpush.bf16.msra.mxu0 %v1698
    %2689 = vmatpush.bf16.msra.mxu0 %v1691
    %2690 = vmatpush.bf16.msra.mxu0 %v1684
    %2691 = vmatpush.bf16.msra.mxu0 %v1677
    %2692 = vmatmul.bf16.gmra.mxu0 %v122
    %v2693 = vpop.f32.mrf.mxu0
    %v2694 = vadd.f32 %v2681, %v2693
    %v2695 = vpop.f32.mrf.mxu0
    %2696 = vdwg.mxu0
    %2697 = vmatpush.bf16.msra.mxu0 %v1782
    %2698 = vmatpush.bf16.msra.mxu0 %v1775
    %2699 = vmatpush.bf16.msra.mxu0 %v1768
    %2700 = vmatpush.bf16.msra.mxu0 %v1761
    %2701 = vmatpush.bf16.msra.mxu0 %v1754
    %2702 = vmatpush.bf16.msra.mxu0 %v1747
    %2703 = vmatpush.bf16.msra.mxu0 %v1740
    %2704 = vmatpush.bf16.msra.mxu0 %v1733
    %2705 = vmatmul.bf16.gmra.mxu0 %v123
    %v2706 = vpop.f32.mrf.mxu0
    %v2707 = vadd.f32 %v2694, %v2706
    %v2708 = vpop.f32.mrf.mxu0
    %2709 = vdwg.mxu0
    %2710 = vmatpush.bf16.msra.mxu0 %v1838
    %2711 = vmatpush.bf16.msra.mxu0 %v1831
    %2712 = vmatpush.bf16.msra.mxu0 %v1824
    %2713 = vmatpush.bf16.msra.mxu0 %v1817
    %2714 = vmatpush.bf16.msra.mxu0 %v1810
    %2715 = vmatpush.bf16.msra.mxu0 %v1803
    %2716 = vmatpush.bf16.msra.mxu0 %v1796
    %2717 = vmatpush.bf16.msra.mxu0 %v1789
    %2718 = vmatmul.bf16.gmra.mxu0 %v124
    %v2719 = vpop.f32.mrf.mxu0
    %v2720 = vadd.f32 %v2707, %v2719
    %v2721 = vpop.f32.mrf.mxu0
    %2722 = vdwg.mxu0
    %2723 = vmatpush.bf16.msra.mxu0 %v1894
    %2724 = vmatpush.bf16.msra.mxu0 %v1887
    %2725 = vmatpush.bf16.msra.mxu0 %v1880
    %2726 = vmatpush.bf16.msra.mxu0 %v1873
    %2727 = vmatpush.bf16.msra.mxu0 %v1866
    %2728 = vmatpush.bf16.msra.mxu0 %v1859
    %2729 = vmatpush.bf16.msra.mxu0 %v1852
    %2730 = vmatpush.bf16.msra.mxu0 %v1845
    %2731 = vmatmul.bf16.gmra.mxu0 %v125
    %v2732 = vpop.f32.mrf.mxu0
    %v2733 = vadd.f32 %v2720, %v2732
    %v2734 = vpop.f32.mrf.mxu0
    %2735 = vdwg.mxu0
    %2736 = vmatpush.bf16.msra.mxu0 %v1950
    %2737 = vmatpush.bf16.msra.mxu0 %v1943
    %2738 = vmatpush.bf16.msra.mxu0 %v1936
    %2739 = vmatpush.bf16.msra.mxu0 %v1929
    %2740 = vmatpush.bf16.msra.mxu0 %v1922
    %2741 = vmatpush.bf16.msra.mxu0 %v1915
    %2742 = vmatpush.bf16.msra.mxu0 %v1908
    %2743 = vmatpush.bf16.msra.mxu0 %v1901
    %2744 = vmatmul.bf16.gmra.mxu0 %v126
    %v2745 = vpop.f32.mrf.mxu0
    %v2746 = vadd.f32 %v2733, %v2745
    %v2747 = vpop.f32.mrf.mxu0
    %2748 = vdwg.mxu0
    %2749 = vmatpush.bf16.msra.mxu0 0
    %2750 = vmatpush.bf16.msra.mxu0 0
    %2751 = vmatpush.bf16.msra.mxu0 0
    %2752 = vmatpush.bf16.msra.mxu0 0
    %2753 = vmatpush.bf16.msra.mxu0 0
    %2754 = vmatpush.bf16.msra.mxu0 0
    %2755 = vmatpush.bf16.msra.mxu0 0
    %2756 = vmatpush.bf16.msra.mxu0 %v1957
    %2757 = vmatmul.bf16.gmra.mxu0 %v2305
    %v2758 = vpop.f32.mrf.mxu0
    %v2759 = vadd.f32 %v2746, %v2758
    %v2760 = vpop.f32.mrf.mxu0
    %2761 = vdwg.mxu0
    %2762 = vmatpush.bf16.msra.mxu0 %v1671
    %2763 = vmatpush.bf16.msra.mxu0 %v1664
    %2764 = vmatpush.bf16.msra.mxu0 %v1657
    %2765 = vmatpush.bf16.msra.mxu0 %v1650
    %2766 = vmatpush.bf16.msra.mxu0 %v1643
    %2767 = vmatpush.bf16.msra.mxu0 %v1636
    %2768 = vmatpush.bf16.msra.mxu0 %v1629
    %2769 = vmatpush.bf16.msra.mxu0 %v1622
    %2770 = vmatmul.bf16.gmra.mxu0 %v121
    %v2771 = vpop.f32.mrf.mxu0
    %v2772 = vadd.f32 %v530, %v2771
    %v2773 = vpop.f32.mrf.mxu0
    %2774 = vdwg.mxu0
    %2775 = vmatpush.bf16.msra.mxu0 %v1727
    %2776 = vmatpush.bf16.msra.mxu0 %v1720
    %2777 = vmatpush.bf16.msra.mxu0 %v1713
    %2778 = vmatpush.bf16.msra.mxu0 %v1706
    %2779 = vmatpush.bf16.msra.mxu0 %v1699
    %2780 = vmatpush.bf16.msra.mxu0 %v1692
    %2781 = vmatpush.bf16.msra.mxu0 %v1685
    %2782 = vmatpush.bf16.msra.mxu0 %v1678
    %2783 = vmatmul.bf16.gmra.mxu0 %v122
    %v2784 = vpop.f32.mrf.mxu0
    %v2785 = vadd.f32 %v2772, %v2784
    %v2786 = vpop.f32.mrf.mxu0
    %2787 = vdwg.mxu0
    %2788 = vmatpush.bf16.msra.mxu0 %v1783
    %2789 = vmatpush.bf16.msra.mxu0 %v1776
    %2790 = vmatpush.bf16.msra.mxu0 %v1769
    %2791 = vmatpush.bf16.msra.mxu0 %v1762
    %2792 = vmatpush.bf16.msra.mxu0 %v1755
    %2793 = vmatpush.bf16.msra.mxu0 %v1748
    %2794 = vmatpush.bf16.msra.mxu0 %v1741
    %2795 = vmatpush.bf16.msra.mxu0 %v1734
    %2796 = vmatmul.bf16.gmra.mxu0 %v123
    %v2797 = vpop.f32.mrf.mxu0
    %v2798 = vadd.f32 %v2785, %v2797
    %v2799 = vpop.f32.mrf.mxu0
    %2800 = vdwg.mxu0
    %2801 = vmatpush.bf16.msra.mxu0 %v1839
    %2802 = vmatpush.bf16.msra.mxu0 %v1832
    %2803 = vmatpush.bf16.msra.mxu0 %v1825
    %2804 = vmatpush.bf16.msra.mxu0 %v1818
    %2805 = vmatpush.bf16.msra.mxu0 %v1811
    %2806 = vmatpush.bf16.msra.mxu0 %v1804
    %2807 = vmatpush.bf16.msra.mxu0 %v1797
    %2808 = vmatpush.bf16.msra.mxu0 %v1790
    %2809 = vmatmul.bf16.gmra.mxu0 %v124
    %v2810 = vpop.f32.mrf.mxu0
    %v2811 = vadd.f32 %v2798, %v2810
    %v2812 = vpop.f32.mrf.mxu0
    %2813 = vdwg.mxu0
    %2814 = vmatpush.bf16.msra.mxu0 %v1895
    %2815 = vmatpush.bf16.msra.mxu0 %v1888
    %2816 = vmatpush.bf16.msra.mxu0 %v1881
    %2817 = vmatpush.bf16.msra.mxu0 %v1874
    %2818 = vmatpush.bf16.msra.mxu0 %v1867
    %2819 = vmatpush.bf16.msra.mxu0 %v1860
    %2820 = vmatpush.bf16.msra.mxu0 %v1853
    %2821 = vmatpush.bf16.msra.mxu0 %v1846
    %2822 = vmatmul.bf16.gmra.mxu0 %v125
    %v2823 = vpop.f32.mrf.mxu0
    %v2824 = vadd.f32 %v2811, %v2823
    %v2825 = vpop.f32.mrf.mxu0
    %2826 = vdwg.mxu0
    %2827 = vmatpush.bf16.msra.mxu0 %v1951
    %2828 = vmatpush.bf16.msra.mxu0 %v1944
    %2829 = vmatpush.bf16.msra.mxu0 %v1937
    %2830 = vmatpush.bf16.msra.mxu0 %v1930
    %2831 = vmatpush.bf16.msra.mxu0 %v1923
    %2832 = vmatpush.bf16.msra.mxu0 %v1916
    %2833 = vmatpush.bf16.msra.mxu0 %v1909
    %2834 = vmatpush.bf16.msra.mxu0 %v1902
    %2835 = vmatmul.bf16.gmra.mxu0 %v126
    %v2836 = vpop.f32.mrf.mxu0
    %v2837 = vadd.f32 %v2824, %v2836
    %v2838 = vpop.f32.mrf.mxu0
    %2839 = vdwg.mxu0
    %2840 = vmatpush.bf16.msra.mxu0 0
    %2841 = vmatpush.bf16.msra.mxu0 0
    %2842 = vmatpush.bf16.msra.mxu0 0
    %2843 = vmatpush.bf16.msra.mxu0 0
    %2844 = vmatpush.bf16.msra.mxu0 0
    %2845 = vmatpush.bf16.msra.mxu0 0
    %2846 = vmatpush.bf16.msra.mxu0 0
    %2847 = vmatpush.bf16.msra.mxu0 %v1958
    %2848 = vmatmul.bf16.gmra.mxu0 %v2305
    %v2849 = vpop.f32.mrf.mxu0
    %v2850 = vadd.f32 %v2837, %v2849
    %v2851 = vpop.f32.mrf.mxu0
    %2852 = vdwg.mxu0
    %2853 = vmatpush.bf16.msra.mxu0 %v1672
    %2854 = vmatpush.bf16.msra.mxu0 %v1665
    %2855 = vmatpush.bf16.msra.mxu0 %v1658
    %2856 = vmatpush.bf16.msra.mxu0 %v1651
    %2857 = vmatpush.bf16.msra.mxu0 %v1644
    %2858 = vmatpush.bf16.msra.mxu0 %v1637
    %2859 = vmatpush.bf16.msra.mxu0 %v1630
    %2860 = vmatpush.bf16.msra.mxu0 %v1623
    %2861 = vmatmul.bf16.gmra.mxu0 %v121
    %v2862 = vpop.f32.mrf.mxu0
    %v2863 = vadd.f32 %v531, %v2862
    %v2864 = vpop.f32.mrf.mxu0
    %2865 = vdwg.mxu0
    %2866 = vmatpush.bf16.msra.mxu0 %v1728
    %2867 = vmatpush.bf16.msra.mxu0 %v1721
    %2868 = vmatpush.bf16.msra.mxu0 %v1714
    %2869 = vmatpush.bf16.msra.mxu0 %v1707
    %2870 = vmatpush.bf16.msra.mxu0 %v1700
    %2871 = vmatpush.bf16.msra.mxu0 %v1693
    %2872 = vmatpush.bf16.msra.mxu0 %v1686
    %2873 = vmatpush.bf16.msra.mxu0 %v1679
    %2874 = vmatmul.bf16.gmra.mxu0 %v122
    %v2875 = vpop.f32.mrf.mxu0
    %v2876 = vadd.f32 %v2863, %v2875
    %v2877 = vpop.f32.mrf.mxu0
    %2878 = vdwg.mxu0
    %2879 = vmatpush.bf16.msra.mxu0 %v1784
    %2880 = vmatpush.bf16.msra.mxu0 %v1777
    %2881 = vmatpush.bf16.msra.mxu0 %v1770
    %2882 = vmatpush.bf16.msra.mxu0 %v1763
    %2883 = vmatpush.bf16.msra.mxu0 %v1756
    %2884 = vmatpush.bf16.msra.mxu0 %v1749
    %2885 = vmatpush.bf16.msra.mxu0 %v1742
    %2886 = vmatpush.bf16.msra.mxu0 %v1735
    %2887 = vmatmul.bf16.gmra.mxu0 %v123
    %v2888 = vpop.f32.mrf.mxu0
    %v2889 = vadd.f32 %v2876, %v2888
    %v2890 = vpop.f32.mrf.mxu0
    %2891 = vdwg.mxu0
    %2892 = vmatpush.bf16.msra.mxu0 %v1840
    %2893 = vmatpush.bf16.msra.mxu0 %v1833
    %2894 = vmatpush.bf16.msra.mxu0 %v1826
    %2895 = vmatpush.bf16.msra.mxu0 %v1819
    %2896 = vmatpush.bf16.msra.mxu0 %v1812
    %2897 = vmatpush.bf16.msra.mxu0 %v1805
    %2898 = vmatpush.bf16.msra.mxu0 %v1798
    %2899 = vmatpush.bf16.msra.mxu0 %v1791
    %2900 = vmatmul.bf16.gmra.mxu0 %v124
    %v2901 = vpop.f32.mrf.mxu0
    %v2902 = vadd.f32 %v2889, %v2901
    %v2903 = vpop.f32.mrf.mxu0
    %2904 = vdwg.mxu0
    %2905 = vmatpush.bf16.msra.mxu0 %v1896
    %2906 = vmatpush.bf16.msra.mxu0 %v1889
    %2907 = vmatpush.bf16.msra.mxu0 %v1882
    %2908 = vmatpush.bf16.msra.mxu0 %v1875
    %2909 = vmatpush.bf16.msra.mxu0 %v1868
    %2910 = vmatpush.bf16.msra.mxu0 %v1861
    %2911 = vmatpush.bf16.msra.mxu0 %v1854
    %2912 = vmatpush.bf16.msra.mxu0 %v1847
    %2913 = vmatmul.bf16.gmra.mxu0 %v125
    %v2914 = vpop.f32.mrf.mxu0
    %v2915 = vadd.f32 %v2902, %v2914
    %v2916 = vpop.f32.mrf.mxu0
    %2917 = vdwg.mxu0
    %2918 = vmatpush.bf16.msra.mxu0 %v1952
    %2919 = vmatpush.bf16.msra.mxu0 %v1945
    %2920 = vmatpush.bf16.msra.mxu0 %v1938
    %2921 = vmatpush.bf16.msra.mxu0 %v1931
    %2922 = vmatpush.bf16.msra.mxu0 %v1924
    %2923 = vmatpush.bf16.msra.mxu0 %v1917
    %2924 = vmatpush.bf16.msra.mxu0 %v1910
    %2925 = vmatpush.bf16.msra.mxu0 %v1903
    %2926 = vmatmul.bf16.gmra.mxu0 %v126
    %v2927 = vpop.f32.mrf.mxu0
    %v2928 = vadd.f32 %v2915, %v2927
    %v2929 = vpop.f32.mrf.mxu0
    %2930 = vdwg.mxu0
    %2931 = vmatpush.bf16.msra.mxu0 0
    %2932 = vmatpush.bf16.msra.mxu0 0
    %2933 = vmatpush.bf16.msra.mxu0 0
    %2934 = vmatpush.bf16.msra.mxu0 0
    %2935 = vmatpush.bf16.msra.mxu0 0
    %2936 = vmatpush.bf16.msra.mxu0 0
    %2937 = vmatpush.bf16.msra.mxu0 0
    %2938 = vmatpush.bf16.msra.mxu0 %v1959
    %2939 = vmatmul.bf16.gmra.mxu0 %v2305
    %v2940 = vpop.f32.mrf.mxu0
    %v2941 = vadd.f32 %v2928, %v2940
    %v2942 = vpop.f32.mrf.mxu0
    %2943 = vdwg.mxu0
    %v2944 = vpack.c.bf16 %v2486, %v2395
    %v2945 = vpack.c.bf16 %v2668, %v2577
    %v2946 = vpack.c.bf16 %v2850, %v2759
    %v2947 = vpack.c.bf16 %v2941, %v2941
    %v2948 = vunpack.c.l.bf16 %v2944
    %v2949 = vunpack.c.h.bf16 %v2944
    %v2950 = vunpack.c.l.bf16 %v2945
    %v2951 = vunpack.c.h.bf16 %v2945
    %v2952 = vunpack.c.l.bf16 %v2946
    %v2953 = vunpack.c.h.bf16 %v2946
    %v2954 = vunpack.c.l.bf16 %v2947
    %v2955 = vmax.f32 %v2948, 0.0
    %v2956 = vmax.f32 %v2949, 0.0
    %v2957 = vmax.f32 %v2950, 0.0
    %v2958 = vmax.f32 %v2951, 0.0
    %v2959 = vmax.f32 %v2952, 0.0
    %v2960 = vmax.f32 %v2953, 0.0
    %v2961 = vmax.f32 %v2954, 0.0
    %v2962 = vpack.c.bf16 %v2955, %v2955
    %v2963 = vpack.c.bf16 %v2956, %v2956
    %v2964 = vpack.c.bf16 %v2957, %v2957
    %v2965 = vpack.c.bf16 %v2958, %v2958
    %v2966 = vpack.c.bf16 %v2959, %v2959
    %v2967 = vpack.c.bf16 %v2960, %v2960
    %v2968 = vpack.c.bf16 %v2961, %v2961
    %v2969 = vld [vmem:[#allocation6] sm:$0xff]
    %v2970 = vld [vmem:[#allocation6 + $0x8] sm:$0xff]
    %v2971 = vld [vmem:[#allocation6 + $0x10] sm:$0xff]
    %v2972 = vld [vmem:[#allocation6 + $0x18] sm:$0xf]
    %v2973 = vld [vmem:[#allocation6 + $0x1c] sm:$0xff]
    %v2974 = vld [vmem:[#allocation6 + $0x24] sm:$0xff]
    %v2975 = vld [vmem:[#allocation6 + $0x2c] sm:$0xff]
    %v2976 = vld [vmem:[#allocation6 + $0x34] sm:$0xf]
    %v2977 = vld [vmem:[#allocation6 + $0x38] sm:$0xff]
    %v2978 = vld [vmem:[#allocation6 + $0x40] sm:$0xff]
    %v2979 = vld [vmem:[#allocation6 + $0x48] sm:$0xff]
    %v2980 = vld [vmem:[#allocation6 + $0x50] sm:$0xf]
    %v2981 = vld [vmem:[#allocation6 + $0x54] sm:$0xff]
    %v2982 = vld [vmem:[#allocation6 + $0x5c] sm:$0xff]
    %v2983 = vld [vmem:[#allocation6 + $0x64] sm:$0xff]
    %v2984 = vld [vmem:[#allocation6 + $0x6c] sm:$0xf]
    %v2985 = vld [vmem:[#allocation6 + $0x70] sm:$0xff]
    %v2986 = vld [vmem:[#allocation6 + $0x78] sm:$0xff]
    %v2987 = vld [vmem:[#allocation6 + $0x80] sm:$0xff]
    %v2988 = vld [vmem:[#allocation6 + $0x88] sm:$0xf]
    %v2989 = vld [vmem:[#allocation6 + $0x8c] sm:$0xff]
    %v2990 = vld [vmem:[#allocation6 + $0x94] sm:$0xff]
    %v2991 = vld [vmem:[#allocation6 + $0x9c] sm:$0xff]
    %v2992 = vld [vmem:[#allocation6 + $0xa4] sm:$0xf]
    %v2993 = vld [vmem:[#allocation6 + $0xa8] sm:$0xff]
    %v2994 = vld [vmem:[#allocation6 + $0xb0] sm:$0xff]
    %v2995 = vld [vmem:[#allocation6 + $0xb8] sm:$0xff]
    %v2996 = vld [vmem:[#allocation6 + $0xc0] sm:$0xf]
    %v2997 = vld [vmem:[#allocation6 + $0xc4] sm:$0xff]
    %v2998 = vld [vmem:[#allocation6 + $0xcc] sm:$0xff]
    %v2999 = vld [vmem:[#allocation6 + $0xd4] sm:$0xff]
    %v3000 = vld [vmem:[#allocation6 + $0xdc] sm:$0xf]
    %v3001 = vld [vmem:[#allocation6 + $0xe0] sm:$0xff]
    %v3002 = vld [vmem:[#allocation6 + $0xe8] sm:$0xff]
    %v3003 = vld [vmem:[#allocation6 + $0xf0] sm:$0xff]
    %v3004 = vld [vmem:[#allocation6 + $0xf8] sm:$0xf]
    %v3005 = vld [vmem:[#allocation6 + $0xfc] sm:$0xff]
    %v3006 = vld [vmem:[#allocation6 + $0x104] sm:$0xff]
    %v3007 = vld [vmem:[#allocation6 + $0x10c] sm:$0xff]
    %v3008 = vld [vmem:[#allocation6 + $0x114] sm:$0xf]
    %v3009 = vld [vmem:[#allocation6 + $0x118] sm:$0xff]
    %v3010 = vld [vmem:[#allocation6 + $0x120] sm:$0xff]
    %v3011 = vld [vmem:[#allocation6 + $0x128] sm:$0xff]
    %v3012 = vld [vmem:[#allocation6 + $0x130] sm:$0xf]
    %v3013 = vld [vmem:[#allocation6 + $0x134] sm:$0xff]
    %v3014 = vld [vmem:[#allocation6 + $0x13c] sm:$0xff]
    %v3015 = vld [vmem:[#allocation6 + $0x144] sm:$0xff]
    %v3016 = vld [vmem:[#allocation6 + $0x14c] sm:$0xf]
    %v3017 = vld [vmem:[#allocation6 + $0x150] sm:$0xff]
    %v3018 = vld [vmem:[#allocation6 + $0x158] sm:$0xff]
    %v3019 = vld [vmem:[#allocation6 + $0x160] sm:$0xff]
    %v3020 = vld [vmem:[#allocation6 + $0x168] sm:$0xf]
    %v3021 = vld [vmem:[#allocation6 + $0x16c] sm:$0xff]
    %v3022 = vld [vmem:[#allocation6 + $0x174] sm:$0xff]
    %v3023 = vld [vmem:[#allocation6 + $0x17c] sm:$0xff]
    %v3024 = vld [vmem:[#allocation6 + $0x184] sm:$0xf]
    %v3025 = vld [vmem:[#allocation6 + $0x188] sm:$0xff]
    %v3026 = vld [vmem:[#allocation6 + $0x190] sm:$0xff]
    %v3027 = vld [vmem:[#allocation6 + $0x198] sm:$0xff]
    %v3028 = vld [vmem:[#allocation6 + $0x1a0] sm:$0xf]
    %v3029 = vld [vmem:[#allocation6 + $0x1a4] sm:$0xff]
    %v3030 = vld [vmem:[#allocation6 + $0x1ac] sm:$0xff]
    %v3031 = vld [vmem:[#allocation6 + $0x1b4] sm:$0xff]
    %v3032 = vld [vmem:[#allocation6 + $0x1bc] sm:$0xf]
    %v3033 = vld [vmem:[#allocation6 + $0x1c0] sm:$0xff]
    %v3034 = vld [vmem:[#allocation6 + $0x1c8] sm:$0xff]
    %v3035 = vld [vmem:[#allocation6 + $0x1d0] sm:$0xff]
    %v3036 = vld [vmem:[#allocation6 + $0x1d8] sm:$0xf]
    %v3037 = vld [vmem:[#allocation6 + $0x1dc] sm:$0xff]
    %v3038 = vld [vmem:[#allocation6 + $0x1e4] sm:$0xff]
    %v3039 = vld [vmem:[#allocation6 + $0x1ec] sm:$0xff]
    %v3040 = vld [vmem:[#allocation6 + $0x1f4] sm:$0xf]
    %v3041 = vld [vmem:[#allocation6 + $0x1f8] sm:$0xff]
    %v3042 = vld [vmem:[#allocation6 + $0x200] sm:$0xff]
    %v3043 = vld [vmem:[#allocation6 + $0x208] sm:$0xff]
    %v3044 = vld [vmem:[#allocation6 + $0x210] sm:$0xf]
    %v3045 = vld [vmem:[#allocation6 + $0x214] sm:$0xff]
    %v3046 = vld [vmem:[#allocation6 + $0x21c] sm:$0xff]
    %v3047 = vld [vmem:[#allocation6 + $0x224] sm:$0xff]
    %v3048 = vld [vmem:[#allocation6 + $0x22c] sm:$0xf]
    %v3049 = vld [vmem:[#allocation6 + $0x230] sm:$0xff]
    %v3050 = vld [vmem:[#allocation6 + $0x238] sm:$0xff]
    %v3051 = vld [vmem:[#allocation6 + $0x240] sm:$0xff]
    %v3052 = vld [vmem:[#allocation6 + $0x248] sm:$0xf]
    %v3053 = vld [vmem:[#allocation6 + $0x24c] sm:$0xff]
    %v3054 = vld [vmem:[#allocation6 + $0x254] sm:$0xff]
    %v3055 = vld [vmem:[#allocation6 + $0x25c] sm:$0xff]
    %v3056 = vld [vmem:[#allocation6 + $0x264] sm:$0xf]
    %v3057 = vld [vmem:[#allocation6 + $0x268] sm:$0xff]
    %v3058 = vld [vmem:[#allocation6 + $0x270] sm:$0xff]
    %v3059 = vld [vmem:[#allocation6 + $0x278] sm:$0xff]
    %v3060 = vld [vmem:[#allocation6 + $0x280] sm:$0xf]
    %v3061 = vld [vmem:[#allocation6 + $0x284] sm:$0xff]
    %v3062 = vld [vmem:[#allocation6 + $0x28c] sm:$0xff]
    %v3063 = vld [vmem:[#allocation6 + $0x294] sm:$0xff]
    %v3064 = vld [vmem:[#allocation6 + $0x29c] sm:$0xf]
    %v3065 = vld [vmem:[#allocation6 + $0x2a0] sm:$0xff]
    %v3066 = vld [vmem:[#allocation6 + $0x2a8] sm:$0xff]
    %v3067 = vld [vmem:[#allocation6 + $0x2b0] sm:$0xff]
    %v3068 = vld [vmem:[#allocation6 + $0x2b8] sm:$0xf]
    %v3069 = vld [vmem:[#allocation6 + $0x2bc] sm:$0xff]
    %v3070 = vld [vmem:[#allocation6 + $0x2c4] sm:$0xff]
    %v3071 = vld [vmem:[#allocation6 + $0x2cc] sm:$0xff]
    %v3072 = vld [vmem:[#allocation6 + $0x2d4] sm:$0xf]
    %v3073 = vld [vmem:[#allocation6 + $0x2d8] sm:$0xff]
    %v3074 = vld [vmem:[#allocation6 + $0x2e0] sm:$0xff]
    %v3075 = vld [vmem:[#allocation6 + $0x2e8] sm:$0xff]
    %v3076 = vld [vmem:[#allocation6 + $0x2f0] sm:$0xf]
    %v3077 = vld [vmem:[#allocation6 + $0x2f4] sm:$0xff]
    %v3078 = vld [vmem:[#allocation6 + $0x2fc] sm:$0xff]
    %v3079 = vld [vmem:[#allocation6 + $0x304] sm:$0xff]
    %v3080 = vld [vmem:[#allocation6 + $0x30c] sm:$0xf]
    %v3081 = vld [vmem:[#allocation6 + $0x310] sm:$0xff]
    %v3082 = vld [vmem:[#allocation6 + $0x318] sm:$0xff]
    %v3083 = vld [vmem:[#allocation6 + $0x320] sm:$0xff]
    %v3084 = vld [vmem:[#allocation6 + $0x328] sm:$0xf]
    %v3085 = vld [vmem:[#allocation6 + $0x32c] sm:$0xff]
    %v3086 = vld [vmem:[#allocation6 + $0x334] sm:$0xff]
    %v3087 = vld [vmem:[#allocation6 + $0x33c] sm:$0xff]
    %v3088 = vld [vmem:[#allocation6 + $0x344] sm:$0xf]
    %v3089 = vld [vmem:[#allocation6 + $0x348] sm:$0xff]
    %v3090 = vld [vmem:[#allocation6 + $0x350] sm:$0xff]
    %v3091 = vld [vmem:[#allocation6 + $0x358] sm:$0xff]
    %v3092 = vld [vmem:[#allocation6 + $0x360] sm:$0xf]
    %v3093 = vld [vmem:[#allocation6 + $0x364] sm:$0xff]
    %v3094 = vld [vmem:[#allocation6 + $0x36c] sm:$0xff]
    %v3095 = vld [vmem:[#allocation6 + $0x374] sm:$0xff]
    %v3096 = vld [vmem:[#allocation6 + $0x37c] sm:$0xf]
    %v3097 = vld [vmem:[#allocation6 + $0x380] sm:$0xff]
    %v3098 = vld [vmem:[#allocation6 + $0x388] sm:$0xff]
    %v3099 = vld [vmem:[#allocation6 + $0x390] sm:$0xff]
    %v3100 = vld [vmem:[#allocation6 + $0x398] sm:$0xf]
    %v3101 = vld [vmem:[#allocation6 + $0x39c] sm:$0xff]
    %v3102 = vld [vmem:[#allocation6 + $0x3a4] sm:$0xff]
    %v3103 = vld [vmem:[#allocation6 + $0x3ac] sm:$0xff]
    %v3104 = vld [vmem:[#allocation6 + $0x3b4] sm:$0xf]
    %v3105 = vld [vmem:[#allocation6 + $0x3b8] sm:$0xff]
    %v3106 = vld [vmem:[#allocation6 + $0x3c0] sm:$0xff]
    %v3107 = vld [vmem:[#allocation6 + $0x3c8] sm:$0xff]
    %v3108 = vld [vmem:[#allocation6 + $0x3d0] sm:$0xf]
    %v3109 = vld [vmem:[#allocation6 + $0x3d4] sm:$0xff]
    %v3110 = vld [vmem:[#allocation6 + $0x3dc] sm:$0xff]
    %v3111 = vld [vmem:[#allocation6 + $0x3e4] sm:$0xff]
    %v3112 = vld [vmem:[#allocation6 + $0x3ec] sm:$0xf]
    %v3113 = vld [vmem:[#allocation6 + $0x3f0] sm:$0xff]
    %v3114 = vld [vmem:[#allocation6 + $0x3f8] sm:$0xff]
    %v3115 = vld [vmem:[#allocation6 + $0x400] sm:$0xff]
    %v3116 = vld [vmem:[#allocation6 + $0x408] sm:$0xf]
    %v3117 = vld [vmem:[#allocation6 + $0x40c] sm:$0xff]
    %v3118 = vld [vmem:[#allocation6 + $0x414] sm:$0xff]
    %v3119 = vld [vmem:[#allocation6 + $0x41c] sm:$0xff]
    %v3120 = vld [vmem:[#allocation6 + $0x424] sm:$0xf]
    %v3121 = vld [vmem:[#allocation6 + $0x428] sm:$0xff]
    %v3122 = vld [vmem:[#allocation6 + $0x430] sm:$0xff]
    %v3123 = vld [vmem:[#allocation6 + $0x438] sm:$0xff]
    %v3124 = vld [vmem:[#allocation6 + $0x440] sm:$0xf]
    %v3125 = vld [vmem:[#allocation6 + $0x444] sm:$0xff]
    %v3126 = vld [vmem:[#allocation6 + $0x44c] sm:$0xff]
    %v3127 = vld [vmem:[#allocation6 + $0x454] sm:$0xff]
    %v3128 = vld [vmem:[#allocation6 + $0x45c] sm:$0xf]
    %v3129 = vld [vmem:[#allocation6 + $0x460] sm:$0xff]
    %v3130 = vld [vmem:[#allocation6 + $0x468] sm:$0xff]
    %v3131 = vld [vmem:[#allocation6 + $0x470] sm:$0xff]
    %v3132 = vld [vmem:[#allocation6 + $0x478] sm:$0xf]
    %v3133 = vld [vmem:[#allocation6 + $0x47c] sm:$0xff]
    %v3134 = vld [vmem:[#allocation6 + $0x484] sm:$0xff]
    %v3135 = vld [vmem:[#allocation6 + $0x48c] sm:$0xff]
    %v3136 = vld [vmem:[#allocation6 + $0x494] sm:$0xf]
    %v3137 = vld [vmem:[#allocation6 + $0x498] sm:$0xff]
    %v3138 = vld [vmem:[#allocation6 + $0x4a0] sm:$0xff]
    %v3139 = vld [vmem:[#allocation6 + $0x4a8] sm:$0xff]
    %v3140 = vld [vmem:[#allocation6 + $0x4b0] sm:$0xf]
    %v3141 = vld [vmem:[#allocation6 + $0x4b4] sm:$0xff]
    %v3142 = vld [vmem:[#allocation6 + $0x4bc] sm:$0xff]
    %v3143 = vld [vmem:[#allocation6 + $0x4c4] sm:$0xff]
    %v3144 = vld [vmem:[#allocation6 + $0x4cc] sm:$0xf]
    %v3145 = vld [vmem:[#allocation6 + $0x4d0] sm:$0xff]
    %v3146 = vld [vmem:[#allocation6 + $0x4d8] sm:$0xff]
    %v3147 = vld [vmem:[#allocation6 + $0x4e0] sm:$0xff]
    %v3148 = vld [vmem:[#allocation6 + $0x4e8] sm:$0xf]
    %v3149 = vld [vmem:[#allocation6 + $0x4ec] sm:$0xff]
    %v3150 = vld [vmem:[#allocation6 + $0x4f4] sm:$0xff]
    %v3151 = vld [vmem:[#allocation6 + $0x4fc] sm:$0xff]
    %v3152 = vld [vmem:[#allocation6 + $0x504] sm:$0xf]
    %v3153 = vld [vmem:[#allocation6 + $0x508] sm:$0xff]
    %v3154 = vld [vmem:[#allocation6 + $0x510] sm:$0xff]
    %v3155 = vld [vmem:[#allocation6 + $0x518] sm:$0xff]
    %v3156 = vld [vmem:[#allocation6 + $0x520] sm:$0xf]
    %v3157 = vld [vmem:[#allocation6 + $0x524] sm:$0xff]
    %v3158 = vld [vmem:[#allocation6 + $0x52c] sm:$0xff]
    %v3159 = vld [vmem:[#allocation6 + $0x534] sm:$0xff]
    %v3160 = vld [vmem:[#allocation6 + $0x53c] sm:$0xf]
    %v3161 = vld [vmem:[#allocation6 + $0x540] sm:$0xff]
    %v3162 = vld [vmem:[#allocation6 + $0x548] sm:$0xff]
    %v3163 = vld [vmem:[#allocation6 + $0x550] sm:$0xff]
    %v3164 = vld [vmem:[#allocation6 + $0x558] sm:$0xf]
    %v3165 = vld [vmem:[#allocation6 + $0x55c] sm:$0xff]
    %v3166 = vld [vmem:[#allocation6 + $0x564] sm:$0xff]
    %v3167 = vld [vmem:[#allocation6 + $0x56c] sm:$0xff]
    %v3168 = vld [vmem:[#allocation6 + $0x574] sm:$0xf]
    %v3169 = vld [vmem:[#allocation6 + $0x578] sm:$0xff]
    %v3170 = vld [vmem:[#allocation6 + $0x580] sm:$0xff]
    %v3171 = vld [vmem:[#allocation6 + $0x588] sm:$0xff]
    %v3172 = vld [vmem:[#allocation6 + $0x590] sm:$0xf]
    %v3173 = vld [vmem:[#allocation6 + $0x594] sm:$0xff]
    %v3174 = vld [vmem:[#allocation6 + $0x59c] sm:$0xff]
    %v3175 = vld [vmem:[#allocation6 + $0x5a4] sm:$0xff]
    %v3176 = vld [vmem:[#allocation6 + $0x5ac] sm:$0xf]
    %v3177 = vld [vmem:[#allocation6 + $0x5b0] sm:$0xff]
    %v3178 = vld [vmem:[#allocation6 + $0x5b8] sm:$0xff]
    %v3179 = vld [vmem:[#allocation6 + $0x5c0] sm:$0xff]
    %v3180 = vld [vmem:[#allocation6 + $0x5c8] sm:$0xf]
    %v3181 = vld [vmem:[#allocation6 + $0x5cc] sm:$0xff]
    %v3182 = vld [vmem:[#allocation6 + $0x5d4] sm:$0xff]
    %v3183 = vld [vmem:[#allocation6 + $0x5dc] sm:$0xff]
    %v3184 = vld [vmem:[#allocation6 + $0x5e4] sm:$0xf]
    %v3185 = vld [vmem:[#allocation6 + $0x5e8] sm:$0xff]
    %v3186 = vld [vmem:[#allocation6 + $0x5f0] sm:$0xff]
    %v3187 = vld [vmem:[#allocation6 + $0x5f8] sm:$0xff]
    %v3188 = vld [vmem:[#allocation6 + $0x600] sm:$0xf]
    %v3189 = vld [vmem:[#allocation6 + $0x604] sm:$0xff]
    %v3190 = vld [vmem:[#allocation6 + $0x60c] sm:$0xff]
    %v3191 = vld [vmem:[#allocation6 + $0x614] sm:$0xff]
    %v3192 = vld [vmem:[#allocation6 + $0x61c] sm:$0xf]
    %v3193 = vld [vmem:[#allocation6 + $0x620] sm:$0xff]
    %v3194 = vld [vmem:[#allocation6 + $0x628] sm:$0xff]
    %v3195 = vld [vmem:[#allocation6 + $0x630] sm:$0xff]
    %v3196 = vld [vmem:[#allocation6 + $0x638] sm:$0xf]
    %v3197 = vld [vmem:[#allocation6 + $0x63c] sm:$0xff]
    %v3198 = vld [vmem:[#allocation6 + $0x644] sm:$0xff]
    %v3199 = vld [vmem:[#allocation6 + $0x64c] sm:$0xff]
    %v3200 = vld [vmem:[#allocation6 + $0x654] sm:$0xf]
    %v3201 = vld [vmem:[#allocation6 + $0x658] sm:$0xff]
    %v3202 = vld [vmem:[#allocation6 + $0x660] sm:$0xff]
    %v3203 = vld [vmem:[#allocation6 + $0x668] sm:$0xff]
    %v3204 = vld [vmem:[#allocation6 + $0x670] sm:$0xf]
    %v3205 = vld [vmem:[#allocation6 + $0x674] sm:$0xff]
    %v3206 = vld [vmem:[#allocation6 + $0x67c] sm:$0xff]
    %v3207 = vld [vmem:[#allocation6 + $0x684] sm:$0xff]
    %v3208 = vld [vmem:[#allocation6 + $0x68c] sm:$0xf]
    %v3209 = vld [vmem:[#allocation6 + $0x690] sm:$0xff]
    %v3210 = vld [vmem:[#allocation6 + $0x698] sm:$0xff]
    %v3211 = vld [vmem:[#allocation6 + $0x6a0] sm:$0xff]
    %v3212 = vld [vmem:[#allocation6 + $0x6a8] sm:$0xf]
    %v3213 = vld [vmem:[#allocation6 + $0x6ac] sm:$0xff]
    %v3214 = vld [vmem:[#allocation6 + $0x6b4] sm:$0xff]
    %v3215 = vld [vmem:[#allocation6 + $0x6bc] sm:$0xff]
    %v3216 = vld [vmem:[#allocation6 + $0x6c4] sm:$0xf]
    %v3217 = vld [vmem:[#allocation6 + $0x6c8] sm:$0xff]
    %v3218 = vld [vmem:[#allocation6 + $0x6d0] sm:$0xff]
    %v3219 = vld [vmem:[#allocation6 + $0x6d8] sm:$0xff]
    %v3220 = vld [vmem:[#allocation6 + $0x6e0] sm:$0xf]
    %v3221 = vld [vmem:[#allocation6 + $0x6e4] sm:$0xff]
    %v3222 = vld [vmem:[#allocation6 + $0x6ec] sm:$0xff]
    %v3223 = vld [vmem:[#allocation6 + $0x6f4] sm:$0xff]
    %v3224 = vld [vmem:[#allocation6 + $0x6fc] sm:$0xf]
    %v3225 = vld [vmem:[#allocation6 + $0x700] sm:$0xff]
    %v3226 = vld [vmem:[#allocation6 + $0x708] sm:$0xff]
    %v3227 = vld [vmem:[#allocation6 + $0x710] sm:$0xff]
    %v3228 = vld [vmem:[#allocation6 + $0x718] sm:$0xf]
    %v3229 = vld [vmem:[#allocation6 + $0x71c] sm:$0xff]
    %v3230 = vld [vmem:[#allocation6 + $0x724] sm:$0xff]
    %v3231 = vld [vmem:[#allocation6 + $0x72c] sm:$0xff]
    %v3232 = vld [vmem:[#allocation6 + $0x734] sm:$0xf]
    %v3233 = vld [vmem:[#allocation6 + $0x738] sm:$0xff]
    %v3234 = vld [vmem:[#allocation6 + $0x740] sm:$0xff]
    %v3235 = vld [vmem:[#allocation6 + $0x748] sm:$0xff]
    %v3236 = vld [vmem:[#allocation6 + $0x750] sm:$0xf]
    %v3237 = vld [vmem:[#allocation6 + $0x754] sm:$0xff]
    %v3238 = vld [vmem:[#allocation6 + $0x75c] sm:$0xff]
    %v3239 = vld [vmem:[#allocation6 + $0x764] sm:$0xff]
    %v3240 = vld [vmem:[#allocation6 + $0x76c] sm:$0xf]
    %v3241 = vld [vmem:[#allocation6 + $0x770] sm:$0xff]
    %v3242 = vld [vmem:[#allocation6 + $0x778] sm:$0xff]
    %v3243 = vld [vmem:[#allocation6 + $0x780] sm:$0xff]
    %v3244 = vld [vmem:[#allocation6 + $0x788] sm:$0xf]
    %v3245 = vld [vmem:[#allocation6 + $0x78c] sm:$0xff]
    %v3246 = vld [vmem:[#allocation6 + $0x794] sm:$0xff]
    %v3247 = vld [vmem:[#allocation6 + $0x79c] sm:$0xff]
    %v3248 = vld [vmem:[#allocation6 + $0x7a4] sm:$0xf]
    %v3249 = vld [vmem:[#allocation6 + $0x7a8] sm:$0xff]
    %v3250 = vld [vmem:[#allocation6 + $0x7b0] sm:$0xff]
    %v3251 = vld [vmem:[#allocation6 + $0x7b8] sm:$0xff]
    %v3252 = vld [vmem:[#allocation6 + $0x7c0] sm:$0xf]
    %v3253 = vld [vmem:[#allocation6 + $0x7c4] sm:$0xff]
    %v3254 = vld [vmem:[#allocation6 + $0x7cc] sm:$0xff]
    %v3255 = vld [vmem:[#allocation6 + $0x7d4] sm:$0xff]
    %v3256 = vld [vmem:[#allocation6 + $0x7dc] sm:$0xf]
    %v3257 = vld [vmem:[#allocation6 + $0x7e0] sm:$0xff]
    %v3258 = vld [vmem:[#allocation6 + $0x7e8] sm:$0xff]
    %v3259 = vld [vmem:[#allocation6 + $0x7f0] sm:$0xff]
    %v3260 = vld [vmem:[#allocation6 + $0x7f8] sm:$0xf]
    %v3261 = vld [vmem:[#allocation6 + $0x7fc] sm:$0xff]
    %v3262 = vld [vmem:[#allocation6 + $0x804] sm:$0xff]
    %v3263 = vld [vmem:[#allocation6 + $0x80c] sm:$0xff]
    %v3264 = vld [vmem:[#allocation6 + $0x814] sm:$0xf]
    %v3265 = vld [vmem:[#allocation6 + $0x818] sm:$0xff]
    %v3266 = vld [vmem:[#allocation6 + $0x820] sm:$0xff]
    %v3267 = vld [vmem:[#allocation6 + $0x828] sm:$0xff]
    %v3268 = vld [vmem:[#allocation6 + $0x830] sm:$0xf]
    %v3269 = vld [vmem:[#allocation6 + $0x834] sm:$0xff]
    %v3270 = vld [vmem:[#allocation6 + $0x83c] sm:$0xff]
    %v3271 = vld [vmem:[#allocation6 + $0x844] sm:$0xff]
    %v3272 = vld [vmem:[#allocation6 + $0x84c] sm:$0xf]
    %v3273 = vld [vmem:[#allocation6 + $0x850] sm:$0xff]
    %v3274 = vld [vmem:[#allocation6 + $0x858] sm:$0xff]
    %v3275 = vld [vmem:[#allocation6 + $0x860] sm:$0xff]
    %v3276 = vld [vmem:[#allocation6 + $0x868] sm:$0xf]
    %v3277 = vld [vmem:[#allocation6 + $0x86c] sm:$0xff]
    %v3278 = vld [vmem:[#allocation6 + $0x874] sm:$0xff]
    %v3279 = vld [vmem:[#allocation6 + $0x87c] sm:$0xff]
    %v3280 = vld [vmem:[#allocation6 + $0x884] sm:$0xf]
    %v3281 = vld [vmem:[#allocation6 + $0x888] sm:$0xff]
    %v3282 = vld [vmem:[#allocation6 + $0x890] sm:$0xff]
    %v3283 = vld [vmem:[#allocation6 + $0x898] sm:$0xff]
    %v3284 = vld [vmem:[#allocation6 + $0x8a0] sm:$0xf]
    %v3285 = vld [vmem:[#allocation6 + $0x8a4] sm:$0xff]
    %v3286 = vld [vmem:[#allocation6 + $0x8ac] sm:$0xff]
    %v3287 = vld [vmem:[#allocation6 + $0x8b4] sm:$0xff]
    %v3288 = vld [vmem:[#allocation6 + $0x8bc] sm:$0xf]
    %v3289 = vld [vmem:[#allocation6 + $0x8c0] sm:$0xff]
    %v3290 = vld [vmem:[#allocation6 + $0x8c8] sm:$0xff]
    %v3291 = vld [vmem:[#allocation6 + $0x8d0] sm:$0xff]
    %v3292 = vld [vmem:[#allocation6 + $0x8d8] sm:$0xf]
    %v3293 = vld [vmem:[#allocation6 + $0x8dc] sm:$0xff]
    %v3294 = vld [vmem:[#allocation6 + $0x8e4] sm:$0xff]
    %v3295 = vld [vmem:[#allocation6 + $0x8ec] sm:$0xff]
    %v3296 = vld [vmem:[#allocation6 + $0x8f4] sm:$0xf]
    %v3297 = vld [vmem:[#allocation6 + $0x8f8] sm:$0xff]
    %v3298 = vld [vmem:[#allocation6 + $0x900] sm:$0xff]
    %v3299 = vld [vmem:[#allocation6 + $0x908] sm:$0xff]
    %v3300 = vld [vmem:[#allocation6 + $0x910] sm:$0xf]
    %v3301 = vld [vmem:[#allocation6 + $0x914] sm:$0xff]
    %v3302 = vld [vmem:[#allocation6 + $0x91c] sm:$0xff]
    %v3303 = vld [vmem:[#allocation6 + $0x924] sm:$0xff]
    %v3304 = vld [vmem:[#allocation6 + $0x92c] sm:$0xf]
    %v3305 = vld [vmem:[#allocation6 + $0x930] sm:$0xff]
    %v3306 = vld [vmem:[#allocation6 + $0x938] sm:$0xff]
    %v3307 = vld [vmem:[#allocation6 + $0x940] sm:$0xff]
    %v3308 = vld [vmem:[#allocation6 + $0x948] sm:$0xf]
    %v3309 = vld [vmem:[#allocation6 + $0x94c] sm:$0xff]
    %v3310 = vld [vmem:[#allocation6 + $0x954] sm:$0xff]
    %v3311 = vld [vmem:[#allocation6 + $0x95c] sm:$0xff]
    %v3312 = vld [vmem:[#allocation6 + $0x964] sm:$0xf]
    %v3313 = vld [vmem:[#allocation6 + $0x968] sm:$0xff]
    %v3314 = vld [vmem:[#allocation6 + $0x970] sm:$0xff]
    %v3315 = vld [vmem:[#allocation6 + $0x978] sm:$0xff]
    %v3316 = vld [vmem:[#allocation6 + $0x980] sm:$0xf]
    %v3317 = vld [vmem:[#allocation6 + $0x984] sm:$0xff]
    %v3318 = vld [vmem:[#allocation6 + $0x98c] sm:$0xff]
    %v3319 = vld [vmem:[#allocation6 + $0x994] sm:$0xff]
    %v3320 = vld [vmem:[#allocation6 + $0x99c] sm:$0xf]
    %v3321 = vld [vmem:[#allocation6 + $0x9a0] sm:$0xff]
    %v3322 = vld [vmem:[#allocation6 + $0x9a8] sm:$0xff]
    %v3323 = vld [vmem:[#allocation6 + $0x9b0] sm:$0xff]
    %v3324 = vld [vmem:[#allocation6 + $0x9b8] sm:$0xf]
    %v3325 = vld [vmem:[#allocation6 + $0x9bc] sm:$0xff]
    %v3326 = vld [vmem:[#allocation6 + $0x9c4] sm:$0xff]
    %v3327 = vld [vmem:[#allocation6 + $0x9cc] sm:$0xff]
    %v3328 = vld [vmem:[#allocation6 + $0x9d4] sm:$0xf]
    %v3329 = vld [vmem:[#allocation6 + $0x9d8] sm:$0xff]
    %v3330 = vld [vmem:[#allocation6 + $0x9e0] sm:$0xff]
    %v3331 = vld [vmem:[#allocation6 + $0x9e8] sm:$0xff]
    %v3332 = vld [vmem:[#allocation6 + $0x9f0] sm:$0xf]
    %v3333 = vld [vmem:[#allocation6 + $0x9f4] sm:$0xff]
    %v3334 = vld [vmem:[#allocation6 + $0x9fc] sm:$0xff]
    %v3335 = vld [vmem:[#allocation6 + $0xa04] sm:$0xff]
    %v3336 = vld [vmem:[#allocation6 + $0xa0c] sm:$0xf]
    %v3337 = vld [vmem:[#allocation6 + $0xa10] sm:$0xff]
    %v3338 = vld [vmem:[#allocation6 + $0xa18] sm:$0xff]
    %v3339 = vld [vmem:[#allocation6 + $0xa20] sm:$0xff]
    %v3340 = vld [vmem:[#allocation6 + $0xa28] sm:$0xf]
    %v3341 = vld [vmem:[#allocation6 + $0xa2c] sm:$0xff]
    %v3342 = vld [vmem:[#allocation6 + $0xa34] sm:$0xff]
    %v3343 = vld [vmem:[#allocation6 + $0xa3c] sm:$0xff]
    %v3344 = vld [vmem:[#allocation6 + $0xa44] sm:$0xf]
    %v3345 = vld [vmem:[#allocation6 + $0xa48] sm:$0xff]
    %v3346 = vld [vmem:[#allocation6 + $0xa50] sm:$0xff]
    %v3347 = vld [vmem:[#allocation6 + $0xa58] sm:$0xff]
    %v3348 = vld [vmem:[#allocation6 + $0xa60] sm:$0xf]
    %v3349 = vld [vmem:[#allocation6 + $0xa64] sm:$0xff]
    %v3350 = vld [vmem:[#allocation6 + $0xa6c] sm:$0xff]
    %v3351 = vld [vmem:[#allocation6 + $0xa74] sm:$0xff]
    %v3352 = vld [vmem:[#allocation6 + $0xa7c] sm:$0xf]
    %v3353 = vld [vmem:[#allocation6 + $0xa80] sm:$0xff]
    %v3354 = vld [vmem:[#allocation6 + $0xa88] sm:$0xff]
    %v3355 = vld [vmem:[#allocation6 + $0xa90] sm:$0xff]
    %v3356 = vld [vmem:[#allocation6 + $0xa98] sm:$0xf]
    %v3357 = vld [vmem:[#allocation6 + $0xa9c] sm:$0xff]
    %v3358 = vld [vmem:[#allocation6 + $0xaa4] sm:$0xff]
    %v3359 = vld [vmem:[#allocation6 + $0xaac] sm:$0xff]
    %v3360 = vld [vmem:[#allocation6 + $0xab4] sm:$0xf]
    %v3361 = vld [vmem:[#allocation6 + $0xab8] sm:$0xff]
    %v3362 = vld [vmem:[#allocation6 + $0xac0] sm:$0xff]
    %v3363 = vld [vmem:[#allocation6 + $0xac8] sm:$0xff]
    %v3364 = vld [vmem:[#allocation6 + $0xad0] sm:$0xf]
    %v3365 = vld [vmem:[#allocation6 + $0xad4] sm:$0xff]
    %v3366 = vld [vmem:[#allocation6 + $0xadc] sm:$0xff]
    %v3367 = vld [vmem:[#allocation6 + $0xae4] sm:$0xff]
    %v3368 = vld [vmem:[#allocation6 + $0xaec] sm:$0xf]
    %v3369 = vld [vmem:[#allocation6 + $0xaf0] sm:$0xff]
    %v3370 = vld [vmem:[#allocation6 + $0xaf8] sm:$0xff]
    %v3371 = vld [vmem:[#allocation6 + $0xb00] sm:$0xff]
    %v3372 = vld [vmem:[#allocation6 + $0xb08] sm:$0xf]
    %v3373 = vld [vmem:[#allocation6 + $0xb0c] sm:$0xff]
    %v3374 = vld [vmem:[#allocation6 + $0xb14] sm:$0xff]
    %v3375 = vld [vmem:[#allocation6 + $0xb1c] sm:$0xff]
    %v3376 = vld [vmem:[#allocation6 + $0xb24] sm:$0xf]
    %v3377 = vld [vmem:[#allocation6 + $0xb28] sm:$0xff]
    %v3378 = vld [vmem:[#allocation6 + $0xb30] sm:$0xff]
    %v3379 = vld [vmem:[#allocation6 + $0xb38] sm:$0xff]
    %v3380 = vld [vmem:[#allocation6 + $0xb40] sm:$0xf]
    %v3381 = vld [vmem:[#allocation6 + $0xb44] sm:$0xff]
    %v3382 = vld [vmem:[#allocation6 + $0xb4c] sm:$0xff]
    %v3383 = vld [vmem:[#allocation6 + $0xb54] sm:$0xff]
    %v3384 = vld [vmem:[#allocation6 + $0xb5c] sm:$0xf]
    %v3385 = vld [vmem:[#allocation6 + $0xb60] sm:$0xff]
    %v3386 = vld [vmem:[#allocation6 + $0xb68] sm:$0xff]
    %v3387 = vld [vmem:[#allocation6 + $0xb70] sm:$0xff]
    %v3388 = vld [vmem:[#allocation6 + $0xb78] sm:$0xf]
    %v3389 = vld [vmem:[#allocation6 + $0xb7c] sm:$0xff]
    %v3390 = vld [vmem:[#allocation6 + $0xb84] sm:$0xff]
    %v3391 = vld [vmem:[#allocation6 + $0xb8c] sm:$0xff]
    %v3392 = vld [vmem:[#allocation6 + $0xb94] sm:$0xf]
    %v3393 = vld [vmem:[#allocation6 + $0xb98] sm:$0xff]
    %v3394 = vld [vmem:[#allocation6 + $0xba0] sm:$0xff]
    %v3395 = vld [vmem:[#allocation6 + $0xba8] sm:$0xff]
    %v3396 = vld [vmem:[#allocation6 + $0xbb0] sm:$0xf]
    %v3397 = vld [vmem:[#allocation6 + $0xbb4] sm:$0xff]
    %v3398 = vld [vmem:[#allocation6 + $0xbbc] sm:$0xff]
    %v3399 = vld [vmem:[#allocation6 + $0xbc4] sm:$0xff]
    %v3400 = vld [vmem:[#allocation6 + $0xbcc] sm:$0xf]
    %v3401 = vld [vmem:[#allocation6 + $0xbd0] sm:$0xff]
    %v3402 = vld [vmem:[#allocation6 + $0xbd8] sm:$0xff]
    %v3403 = vld [vmem:[#allocation6 + $0xbe0] sm:$0xff]
    %v3404 = vld [vmem:[#allocation6 + $0xbe8] sm:$0xf]
    %v3405 = vld [vmem:[#allocation6 + $0xbec] sm:$0xff]
    %v3406 = vld [vmem:[#allocation6 + $0xbf4] sm:$0xff]
    %v3407 = vld [vmem:[#allocation6 + $0xbfc] sm:$0xff]
    %v3408 = vld [vmem:[#allocation6 + $0xc04] sm:$0xf]
    %v3409 = vld [vmem:[#allocation6 + $0xc08] sm:$0xff]
    %v3410 = vld [vmem:[#allocation6 + $0xc10] sm:$0xff]
    %v3411 = vld [vmem:[#allocation6 + $0xc18] sm:$0xff]
    %v3412 = vld [vmem:[#allocation6 + $0xc20] sm:$0xf]
    %v3413 = vld [vmem:[#allocation6 + $0xc24] sm:$0xff]
    %v3414 = vld [vmem:[#allocation6 + $0xc2c] sm:$0xff]
    %v3415 = vld [vmem:[#allocation6 + $0xc34] sm:$0xff]
    %v3416 = vld [vmem:[#allocation6 + $0xc3c] sm:$0xf]
    %v3418 = vperm.slane %v129, 0
    %v3419 = vperm.slane %v129, 1
    %v3420 = vperm.slane %v129, 2
    %v3421 = vperm.slane %v129, 3
    %v3422 = vperm.slane %v129, 4
    %v3423 = vperm.slane %v129, 5
    %v3424 = vperm.slane %v129, 6
    %v3880 = vunpack.c.l.b16 %v2969
    %v3881 = vunpack.c.h.b16 %v2969
    %v3882 = vunpack.c.l.b16 %v2970
    %v3883 = vunpack.c.h.b16 %v2970
    %v3884 = vunpack.c.l.b16 %v2971
    %v3885 = vunpack.c.h.b16 %v2971
    %v3886 = vunpack.c.l.b16 %v2972
    %v3887 = vunpack.c.l.b16 %v2973
    %v3888 = vunpack.c.h.b16 %v2973
    %v3889 = vunpack.c.l.b16 %v2974
    %v3890 = vunpack.c.h.b16 %v2974
    %v3891 = vunpack.c.l.b16 %v2975
    %v3892 = vunpack.c.h.b16 %v2975
    %v3893 = vunpack.c.l.b16 %v2976
    %v3894 = vunpack.c.l.b16 %v2977
    %v3895 = vunpack.c.h.b16 %v2977
    %v3896 = vunpack.c.l.b16 %v2978
    %v3897 = vunpack.c.h.b16 %v2978
    %v3898 = vunpack.c.l.b16 %v2979
    %v3899 = vunpack.c.h.b16 %v2979
    %v3900 = vunpack.c.l.b16 %v2980
    %v3901 = vunpack.c.l.b16 %v2981
    %v3902 = vunpack.c.h.b16 %v2981
    %v3903 = vunpack.c.l.b16 %v2982
    %v3904 = vunpack.c.h.b16 %v2982
    %v3905 = vunpack.c.l.b16 %v2983
    %v3906 = vunpack.c.h.b16 %v2983
    %v3907 = vunpack.c.l.b16 %v2984
    %v3908 = vunpack.c.l.b16 %v2985
    %v3909 = vunpack.c.h.b16 %v2985
    %v3910 = vunpack.c.l.b16 %v2986
    %v3911 = vunpack.c.h.b16 %v2986
    %v3912 = vunpack.c.l.b16 %v2987
    %v3913 = vunpack.c.h.b16 %v2987
    %v3914 = vunpack.c.l.b16 %v2988
    %v3915 = vunpack.c.l.b16 %v2989
    %v3916 = vunpack.c.h.b16 %v2989
    %v3917 = vunpack.c.l.b16 %v2990
    %v3918 = vunpack.c.h.b16 %v2990
    %v3919 = vunpack.c.l.b16 %v2991
    %v3920 = vunpack.c.h.b16 %v2991
    %v3921 = vunpack.c.l.b16 %v2992
    %v3922 = vunpack.c.l.b16 %v2993
    %v3923 = vunpack.c.h.b16 %v2993
    %v3924 = vunpack.c.l.b16 %v2994
    %v3925 = vunpack.c.h.b16 %v2994
    %v3926 = vunpack.c.l.b16 %v2995
    %v3927 = vunpack.c.h.b16 %v2995
    %v3928 = vunpack.c.l.b16 %v2996
    %v3929 = vunpack.c.l.b16 %v2997
    %v3930 = vunpack.c.h.b16 %v2997
    %v3931 = vunpack.c.l.b16 %v2998
    %v3932 = vunpack.c.h.b16 %v2998
    %v3933 = vunpack.c.l.b16 %v2999
    %v3934 = vunpack.c.h.b16 %v2999
    %v3935 = vunpack.c.l.b16 %v3000
    %v3936 = vunpack.c.l.b16 %v3001
    %v3937 = vunpack.c.h.b16 %v3001
    %v3938 = vunpack.c.l.b16 %v3002
    %v3939 = vunpack.c.h.b16 %v3002
    %v3940 = vunpack.c.l.b16 %v3003
    %v3941 = vunpack.c.h.b16 %v3003
    %v3942 = vunpack.c.l.b16 %v3004
    %v3943 = vunpack.c.l.b16 %v3005
    %v3944 = vunpack.c.h.b16 %v3005
    %v3945 = vunpack.c.l.b16 %v3006
    %v3946 = vunpack.c.h.b16 %v3006
    %v3947 = vunpack.c.l.b16 %v3007
    %v3948 = vunpack.c.h.b16 %v3007
    %v3949 = vunpack.c.l.b16 %v3008
    %v3950 = vunpack.c.l.b16 %v3009
    %v3951 = vunpack.c.h.b16 %v3009
    %v3952 = vunpack.c.l.b16 %v3010
    %v3953 = vunpack.c.h.b16 %v3010
    %v3954 = vunpack.c.l.b16 %v3011
    %v3955 = vunpack.c.h.b16 %v3011
    %v3956 = vunpack.c.l.b16 %v3012
    %v3957 = vunpack.c.l.b16 %v3013
    %v3958 = vunpack.c.h.b16 %v3013
    %v3959 = vunpack.c.l.b16 %v3014
    %v3960 = vunpack.c.h.b16 %v3014
    %v3961 = vunpack.c.l.b16 %v3015
    %v3962 = vunpack.c.h.b16 %v3015
    %v3963 = vunpack.c.l.b16 %v3016
    %v3964 = vunpack.c.l.b16 %v3017
    %v3965 = vunpack.c.h.b16 %v3017
    %v3966 = vunpack.c.l.b16 %v3018
    %v3967 = vunpack.c.h.b16 %v3018
    %v3968 = vunpack.c.l.b16 %v3019
    %v3969 = vunpack.c.h.b16 %v3019
    %v3970 = vunpack.c.l.b16 %v3020
    %v3971 = vunpack.c.l.b16 %v3021
    %v3972 = vunpack.c.h.b16 %v3021
    %v3973 = vunpack.c.l.b16 %v3022
    %v3974 = vunpack.c.h.b16 %v3022
    %v3975 = vunpack.c.l.b16 %v3023
    %v3976 = vunpack.c.h.b16 %v3023
    %v3977 = vunpack.c.l.b16 %v3024
    %v3978 = vunpack.c.l.b16 %v3025
    %v3979 = vunpack.c.h.b16 %v3025
    %v3980 = vunpack.c.l.b16 %v3026
    %v3981 = vunpack.c.h.b16 %v3026
    %v3982 = vunpack.c.l.b16 %v3027
    %v3983 = vunpack.c.h.b16 %v3027
    %v3984 = vunpack.c.l.b16 %v3028
    %v3985 = vunpack.c.l.b16 %v3029
    %v3986 = vunpack.c.h.b16 %v3029
    %v3987 = vunpack.c.l.b16 %v3030
    %v3988 = vunpack.c.h.b16 %v3030
    %v3989 = vunpack.c.l.b16 %v3031
    %v3990 = vunpack.c.h.b16 %v3031
    %v3991 = vunpack.c.l.b16 %v3032
    %v3992 = vunpack.c.l.b16 %v3033
    %v3993 = vunpack.c.h.b16 %v3033
    %v3994 = vunpack.c.l.b16 %v3034
    %v3995 = vunpack.c.h.b16 %v3034
    %v3996 = vunpack.c.l.b16 %v3035
    %v3997 = vunpack.c.h.b16 %v3035
    %v3998 = vunpack.c.l.b16 %v3036
    %v3999 = vunpack.c.l.b16 %v3037
    %v4000 = vunpack.c.h.b16 %v3037
    %v4001 = vunpack.c.l.b16 %v3038
    %v4002 = vunpack.c.h.b16 %v3038
    %v4003 = vunpack.c.l.b16 %v3039
    %v4004 = vunpack.c.h.b16 %v3039
    %v4005 = vunpack.c.l.b16 %v3040
    %v4006 = vunpack.c.l.b16 %v3041
    %v4007 = vunpack.c.h.b16 %v3041
    %v4008 = vunpack.c.l.b16 %v3042
    %v4009 = vunpack.c.h.b16 %v3042
    %v4010 = vunpack.c.l.b16 %v3043
    %v4011 = vunpack.c.h.b16 %v3043
    %v4012 = vunpack.c.l.b16 %v3044
    %v4013 = vunpack.c.l.b16 %v3045
    %v4014 = vunpack.c.h.b16 %v3045
    %v4015 = vunpack.c.l.b16 %v3046
    %v4016 = vunpack.c.h.b16 %v3046
    %v4017 = vunpack.c.l.b16 %v3047
    %v4018 = vunpack.c.h.b16 %v3047
    %v4019 = vunpack.c.l.b16 %v3048
    %v4020 = vunpack.c.l.b16 %v3049
    %v4021 = vunpack.c.h.b16 %v3049
    %v4022 = vunpack.c.l.b16 %v3050
    %v4023 = vunpack.c.h.b16 %v3050
    %v4024 = vunpack.c.l.b16 %v3051
    %v4025 = vunpack.c.h.b16 %v3051
    %v4026 = vunpack.c.l.b16 %v3052
    %v4027 = vunpack.c.l.b16 %v3053
    %v4028 = vunpack.c.h.b16 %v3053
    %v4029 = vunpack.c.l.b16 %v3054
    %v4030 = vunpack.c.h.b16 %v3054
    %v4031 = vunpack.c.l.b16 %v3055
    %v4032 = vunpack.c.h.b16 %v3055
    %v4033 = vunpack.c.l.b16 %v3056
    %v4034 = vunpack.c.l.b16 %v3057
    %v4035 = vunpack.c.h.b16 %v3057
    %v4036 = vunpack.c.l.b16 %v3058
    %v4037 = vunpack.c.h.b16 %v3058
    %v4038 = vunpack.c.l.b16 %v3059
    %v4039 = vunpack.c.h.b16 %v3059
    %v4040 = vunpack.c.l.b16 %v3060
    %v4041 = vunpack.c.l.b16 %v3061
    %v4042 = vunpack.c.h.b16 %v3061
    %v4043 = vunpack.c.l.b16 %v3062
    %v4044 = vunpack.c.h.b16 %v3062
    %v4045 = vunpack.c.l.b16 %v3063
    %v4046 = vunpack.c.h.b16 %v3063
    %v4047 = vunpack.c.l.b16 %v3064
    %v4048 = vunpack.c.l.b16 %v3065
    %v4049 = vunpack.c.h.b16 %v3065
    %v4050 = vunpack.c.l.b16 %v3066
    %v4051 = vunpack.c.h.b16 %v3066
    %v4052 = vunpack.c.l.b16 %v3067
    %v4053 = vunpack.c.h.b16 %v3067
    %v4054 = vunpack.c.l.b16 %v3068
    %v4055 = vunpack.c.l.b16 %v3069
    %v4056 = vunpack.c.h.b16 %v3069
    %v4057 = vunpack.c.l.b16 %v3070
    %v4058 = vunpack.c.h.b16 %v3070
    %v4059 = vunpack.c.l.b16 %v3071
    %v4060 = vunpack.c.h.b16 %v3071
    %v4061 = vunpack.c.l.b16 %v3072
    %v4062 = vunpack.c.l.b16 %v3073
    %v4063 = vunpack.c.h.b16 %v3073
    %v4064 = vunpack.c.l.b16 %v3074
    %v4065 = vunpack.c.h.b16 %v3074
    %v4066 = vunpack.c.l.b16 %v3075
    %v4067 = vunpack.c.h.b16 %v3075
    %v4068 = vunpack.c.l.b16 %v3076
    %v4069 = vunpack.c.l.b16 %v3077
    %v4070 = vunpack.c.h.b16 %v3077
    %v4071 = vunpack.c.l.b16 %v3078
    %v4072 = vunpack.c.h.b16 %v3078
    %v4073 = vunpack.c.l.b16 %v3079
    %v4074 = vunpack.c.h.b16 %v3079
    %v4075 = vunpack.c.l.b16 %v3080
    %v4076 = vunpack.c.l.b16 %v3081
    %v4077 = vunpack.c.h.b16 %v3081
    %v4078 = vunpack.c.l.b16 %v3082
    %v4079 = vunpack.c.h.b16 %v3082
    %v4080 = vunpack.c.l.b16 %v3083
    %v4081 = vunpack.c.h.b16 %v3083
    %v4082 = vunpack.c.l.b16 %v3084
    %v4083 = vunpack.c.l.b16 %v3085
    %v4084 = vunpack.c.h.b16 %v3085
    %v4085 = vunpack.c.l.b16 %v3086
    %v4086 = vunpack.c.h.b16 %v3086
    %v4087 = vunpack.c.l.b16 %v3087
    %v4088 = vunpack.c.h.b16 %v3087
    %v4089 = vunpack.c.l.b16 %v3088
    %v4090 = vunpack.c.l.b16 %v3089
    %v4091 = vunpack.c.h.b16 %v3089
    %v4092 = vunpack.c.l.b16 %v3090
    %v4093 = vunpack.c.h.b16 %v3090
    %v4094 = vunpack.c.l.b16 %v3091
    %v4095 = vunpack.c.h.b16 %v3091
    %v4096 = vunpack.c.l.b16 %v3092
    %v4097 = vunpack.c.l.b16 %v3093
    %v4098 = vunpack.c.h.b16 %v3093
    %v4099 = vunpack.c.l.b16 %v3094
    %v4100 = vunpack.c.h.b16 %v3094
    %v4101 = vunpack.c.l.b16 %v3095
    %v4102 = vunpack.c.h.b16 %v3095
    %v4103 = vunpack.c.l.b16 %v3096
    %v4104 = vunpack.c.l.b16 %v3097
    %v4105 = vunpack.c.h.b16 %v3097
    %v4106 = vunpack.c.l.b16 %v3098
    %v4107 = vunpack.c.h.b16 %v3098
    %v4108 = vunpack.c.l.b16 %v3099
    %v4109 = vunpack.c.h.b16 %v3099
    %v4110 = vunpack.c.l.b16 %v3100
    %v4111 = vunpack.c.l.b16 %v3101
    %v4112 = vunpack.c.h.b16 %v3101
    %v4113 = vunpack.c.l.b16 %v3102
    %v4114 = vunpack.c.h.b16 %v3102
    %v4115 = vunpack.c.l.b16 %v3103
    %v4116 = vunpack.c.h.b16 %v3103
    %v4117 = vunpack.c.l.b16 %v3104
    %v4118 = vunpack.c.l.b16 %v3105
    %v4119 = vunpack.c.h.b16 %v3105
    %v4120 = vunpack.c.l.b16 %v3106
    %v4121 = vunpack.c.h.b16 %v3106
    %v4122 = vunpack.c.l.b16 %v3107
    %v4123 = vunpack.c.h.b16 %v3107
    %v4124 = vunpack.c.l.b16 %v3108
    %v4125 = vunpack.c.l.b16 %v3109
    %v4126 = vunpack.c.h.b16 %v3109
    %v4127 = vunpack.c.l.b16 %v3110
    %v4128 = vunpack.c.h.b16 %v3110
    %v4129 = vunpack.c.l.b16 %v3111
    %v4130 = vunpack.c.h.b16 %v3111
    %v4131 = vunpack.c.l.b16 %v3112
    %v4132 = vunpack.c.l.b16 %v3113
    %v4133 = vunpack.c.h.b16 %v3113
    %v4134 = vunpack.c.l.b16 %v3114
    %v4135 = vunpack.c.h.b16 %v3114
    %v4136 = vunpack.c.l.b16 %v3115
    %v4137 = vunpack.c.h.b16 %v3115
    %v4138 = vunpack.c.l.b16 %v3116
    %v4139 = vunpack.c.l.b16 %v3117
    %v4140 = vunpack.c.h.b16 %v3117
    %v4141 = vunpack.c.l.b16 %v3118
    %v4142 = vunpack.c.h.b16 %v3118
    %v4143 = vunpack.c.l.b16 %v3119
    %v4144 = vunpack.c.h.b16 %v3119
    %v4145 = vunpack.c.l.b16 %v3120
    %v4146 = vunpack.c.l.b16 %v3121
    %v4147 = vunpack.c.h.b16 %v3121
    %v4148 = vunpack.c.l.b16 %v3122
    %v4149 = vunpack.c.h.b16 %v3122
    %v4150 = vunpack.c.l.b16 %v3123
    %v4151 = vunpack.c.h.b16 %v3123
    %v4152 = vunpack.c.l.b16 %v3124
    %v4153 = vunpack.c.l.b16 %v3125
    %v4154 = vunpack.c.h.b16 %v3125
    %v4155 = vunpack.c.l.b16 %v3126
    %v4156 = vunpack.c.h.b16 %v3126
    %v4157 = vunpack.c.l.b16 %v3127
    %v4158 = vunpack.c.h.b16 %v3127
    %v4159 = vunpack.c.l.b16 %v3128
    %v4160 = vunpack.c.l.b16 %v3129
    %v4161 = vunpack.c.h.b16 %v3129
    %v4162 = vunpack.c.l.b16 %v3130
    %v4163 = vunpack.c.h.b16 %v3130
    %v4164 = vunpack.c.l.b16 %v3131
    %v4165 = vunpack.c.h.b16 %v3131
    %v4166 = vunpack.c.l.b16 %v3132
    %v4167 = vunpack.c.l.b16 %v3133
    %v4168 = vunpack.c.h.b16 %v3133
    %v4169 = vunpack.c.l.b16 %v3134
    %v4170 = vunpack.c.h.b16 %v3134
    %v4171 = vunpack.c.l.b16 %v3135
    %v4172 = vunpack.c.h.b16 %v3135
    %v4173 = vunpack.c.l.b16 %v3136
    %v4174 = vunpack.c.l.b16 %v3137
    %v4175 = vunpack.c.h.b16 %v3137
    %v4176 = vunpack.c.l.b16 %v3138
    %v4177 = vunpack.c.h.b16 %v3138
    %v4178 = vunpack.c.l.b16 %v3139
    %v4179 = vunpack.c.h.b16 %v3139
    %v4180 = vunpack.c.l.b16 %v3140
    %v4181 = vunpack.c.l.b16 %v3141
    %v4182 = vunpack.c.h.b16 %v3141
    %v4183 = vunpack.c.l.b16 %v3142
    %v4184 = vunpack.c.h.b16 %v3142
    %v4185 = vunpack.c.l.b16 %v3143
    %v4186 = vunpack.c.h.b16 %v3143
    %v4187 = vunpack.c.l.b16 %v3144
    %v4188 = vunpack.c.l.b16 %v3145
    %v4189 = vunpack.c.h.b16 %v3145
    %v4190 = vunpack.c.l.b16 %v3146
    %v4191 = vunpack.c.h.b16 %v3146
    %v4192 = vunpack.c.l.b16 %v3147
    %v4193 = vunpack.c.h.b16 %v3147
    %v4194 = vunpack.c.l.b16 %v3148
    %v4195 = vunpack.c.l.b16 %v3149
    %v4196 = vunpack.c.h.b16 %v3149
    %v4197 = vunpack.c.l.b16 %v3150
    %v4198 = vunpack.c.h.b16 %v3150
    %v4199 = vunpack.c.l.b16 %v3151
    %v4200 = vunpack.c.h.b16 %v3151
    %v4201 = vunpack.c.l.b16 %v3152
    %v4202 = vunpack.c.l.b16 %v3153
    %v4203 = vunpack.c.h.b16 %v3153
    %v4204 = vunpack.c.l.b16 %v3154
    %v4205 = vunpack.c.h.b16 %v3154
    %v4206 = vunpack.c.l.b16 %v3155
    %v4207 = vunpack.c.h.b16 %v3155
    %v4208 = vunpack.c.l.b16 %v3156
    %v4209 = vunpack.c.l.b16 %v3157
    %v4210 = vunpack.c.h.b16 %v3157
    %v4211 = vunpack.c.l.b16 %v3158
    %v4212 = vunpack.c.h.b16 %v3158
    %v4213 = vunpack.c.l.b16 %v3159
    %v4214 = vunpack.c.h.b16 %v3159
    %v4215 = vunpack.c.l.b16 %v3160
    %v4216 = vunpack.c.l.b16 %v3161
    %v4217 = vunpack.c.h.b16 %v3161
    %v4218 = vunpack.c.l.b16 %v3162
    %v4219 = vunpack.c.h.b16 %v3162
    %v4220 = vunpack.c.l.b16 %v3163
    %v4221 = vunpack.c.h.b16 %v3163
    %v4222 = vunpack.c.l.b16 %v3164
    %v4223 = vunpack.c.l.b16 %v3165
    %v4224 = vunpack.c.h.b16 %v3165
    %v4225 = vunpack.c.l.b16 %v3166
    %v4226 = vunpack.c.h.b16 %v3166
    %v4227 = vunpack.c.l.b16 %v3167
    %v4228 = vunpack.c.h.b16 %v3167
    %v4229 = vunpack.c.l.b16 %v3168
    %v4230 = vunpack.c.l.b16 %v3169
    %v4231 = vunpack.c.h.b16 %v3169
    %v4232 = vunpack.c.l.b16 %v3170
    %v4233 = vunpack.c.h.b16 %v3170
    %v4234 = vunpack.c.l.b16 %v3171
    %v4235 = vunpack.c.h.b16 %v3171
    %v4236 = vunpack.c.l.b16 %v3172
    %v4237 = vunpack.c.l.b16 %v3173
    %v4238 = vunpack.c.h.b16 %v3173
    %v4239 = vunpack.c.l.b16 %v3174
    %v4240 = vunpack.c.h.b16 %v3174
    %v4241 = vunpack.c.l.b16 %v3175
    %v4242 = vunpack.c.h.b16 %v3175
    %v4243 = vunpack.c.l.b16 %v3176
    %v4244 = vunpack.c.l.b16 %v3177
    %v4245 = vunpack.c.h.b16 %v3177
    %v4246 = vunpack.c.l.b16 %v3178
    %v4247 = vunpack.c.h.b16 %v3178
    %v4248 = vunpack.c.l.b16 %v3179
    %v4249 = vunpack.c.h.b16 %v3179
    %v4250 = vunpack.c.l.b16 %v3180
    %v4251 = vunpack.c.l.b16 %v3181
    %v4252 = vunpack.c.h.b16 %v3181
    %v4253 = vunpack.c.l.b16 %v3182
    %v4254 = vunpack.c.h.b16 %v3182
    %v4255 = vunpack.c.l.b16 %v3183
    %v4256 = vunpack.c.h.b16 %v3183
    %v4257 = vunpack.c.l.b16 %v3184
    %v4258 = vunpack.c.l.b16 %v3185
    %v4259 = vunpack.c.h.b16 %v3185
    %v4260 = vunpack.c.l.b16 %v3186
    %v4261 = vunpack.c.h.b16 %v3186
    %v4262 = vunpack.c.l.b16 %v3187
    %v4263 = vunpack.c.h.b16 %v3187
    %v4264 = vunpack.c.l.b16 %v3188
    %v4265 = vunpack.c.l.b16 %v3189
    %v4266 = vunpack.c.h.b16 %v3189
    %v4267 = vunpack.c.l.b16 %v3190
    %v4268 = vunpack.c.h.b16 %v3190
    %v4269 = vunpack.c.l.b16 %v3191
    %v4270 = vunpack.c.h.b16 %v3191
    %v4271 = vunpack.c.l.b16 %v3192
    %v4272 = vunpack.c.l.b16 %v3193
    %v4273 = vunpack.c.h.b16 %v3193
    %v4274 = vunpack.c.l.b16 %v3194
    %v4275 = vunpack.c.h.b16 %v3194
    %v4276 = vunpack.c.l.b16 %v3195
    %v4277 = vunpack.c.h.b16 %v3195
    %v4278 = vunpack.c.l.b16 %v3196
    %v4279 = vunpack.c.l.b16 %v3197
    %v4280 = vunpack.c.h.b16 %v3197
    %v4281 = vunpack.c.l.b16 %v3198
    %v4282 = vunpack.c.h.b16 %v3198
    %v4283 = vunpack.c.l.b16 %v3199
    %v4284 = vunpack.c.h.b16 %v3199
    %v4285 = vunpack.c.l.b16 %v3200
    %v4286 = vunpack.c.l.b16 %v3201
    %v4287 = vunpack.c.h.b16 %v3201
    %v4288 = vunpack.c.l.b16 %v3202
    %v4289 = vunpack.c.h.b16 %v3202
    %v4290 = vunpack.c.l.b16 %v3203
    %v4291 = vunpack.c.h.b16 %v3203
    %v4292 = vunpack.c.l.b16 %v3204
    %v4293 = vunpack.c.l.b16 %v3205
    %v4294 = vunpack.c.h.b16 %v3205
    %v4295 = vunpack.c.l.b16 %v3206
    %v4296 = vunpack.c.h.b16 %v3206
    %v4297 = vunpack.c.l.b16 %v3207
    %v4298 = vunpack.c.h.b16 %v3207
    %v4299 = vunpack.c.l.b16 %v3208
    %v4300 = vunpack.c.l.b16 %v3209
    %v4301 = vunpack.c.h.b16 %v3209
    %v4302 = vunpack.c.l.b16 %v3210
    %v4303 = vunpack.c.h.b16 %v3210
    %v4304 = vunpack.c.l.b16 %v3211
    %v4305 = vunpack.c.h.b16 %v3211
    %v4306 = vunpack.c.l.b16 %v3212
    %v4307 = vunpack.c.l.b16 %v3213
    %v4308 = vunpack.c.h.b16 %v3213
    %v4309 = vunpack.c.l.b16 %v3214
    %v4310 = vunpack.c.h.b16 %v3214
    %v4311 = vunpack.c.l.b16 %v3215
    %v4312 = vunpack.c.h.b16 %v3215
    %v4313 = vunpack.c.l.b16 %v3216
    %v4314 = vunpack.c.l.b16 %v3217
    %v4315 = vunpack.c.h.b16 %v3217
    %v4316 = vunpack.c.l.b16 %v3218
    %v4317 = vunpack.c.h.b16 %v3218
    %v4318 = vunpack.c.l.b16 %v3219
    %v4319 = vunpack.c.h.b16 %v3219
    %v4320 = vunpack.c.l.b16 %v3220
    %v4321 = vunpack.c.l.b16 %v3221
    %v4322 = vunpack.c.h.b16 %v3221
    %v4323 = vunpack.c.l.b16 %v3222
    %v4324 = vunpack.c.h.b16 %v3222
    %v4325 = vunpack.c.l.b16 %v3223
    %v4326 = vunpack.c.h.b16 %v3223
    %v4327 = vunpack.c.l.b16 %v3224
    %v4328 = vunpack.c.l.b16 %v3225
    %v4329 = vunpack.c.h.b16 %v3225
    %v4330 = vunpack.c.l.b16 %v3226
    %v4331 = vunpack.c.h.b16 %v3226
    %v4332 = vunpack.c.l.b16 %v3227
    %v4333 = vunpack.c.h.b16 %v3227
    %v4334 = vunpack.c.l.b16 %v3228
    %v4335 = vunpack.c.l.b16 %v3229
    %v4336 = vunpack.c.h.b16 %v3229
    %v4337 = vunpack.c.l.b16 %v3230
    %v4338 = vunpack.c.h.b16 %v3230
    %v4339 = vunpack.c.l.b16 %v3231
    %v4340 = vunpack.c.h.b16 %v3231
    %v4341 = vunpack.c.l.b16 %v3232
    %v4342 = vunpack.c.l.b16 %v3233
    %v4343 = vunpack.c.h.b16 %v3233
    %v4344 = vunpack.c.l.b16 %v3234
    %v4345 = vunpack.c.h.b16 %v3234
    %v4346 = vunpack.c.l.b16 %v3235
    %v4347 = vunpack.c.h.b16 %v3235
    %v4348 = vunpack.c.l.b16 %v3236
    %v4349 = vunpack.c.l.b16 %v3237
    %v4350 = vunpack.c.h.b16 %v3237
    %v4351 = vunpack.c.l.b16 %v3238
    %v4352 = vunpack.c.h.b16 %v3238
    %v4353 = vunpack.c.l.b16 %v3239
    %v4354 = vunpack.c.h.b16 %v3239
    %v4355 = vunpack.c.l.b16 %v3240
    %v4356 = vunpack.c.l.b16 %v3241
    %v4357 = vunpack.c.h.b16 %v3241
    %v4358 = vunpack.c.l.b16 %v3242
    %v4359 = vunpack.c.h.b16 %v3242
    %v4360 = vunpack.c.l.b16 %v3243
    %v4361 = vunpack.c.h.b16 %v3243
    %v4362 = vunpack.c.l.b16 %v3244
    %v4363 = vunpack.c.l.b16 %v3245
    %v4364 = vunpack.c.h.b16 %v3245
    %v4365 = vunpack.c.l.b16 %v3246
    %v4366 = vunpack.c.h.b16 %v3246
    %v4367 = vunpack.c.l.b16 %v3247
    %v4368 = vunpack.c.h.b16 %v3247
    %v4369 = vunpack.c.l.b16 %v3248
    %v4370 = vunpack.c.l.b16 %v3249
    %v4371 = vunpack.c.h.b16 %v3249
    %v4372 = vunpack.c.l.b16 %v3250
    %v4373 = vunpack.c.h.b16 %v3250
    %v4374 = vunpack.c.l.b16 %v3251
    %v4375 = vunpack.c.h.b16 %v3251
    %v4376 = vunpack.c.l.b16 %v3252
    %v4377 = vunpack.c.l.b16 %v3253
    %v4378 = vunpack.c.h.b16 %v3253
    %v4379 = vunpack.c.l.b16 %v3254
    %v4380 = vunpack.c.h.b16 %v3254
    %v4381 = vunpack.c.l.b16 %v3255
    %v4382 = vunpack.c.h.b16 %v3255
    %v4383 = vunpack.c.l.b16 %v3256
    %v4384 = vunpack.c.l.b16 %v3257
    %v4385 = vunpack.c.h.b16 %v3257
    %v4386 = vunpack.c.l.b16 %v3258
    %v4387 = vunpack.c.h.b16 %v3258
    %v4388 = vunpack.c.l.b16 %v3259
    %v4389 = vunpack.c.h.b16 %v3259
    %v4390 = vunpack.c.l.b16 %v3260
    %v4391 = vunpack.c.l.b16 %v3261
    %v4392 = vunpack.c.h.b16 %v3261
    %v4393 = vunpack.c.l.b16 %v3262
    %v4394 = vunpack.c.h.b16 %v3262
    %v4395 = vunpack.c.l.b16 %v3263
    %v4396 = vunpack.c.h.b16 %v3263
    %v4397 = vunpack.c.l.b16 %v3264
    %v4398 = vunpack.c.l.b16 %v3265
    %v4399 = vunpack.c.h.b16 %v3265
    %v4400 = vunpack.c.l.b16 %v3266
    %v4401 = vunpack.c.h.b16 %v3266
    %v4402 = vunpack.c.l.b16 %v3267
    %v4403 = vunpack.c.h.b16 %v3267
    %v4404 = vunpack.c.l.b16 %v3268
    %v4405 = vunpack.c.l.b16 %v3269
    %v4406 = vunpack.c.h.b16 %v3269
    %v4407 = vunpack.c.l.b16 %v3270
    %v4408 = vunpack.c.h.b16 %v3270
    %v4409 = vunpack.c.l.b16 %v3271
    %v4410 = vunpack.c.h.b16 %v3271
    %v4411 = vunpack.c.l.b16 %v3272
    %v4412 = vunpack.c.l.b16 %v3273
    %v4413 = vunpack.c.h.b16 %v3273
    %v4414 = vunpack.c.l.b16 %v3274
    %v4415 = vunpack.c.h.b16 %v3274
    %v4416 = vunpack.c.l.b16 %v3275
    %v4417 = vunpack.c.h.b16 %v3275
    %v4418 = vunpack.c.l.b16 %v3276
    %v4419 = vunpack.c.l.b16 %v3277
    %v4420 = vunpack.c.h.b16 %v3277
    %v4421 = vunpack.c.l.b16 %v3278
    %v4422 = vunpack.c.h.b16 %v3278
    %v4423 = vunpack.c.l.b16 %v3279
    %v4424 = vunpack.c.h.b16 %v3279
    %v4425 = vunpack.c.l.b16 %v3280
    %v4426 = vunpack.c.l.b16 %v3281
    %v4427 = vunpack.c.h.b16 %v3281
    %v4428 = vunpack.c.l.b16 %v3282
    %v4429 = vunpack.c.h.b16 %v3282
    %v4430 = vunpack.c.l.b16 %v3283
    %v4431 = vunpack.c.h.b16 %v3283
    %v4432 = vunpack.c.l.b16 %v3284
    %v4433 = vunpack.c.l.b16 %v3285
    %v4434 = vunpack.c.h.b16 %v3285
    %v4435 = vunpack.c.l.b16 %v3286
    %v4436 = vunpack.c.h.b16 %v3286
    %v4437 = vunpack.c.l.b16 %v3287
    %v4438 = vunpack.c.h.b16 %v3287
    %v4439 = vunpack.c.l.b16 %v3288
    %v4440 = vunpack.c.l.b16 %v3289
    %v4441 = vunpack.c.h.b16 %v3289
    %v4442 = vunpack.c.l.b16 %v3290
    %v4443 = vunpack.c.h.b16 %v3290
    %v4444 = vunpack.c.l.b16 %v3291
    %v4445 = vunpack.c.h.b16 %v3291
    %v4446 = vunpack.c.l.b16 %v3292
    %v4447 = vunpack.c.l.b16 %v3293
    %v4448 = vunpack.c.h.b16 %v3293
    %v4449 = vunpack.c.l.b16 %v3294
    %v4450 = vunpack.c.h.b16 %v3294
    %v4451 = vunpack.c.l.b16 %v3295
    %v4452 = vunpack.c.h.b16 %v3295
    %v4453 = vunpack.c.l.b16 %v3296
    %v4454 = vunpack.c.l.b16 %v3297
    %v4455 = vunpack.c.h.b16 %v3297
    %v4456 = vunpack.c.l.b16 %v3298
    %v4457 = vunpack.c.h.b16 %v3298
    %v4458 = vunpack.c.l.b16 %v3299
    %v4459 = vunpack.c.h.b16 %v3299
    %v4460 = vunpack.c.l.b16 %v3300
    %v4461 = vunpack.c.l.b16 %v3301
    %v4462 = vunpack.c.h.b16 %v3301
    %v4463 = vunpack.c.l.b16 %v3302
    %v4464 = vunpack.c.h.b16 %v3302
    %v4465 = vunpack.c.l.b16 %v3303
    %v4466 = vunpack.c.h.b16 %v3303
    %v4467 = vunpack.c.l.b16 %v3304
    %v4468 = vunpack.c.l.b16 %v3305
    %v4469 = vunpack.c.h.b16 %v3305
    %v4470 = vunpack.c.l.b16 %v3306
    %v4471 = vunpack.c.h.b16 %v3306
    %v4472 = vunpack.c.l.b16 %v3307
    %v4473 = vunpack.c.h.b16 %v3307
    %v4474 = vunpack.c.l.b16 %v3308
    %v4475 = vunpack.c.l.b16 %v3309
    %v4476 = vunpack.c.h.b16 %v3309
    %v4477 = vunpack.c.l.b16 %v3310
    %v4478 = vunpack.c.h.b16 %v3310
    %v4479 = vunpack.c.l.b16 %v3311
    %v4480 = vunpack.c.h.b16 %v3311
    %v4481 = vunpack.c.l.b16 %v3312
    %v4482 = vunpack.c.l.b16 %v3313
    %v4483 = vunpack.c.h.b16 %v3313
    %v4484 = vunpack.c.l.b16 %v3314
    %v4485 = vunpack.c.h.b16 %v3314
    %v4486 = vunpack.c.l.b16 %v3315
    %v4487 = vunpack.c.h.b16 %v3315
    %v4488 = vunpack.c.l.b16 %v3316
    %v4489 = vunpack.c.l.b16 %v3317
    %v4490 = vunpack.c.h.b16 %v3317
    %v4491 = vunpack.c.l.b16 %v3318
    %v4492 = vunpack.c.h.b16 %v3318
    %v4493 = vunpack.c.l.b16 %v3319
    %v4494 = vunpack.c.h.b16 %v3319
    %v4495 = vunpack.c.l.b16 %v3320
    %v4496 = vunpack.c.l.b16 %v3321
    %v4497 = vunpack.c.h.b16 %v3321
    %v4498 = vunpack.c.l.b16 %v3322
    %v4499 = vunpack.c.h.b16 %v3322
    %v4500 = vunpack.c.l.b16 %v3323
    %v4501 = vunpack.c.h.b16 %v3323
    %v4502 = vunpack.c.l.b16 %v3324
    %v4503 = vunpack.c.l.b16 %v3325
    %v4504 = vunpack.c.h.b16 %v3325
    %v4505 = vunpack.c.l.b16 %v3326
    %v4506 = vunpack.c.h.b16 %v3326
    %v4507 = vunpack.c.l.b16 %v3327
    %v4508 = vunpack.c.h.b16 %v3327
    %v4509 = vunpack.c.l.b16 %v3328
    %v4510 = vunpack.c.l.b16 %v3329
    %v4511 = vunpack.c.h.b16 %v3329
    %v4512 = vunpack.c.l.b16 %v3330
    %v4513 = vunpack.c.h.b16 %v3330
    %v4514 = vunpack.c.l.b16 %v3331
    %v4515 = vunpack.c.h.b16 %v3331
    %v4516 = vunpack.c.l.b16 %v3332
    %v4517 = vunpack.c.l.b16 %v3333
    %v4518 = vunpack.c.h.b16 %v3333
    %v4519 = vunpack.c.l.b16 %v3334
    %v4520 = vunpack.c.h.b16 %v3334
    %v4521 = vunpack.c.l.b16 %v3335
    %v4522 = vunpack.c.h.b16 %v3335
    %v4523 = vunpack.c.l.b16 %v3336
    %v4524 = vunpack.c.l.b16 %v3337
    %v4525 = vunpack.c.h.b16 %v3337
    %v4526 = vunpack.c.l.b16 %v3338
    %v4527 = vunpack.c.h.b16 %v3338
    %v4528 = vunpack.c.l.b16 %v3339
    %v4529 = vunpack.c.h.b16 %v3339
    %v4530 = vunpack.c.l.b16 %v3340
    %v4531 = vunpack.c.l.b16 %v3341
    %v4532 = vunpack.c.h.b16 %v3341
    %v4533 = vunpack.c.l.b16 %v3342
    %v4534 = vunpack.c.h.b16 %v3342
    %v4535 = vunpack.c.l.b16 %v3343
    %v4536 = vunpack.c.h.b16 %v3343
    %v4537 = vunpack.c.l.b16 %v3344
    %v4538 = vunpack.c.l.b16 %v3345
    %v4539 = vunpack.c.h.b16 %v3345
    %v4540 = vunpack.c.l.b16 %v3346
    %v4541 = vunpack.c.h.b16 %v3346
    %v4542 = vunpack.c.l.b16 %v3347
    %v4543 = vunpack.c.h.b16 %v3347
    %v4544 = vunpack.c.l.b16 %v3348
    %v4545 = vunpack.c.l.b16 %v3349
    %v4546 = vunpack.c.h.b16 %v3349
    %v4547 = vunpack.c.l.b16 %v3350
    %v4548 = vunpack.c.h.b16 %v3350
    %v4549 = vunpack.c.l.b16 %v3351
    %v4550 = vunpack.c.h.b16 %v3351
    %v4551 = vunpack.c.l.b16 %v3352
    %v4552 = vunpack.c.l.b16 %v3353
    %v4553 = vunpack.c.h.b16 %v3353
    %v4554 = vunpack.c.l.b16 %v3354
    %v4555 = vunpack.c.h.b16 %v3354
    %v4556 = vunpack.c.l.b16 %v3355
    %v4557 = vunpack.c.h.b16 %v3355
    %v4558 = vunpack.c.l.b16 %v3356
    %v4559 = vunpack.c.l.b16 %v3357
    %v4560 = vunpack.c.h.b16 %v3357
    %v4561 = vunpack.c.l.b16 %v3358
    %v4562 = vunpack.c.h.b16 %v3358
    %v4563 = vunpack.c.l.b16 %v3359
    %v4564 = vunpack.c.h.b16 %v3359
    %v4565 = vunpack.c.l.b16 %v3360
    %v4566 = vunpack.c.l.b16 %v3361
    %v4567 = vunpack.c.h.b16 %v3361
    %v4568 = vunpack.c.l.b16 %v3362
    %v4569 = vunpack.c.h.b16 %v3362
    %v4570 = vunpack.c.l.b16 %v3363
    %v4571 = vunpack.c.h.b16 %v3363
    %v4572 = vunpack.c.l.b16 %v3364
    %v4573 = vunpack.c.l.b16 %v3365
    %v4574 = vunpack.c.h.b16 %v3365
    %v4575 = vunpack.c.l.b16 %v3366
    %v4576 = vunpack.c.h.b16 %v3366
    %v4577 = vunpack.c.l.b16 %v3367
    %v4578 = vunpack.c.h.b16 %v3367
    %v4579 = vunpack.c.l.b16 %v3368
    %v4580 = vunpack.c.l.b16 %v3369
    %v4581 = vunpack.c.h.b16 %v3369
    %v4582 = vunpack.c.l.b16 %v3370
    %v4583 = vunpack.c.h.b16 %v3370
    %v4584 = vunpack.c.l.b16 %v3371
    %v4585 = vunpack.c.h.b16 %v3371
    %v4586 = vunpack.c.l.b16 %v3372
    %v4587 = vunpack.c.l.b16 %v3373
    %v4588 = vunpack.c.h.b16 %v3373
    %v4589 = vunpack.c.l.b16 %v3374
    %v4590 = vunpack.c.h.b16 %v3374
    %v4591 = vunpack.c.l.b16 %v3375
    %v4592 = vunpack.c.h.b16 %v3375
    %v4593 = vunpack.c.l.b16 %v3376
    %v4594 = vunpack.c.l.b16 %v3377
    %v4595 = vunpack.c.h.b16 %v3377
    %v4596 = vunpack.c.l.b16 %v3378
    %v4597 = vunpack.c.h.b16 %v3378
    %v4598 = vunpack.c.l.b16 %v3379
    %v4599 = vunpack.c.h.b16 %v3379
    %v4600 = vunpack.c.l.b16 %v3380
    %v4601 = vunpack.c.l.b16 %v3381
    %v4602 = vunpack.c.h.b16 %v3381
    %v4603 = vunpack.c.l.b16 %v3382
    %v4604 = vunpack.c.h.b16 %v3382
    %v4605 = vunpack.c.l.b16 %v3383
    %v4606 = vunpack.c.h.b16 %v3383
    %v4607 = vunpack.c.l.b16 %v3384
    %v4608 = vunpack.c.l.b16 %v3385
    %v4609 = vunpack.c.h.b16 %v3385
    %v4610 = vunpack.c.l.b16 %v3386
    %v4611 = vunpack.c.h.b16 %v3386
    %v4612 = vunpack.c.l.b16 %v3387
    %v4613 = vunpack.c.h.b16 %v3387
    %v4614 = vunpack.c.l.b16 %v3388
    %v4615 = vunpack.c.l.b16 %v3389
    %v4616 = vunpack.c.h.b16 %v3389
    %v4617 = vunpack.c.l.b16 %v3390
    %v4618 = vunpack.c.h.b16 %v3390
    %v4619 = vunpack.c.l.b16 %v3391
    %v4620 = vunpack.c.h.b16 %v3391
    %v4621 = vunpack.c.l.b16 %v3392
    %v4622 = vunpack.c.l.b16 %v3393
    %v4623 = vunpack.c.h.b16 %v3393
    %v4624 = vunpack.c.l.b16 %v3394
    %v4625 = vunpack.c.h.b16 %v3394
    %v4626 = vunpack.c.l.b16 %v3395
    %v4627 = vunpack.c.h.b16 %v3395
    %v4628 = vunpack.c.l.b16 %v3396
    %v4629 = vunpack.c.l.b16 %v3397
    %v4630 = vunpack.c.h.b16 %v3397
    %v4631 = vunpack.c.l.b16 %v3398
    %v4632 = vunpack.c.h.b16 %v3398
    %v4633 = vunpack.c.l.b16 %v3399
    %v4634 = vunpack.c.h.b16 %v3399
    %v4635 = vunpack.c.l.b16 %v3400
    %v4636 = vunpack.c.l.b16 %v3401
    %v4637 = vunpack.c.h.b16 %v3401
    %v4638 = vunpack.c.l.b16 %v3402
    %v4639 = vunpack.c.h.b16 %v3402
    %v4640 = vunpack.c.l.b16 %v3403
    %v4641 = vunpack.c.h.b16 %v3403
    %v4642 = vunpack.c.l.b16 %v3404
    %v4643 = vunpack.c.l.b16 %v3405
    %v4644 = vunpack.c.h.b16 %v3405
    %v4645 = vunpack.c.l.b16 %v3406
    %v4646 = vunpack.c.h.b16 %v3406
    %v4647 = vunpack.c.l.b16 %v3407
    %v4648 = vunpack.c.h.b16 %v3407
    %v4649 = vunpack.c.l.b16 %v3408
    %v4650 = vunpack.c.l.b16 %v3409
    %v4651 = vunpack.c.h.b16 %v3409
    %v4652 = vunpack.c.l.b16 %v3410
    %v4653 = vunpack.c.h.b16 %v3410
    %v4654 = vunpack.c.l.b16 %v3411
    %v4655 = vunpack.c.h.b16 %v3411
    %v4656 = vunpack.c.l.b16 %v3412
    %v4657 = vunpack.c.l.b16 %v3413
    %v4658 = vunpack.c.h.b16 %v3413
    %v4659 = vunpack.c.l.b16 %v3414
    %v4660 = vunpack.c.h.b16 %v3414
    %v4661 = vunpack.c.l.b16 %v3415
    %v4662 = vunpack.c.h.b16 %v3415
    %v4663 = vunpack.c.l.b16 %v3416
    %v4664 = vpack.c.b16 %v3887, %v3880
    %v4665 = vpack.c.b16 %v3888, %v3881
    %v4666 = vpack.c.b16 %v3889, %v3882
    %v4667 = vpack.c.b16 %v3890, %v3883
    %v4668 = vpack.c.b16 %v3891, %v3884
    %v4669 = vpack.c.b16 %v3892, %v3885
    %v4670 = vpack.c.b16 %v3893, %v3886
    %v4671 = vpack.c.b16 %v3901, %v3894
    %v4672 = vpack.c.b16 %v3902, %v3895
    %v4673 = vpack.c.b16 %v3903, %v3896
    %v4674 = vpack.c.b16 %v3904, %v3897
    %v4675 = vpack.c.b16 %v3905, %v3898
    %v4676 = vpack.c.b16 %v3906, %v3899
    %v4677 = vpack.c.b16 %v3907, %v3900
    %v4678 = vpack.c.b16 %v3915, %v3908
    %v4679 = vpack.c.b16 %v3916, %v3909
    %v4680 = vpack.c.b16 %v3917, %v3910
    %v4681 = vpack.c.b16 %v3918, %v3911
    %v4682 = vpack.c.b16 %v3919, %v3912
    %v4683 = vpack.c.b16 %v3920, %v3913
    %v4684 = vpack.c.b16 %v3921, %v3914
    %v4685 = vpack.c.b16 %v3929, %v3922
    %v4686 = vpack.c.b16 %v3930, %v3923
    %v4687 = vpack.c.b16 %v3931, %v3924
    %v4688 = vpack.c.b16 %v3932, %v3925
    %v4689 = vpack.c.b16 %v3933, %v3926
    %v4690 = vpack.c.b16 %v3934, %v3927
    %v4691 = vpack.c.b16 %v3935, %v3928
    %v4692 = vpack.c.b16 %v3943, %v3936
    %v4693 = vpack.c.b16 %v3944, %v3937
    %v4694 = vpack.c.b16 %v3945, %v3938
    %v4695 = vpack.c.b16 %v3946, %v3939
    %v4696 = vpack.c.b16 %v3947, %v3940
    %v4697 = vpack.c.b16 %v3948, %v3941
    %v4698 = vpack.c.b16 %v3949, %v3942
    %v4699 = vpack.c.b16 %v3957, %v3950
    %v4700 = vpack.c.b16 %v3958, %v3951
    %v4701 = vpack.c.b16 %v3959, %v3952
    %v4702 = vpack.c.b16 %v3960, %v3953
    %v4703 = vpack.c.b16 %v3961, %v3954
    %v4704 = vpack.c.b16 %v3962, %v3955
    %v4705 = vpack.c.b16 %v3963, %v3956
    %v4706 = vpack.c.b16 %v3971, %v3964
    %v4707 = vpack.c.b16 %v3972, %v3965
    %v4708 = vpack.c.b16 %v3973, %v3966
    %v4709 = vpack.c.b16 %v3974, %v3967
    %v4710 = vpack.c.b16 %v3975, %v3968
    %v4711 = vpack.c.b16 %v3976, %v3969
    %v4712 = vpack.c.b16 %v3977, %v3970
    %v4713 = vpack.c.b16 %v3985, %v3978
    %v4714 = vpack.c.b16 %v3986, %v3979
    %v4715 = vpack.c.b16 %v3987, %v3980
    %v4716 = vpack.c.b16 %v3988, %v3981
    %v4717 = vpack.c.b16 %v3989, %v3982
    %v4718 = vpack.c.b16 %v3990, %v3983
    %v4719 = vpack.c.b16 %v3991, %v3984
    %v4720 = vpack.c.b16 %v3999, %v3992
    %v4721 = vpack.c.b16 %v4000, %v3993
    %v4722 = vpack.c.b16 %v4001, %v3994
    %v4723 = vpack.c.b16 %v4002, %v3995
    %v4724 = vpack.c.b16 %v4003, %v3996
    %v4725 = vpack.c.b16 %v4004, %v3997
    %v4726 = vpack.c.b16 %v4005, %v3998
    %v4727 = vpack.c.b16 %v4013, %v4006
    %v4728 = vpack.c.b16 %v4014, %v4007
    %v4729 = vpack.c.b16 %v4015, %v4008
    %v4730 = vpack.c.b16 %v4016, %v4009
    %v4731 = vpack.c.b16 %v4017, %v4010
    %v4732 = vpack.c.b16 %v4018, %v4011
    %v4733 = vpack.c.b16 %v4019, %v4012
    %v4734 = vpack.c.b16 %v4027, %v4020
    %v4735 = vpack.c.b16 %v4028, %v4021
    %v4736 = vpack.c.b16 %v4029, %v4022
    %v4737 = vpack.c.b16 %v4030, %v4023
    %v4738 = vpack.c.b16 %v4031, %v4024
    %v4739 = vpack.c.b16 %v4032, %v4025
    %v4740 = vpack.c.b16 %v4033, %v4026
    %v4741 = vpack.c.b16 %v4041, %v4034
    %v4742 = vpack.c.b16 %v4042, %v4035
    %v4743 = vpack.c.b16 %v4043, %v4036
    %v4744 = vpack.c.b16 %v4044, %v4037
    %v4745 = vpack.c.b16 %v4045, %v4038
    %v4746 = vpack.c.b16 %v4046, %v4039
    %v4747 = vpack.c.b16 %v4047, %v4040
    %v4748 = vpack.c.b16 %v4055, %v4048
    %v4749 = vpack.c.b16 %v4056, %v4049
    %v4750 = vpack.c.b16 %v4057, %v4050
    %v4751 = vpack.c.b16 %v4058, %v4051
    %v4752 = vpack.c.b16 %v4059, %v4052
    %v4753 = vpack.c.b16 %v4060, %v4053
    %v4754 = vpack.c.b16 %v4061, %v4054
    %v4755 = vpack.c.b16 %v4069, %v4062
    %v4756 = vpack.c.b16 %v4070, %v4063
    %v4757 = vpack.c.b16 %v4071, %v4064
    %v4758 = vpack.c.b16 %v4072, %v4065
    %v4759 = vpack.c.b16 %v4073, %v4066
    %v4760 = vpack.c.b16 %v4074, %v4067
    %v4761 = vpack.c.b16 %v4075, %v4068
    %v4762 = vpack.c.b16 %v4083, %v4076
    %v4763 = vpack.c.b16 %v4084, %v4077
    %v4764 = vpack.c.b16 %v4085, %v4078
    %v4765 = vpack.c.b16 %v4086, %v4079
    %v4766 = vpack.c.b16 %v4087, %v4080
    %v4767 = vpack.c.b16 %v4088, %v4081
    %v4768 = vpack.c.b16 %v4089, %v4082
    %v4769 = vpack.c.b16 %v4097, %v4090
    %v4770 = vpack.c.b16 %v4098, %v4091
    %v4771 = vpack.c.b16 %v4099, %v4092
    %v4772 = vpack.c.b16 %v4100, %v4093
    %v4773 = vpack.c.b16 %v4101, %v4094
    %v4774 = vpack.c.b16 %v4102, %v4095
    %v4775 = vpack.c.b16 %v4103, %v4096
    %v4776 = vpack.c.b16 %v4111, %v4104
    %v4777 = vpack.c.b16 %v4112, %v4105
    %v4778 = vpack.c.b16 %v4113, %v4106
    %v4779 = vpack.c.b16 %v4114, %v4107
    %v4780 = vpack.c.b16 %v4115, %v4108
    %v4781 = vpack.c.b16 %v4116, %v4109
    %v4782 = vpack.c.b16 %v4117, %v4110
    %v4783 = vpack.c.b16 %v4125, %v4118
    %v4784 = vpack.c.b16 %v4126, %v4119
    %v4785 = vpack.c.b16 %v4127, %v4120
    %v4786 = vpack.c.b16 %v4128, %v4121
    %v4787 = vpack.c.b16 %v4129, %v4122
    %v4788 = vpack.c.b16 %v4130, %v4123
    %v4789 = vpack.c.b16 %v4131, %v4124
    %v4790 = vpack.c.b16 %v4139, %v4132
    %v4791 = vpack.c.b16 %v4140, %v4133
    %v4792 = vpack.c.b16 %v4141, %v4134
    %v4793 = vpack.c.b16 %v4142, %v4135
    %v4794 = vpack.c.b16 %v4143, %v4136
    %v4795 = vpack.c.b16 %v4144, %v4137
    %v4796 = vpack.c.b16 %v4145, %v4138
    %v4797 = vpack.c.b16 %v4153, %v4146
    %v4798 = vpack.c.b16 %v4154, %v4147
    %v4799 = vpack.c.b16 %v4155, %v4148
    %v4800 = vpack.c.b16 %v4156, %v4149
    %v4801 = vpack.c.b16 %v4157, %v4150
    %v4802 = vpack.c.b16 %v4158, %v4151
    %v4803 = vpack.c.b16 %v4159, %v4152
    %v4804 = vpack.c.b16 %v4167, %v4160
    %v4805 = vpack.c.b16 %v4168, %v4161
    %v4806 = vpack.c.b16 %v4169, %v4162
    %v4807 = vpack.c.b16 %v4170, %v4163
    %v4808 = vpack.c.b16 %v4171, %v4164
    %v4809 = vpack.c.b16 %v4172, %v4165
    %v4810 = vpack.c.b16 %v4173, %v4166
    %v4811 = vpack.c.b16 %v4181, %v4174
    %v4812 = vpack.c.b16 %v4182, %v4175
    %v4813 = vpack.c.b16 %v4183, %v4176
    %v4814 = vpack.c.b16 %v4184, %v4177
    %v4815 = vpack.c.b16 %v4185, %v4178
    %v4816 = vpack.c.b16 %v4186, %v4179
    %v4817 = vpack.c.b16 %v4187, %v4180
    %v4818 = vpack.c.b16 %v4195, %v4188
    %v4819 = vpack.c.b16 %v4196, %v4189
    %v4820 = vpack.c.b16 %v4197, %v4190
    %v4821 = vpack.c.b16 %v4198, %v4191
    %v4822 = vpack.c.b16 %v4199, %v4192
    %v4823 = vpack.c.b16 %v4200, %v4193
    %v4824 = vpack.c.b16 %v4201, %v4194
    %v4825 = vpack.c.b16 %v4209, %v4202
    %v4826 = vpack.c.b16 %v4210, %v4203
    %v4827 = vpack.c.b16 %v4211, %v4204
    %v4828 = vpack.c.b16 %v4212, %v4205
    %v4829 = vpack.c.b16 %v4213, %v4206
    %v4830 = vpack.c.b16 %v4214, %v4207
    %v4831 = vpack.c.b16 %v4215, %v4208
    %v4832 = vpack.c.b16 %v4223, %v4216
    %v4833 = vpack.c.b16 %v4224, %v4217
    %v4834 = vpack.c.b16 %v4225, %v4218
    %v4835 = vpack.c.b16 %v4226, %v4219
    %v4836 = vpack.c.b16 %v4227, %v4220
    %v4837 = vpack.c.b16 %v4228, %v4221
    %v4838 = vpack.c.b16 %v4229, %v4222
    %v4839 = vpack.c.b16 %v4237, %v4230
    %v4840 = vpack.c.b16 %v4238, %v4231
    %v4841 = vpack.c.b16 %v4239, %v4232
    %v4842 = vpack.c.b16 %v4240, %v4233
    %v4843 = vpack.c.b16 %v4241, %v4234
    %v4844 = vpack.c.b16 %v4242, %v4235
    %v4845 = vpack.c.b16 %v4243, %v4236
    %v4846 = vpack.c.b16 %v4251, %v4244
    %v4847 = vpack.c.b16 %v4252, %v4245
    %v4848 = vpack.c.b16 %v4253, %v4246
    %v4849 = vpack.c.b16 %v4254, %v4247
    %v4850 = vpack.c.b16 %v4255, %v4248
    %v4851 = vpack.c.b16 %v4256, %v4249
    %v4852 = vpack.c.b16 %v4257, %v4250
    %v4853 = vpack.c.b16 %v4265, %v4258
    %v4854 = vpack.c.b16 %v4266, %v4259
    %v4855 = vpack.c.b16 %v4267, %v4260
    %v4856 = vpack.c.b16 %v4268, %v4261
    %v4857 = vpack.c.b16 %v4269, %v4262
    %v4858 = vpack.c.b16 %v4270, %v4263
    %v4859 = vpack.c.b16 %v4271, %v4264
    %v4860 = vpack.c.b16 %v4279, %v4272
    %v4861 = vpack.c.b16 %v4280, %v4273
    %v4862 = vpack.c.b16 %v4281, %v4274
    %v4863 = vpack.c.b16 %v4282, %v4275
    %v4864 = vpack.c.b16 %v4283, %v4276
    %v4865 = vpack.c.b16 %v4284, %v4277
    %v4866 = vpack.c.b16 %v4285, %v4278
    %v4867 = vpack.c.b16 %v4293, %v4286
    %v4868 = vpack.c.b16 %v4294, %v4287
    %v4869 = vpack.c.b16 %v4295, %v4288
    %v4870 = vpack.c.b16 %v4296, %v4289
    %v4871 = vpack.c.b16 %v4297, %v4290
    %v4872 = vpack.c.b16 %v4298, %v4291
    %v4873 = vpack.c.b16 %v4299, %v4292
    %v4874 = vpack.c.b16 %v4307, %v4300
    %v4875 = vpack.c.b16 %v4308, %v4301
    %v4876 = vpack.c.b16 %v4309, %v4302
    %v4877 = vpack.c.b16 %v4310, %v4303
    %v4878 = vpack.c.b16 %v4311, %v4304
    %v4879 = vpack.c.b16 %v4312, %v4305
    %v4880 = vpack.c.b16 %v4313, %v4306
    %v4881 = vpack.c.b16 %v4321, %v4314
    %v4882 = vpack.c.b16 %v4322, %v4315
    %v4883 = vpack.c.b16 %v4323, %v4316
    %v4884 = vpack.c.b16 %v4324, %v4317
    %v4885 = vpack.c.b16 %v4325, %v4318
    %v4886 = vpack.c.b16 %v4326, %v4319
    %v4887 = vpack.c.b16 %v4327, %v4320
    %v4888 = vpack.c.b16 %v4335, %v4328
    %v4889 = vpack.c.b16 %v4336, %v4329
    %v4890 = vpack.c.b16 %v4337, %v4330
    %v4891 = vpack.c.b16 %v4338, %v4331
    %v4892 = vpack.c.b16 %v4339, %v4332
    %v4893 = vpack.c.b16 %v4340, %v4333
    %v4894 = vpack.c.b16 %v4341, %v4334
    %v4895 = vpack.c.b16 %v4349, %v4342
    %v4896 = vpack.c.b16 %v4350, %v4343
    %v4897 = vpack.c.b16 %v4351, %v4344
    %v4898 = vpack.c.b16 %v4352, %v4345
    %v4899 = vpack.c.b16 %v4353, %v4346
    %v4900 = vpack.c.b16 %v4354, %v4347
    %v4901 = vpack.c.b16 %v4355, %v4348
    %v4902 = vpack.c.b16 %v4363, %v4356
    %v4903 = vpack.c.b16 %v4364, %v4357
    %v4904 = vpack.c.b16 %v4365, %v4358
    %v4905 = vpack.c.b16 %v4366, %v4359
    %v4906 = vpack.c.b16 %v4367, %v4360
    %v4907 = vpack.c.b16 %v4368, %v4361
    %v4908 = vpack.c.b16 %v4369, %v4362
    %v4909 = vpack.c.b16 %v4377, %v4370
    %v4910 = vpack.c.b16 %v4378, %v4371
    %v4911 = vpack.c.b16 %v4379, %v4372
    %v4912 = vpack.c.b16 %v4380, %v4373
    %v4913 = vpack.c.b16 %v4381, %v4374
    %v4914 = vpack.c.b16 %v4382, %v4375
    %v4915 = vpack.c.b16 %v4383, %v4376
    %v4916 = vpack.c.b16 %v4391, %v4384
    %v4917 = vpack.c.b16 %v4392, %v4385
    %v4918 = vpack.c.b16 %v4393, %v4386
    %v4919 = vpack.c.b16 %v4394, %v4387
    %v4920 = vpack.c.b16 %v4395, %v4388
    %v4921 = vpack.c.b16 %v4396, %v4389
    %v4922 = vpack.c.b16 %v4397, %v4390
    %v4923 = vpack.c.b16 %v4405, %v4398
    %v4924 = vpack.c.b16 %v4406, %v4399
    %v4925 = vpack.c.b16 %v4407, %v4400
    %v4926 = vpack.c.b16 %v4408, %v4401
    %v4927 = vpack.c.b16 %v4409, %v4402
    %v4928 = vpack.c.b16 %v4410, %v4403
    %v4929 = vpack.c.b16 %v4411, %v4404
    %v4930 = vpack.c.b16 %v4419, %v4412
    %v4931 = vpack.c.b16 %v4420, %v4413
    %v4932 = vpack.c.b16 %v4421, %v4414
    %v4933 = vpack.c.b16 %v4422, %v4415
    %v4934 = vpack.c.b16 %v4423, %v4416
    %v4935 = vpack.c.b16 %v4424, %v4417
    %v4936 = vpack.c.b16 %v4425, %v4418
    %v4937 = vpack.c.b16 %v4433, %v4426
    %v4938 = vpack.c.b16 %v4434, %v4427
    %v4939 = vpack.c.b16 %v4435, %v4428
    %v4940 = vpack.c.b16 %v4436, %v4429
    %v4941 = vpack.c.b16 %v4437, %v4430
    %v4942 = vpack.c.b16 %v4438, %v4431
    %v4943 = vpack.c.b16 %v4439, %v4432
    %v4944 = vpack.c.b16 %v4447, %v4440
    %v4945 = vpack.c.b16 %v4448, %v4441
    %v4946 = vpack.c.b16 %v4449, %v4442
    %v4947 = vpack.c.b16 %v4450, %v4443
    %v4948 = vpack.c.b16 %v4451, %v4444
    %v4949 = vpack.c.b16 %v4452, %v4445
    %v4950 = vpack.c.b16 %v4453, %v4446
    %v4951 = vpack.c.b16 %v4461, %v4454
    %v4952 = vpack.c.b16 %v4462, %v4455
    %v4953 = vpack.c.b16 %v4463, %v4456
    %v4954 = vpack.c.b16 %v4464, %v4457
    %v4955 = vpack.c.b16 %v4465, %v4458
    %v4956 = vpack.c.b16 %v4466, %v4459
    %v4957 = vpack.c.b16 %v4467, %v4460
    %v4958 = vpack.c.b16 %v4475, %v4468
    %v4959 = vpack.c.b16 %v4476, %v4469
    %v4960 = vpack.c.b16 %v4477, %v4470
    %v4961 = vpack.c.b16 %v4478, %v4471
    %v4962 = vpack.c.b16 %v4479, %v4472
    %v4963 = vpack.c.b16 %v4480, %v4473
    %v4964 = vpack.c.b16 %v4481, %v4474
    %v4965 = vpack.c.b16 %v4489, %v4482
    %v4966 = vpack.c.b16 %v4490, %v4483
    %v4967 = vpack.c.b16 %v4491, %v4484
    %v4968 = vpack.c.b16 %v4492, %v4485
    %v4969 = vpack.c.b16 %v4493, %v4486
    %v4970 = vpack.c.b16 %v4494, %v4487
    %v4971 = vpack.c.b16 %v4495, %v4488
    %v4972 = vpack.c.b16 %v4503, %v4496
    %v4973 = vpack.c.b16 %v4504, %v4497
    %v4974 = vpack.c.b16 %v4505, %v4498
    %v4975 = vpack.c.b16 %v4506, %v4499
    %v4976 = vpack.c.b16 %v4507, %v4500
    %v4977 = vpack.c.b16 %v4508, %v4501
    %v4978 = vpack.c.b16 %v4509, %v4502
    %v4979 = vpack.c.b16 %v4517, %v4510
    %v4980 = vpack.c.b16 %v4518, %v4511
    %v4981 = vpack.c.b16 %v4519, %v4512
    %v4982 = vpack.c.b16 %v4520, %v4513
    %v4983 = vpack.c.b16 %v4521, %v4514
    %v4984 = vpack.c.b16 %v4522, %v4515
    %v4985 = vpack.c.b16 %v4523, %v4516
    %v4986 = vpack.c.b16 %v4531, %v4524
    %v4987 = vpack.c.b16 %v4532, %v4525
    %v4988 = vpack.c.b16 %v4533, %v4526
    %v4989 = vpack.c.b16 %v4534, %v4527
    %v4990 = vpack.c.b16 %v4535, %v4528
    %v4991 = vpack.c.b16 %v4536, %v4529
    %v4992 = vpack.c.b16 %v4537, %v4530
    %v4993 = vpack.c.b16 %v4545, %v4538
    %v4994 = vpack.c.b16 %v4546, %v4539
    %v4995 = vpack.c.b16 %v4547, %v4540
    %v4996 = vpack.c.b16 %v4548, %v4541
    %v4997 = vpack.c.b16 %v4549, %v4542
    %v4998 = vpack.c.b16 %v4550, %v4543
    %v4999 = vpack.c.b16 %v4551, %v4544
    %v5000 = vpack.c.b16 %v4559, %v4552
    %v5001 = vpack.c.b16 %v4560, %v4553
    %v5002 = vpack.c.b16 %v4561, %v4554
    %v5003 = vpack.c.b16 %v4562, %v4555
    %v5004 = vpack.c.b16 %v4563, %v4556
    %v5005 = vpack.c.b16 %v4564, %v4557
    %v5006 = vpack.c.b16 %v4565, %v4558
    %v5007 = vpack.c.b16 %v4573, %v4566
    %v5008 = vpack.c.b16 %v4574, %v4567
    %v5009 = vpack.c.b16 %v4575, %v4568
    %v5010 = vpack.c.b16 %v4576, %v4569
    %v5011 = vpack.c.b16 %v4577, %v4570
    %v5012 = vpack.c.b16 %v4578, %v4571
    %v5013 = vpack.c.b16 %v4579, %v4572
    %v5014 = vpack.c.b16 %v4587, %v4580
    %v5015 = vpack.c.b16 %v4588, %v4581
    %v5016 = vpack.c.b16 %v4589, %v4582
    %v5017 = vpack.c.b16 %v4590, %v4583
    %v5018 = vpack.c.b16 %v4591, %v4584
    %v5019 = vpack.c.b16 %v4592, %v4585
    %v5020 = vpack.c.b16 %v4593, %v4586
    %v5021 = vpack.c.b16 %v4601, %v4594
    %v5022 = vpack.c.b16 %v4602, %v4595
    %v5023 = vpack.c.b16 %v4603, %v4596
    %v5024 = vpack.c.b16 %v4604, %v4597
    %v5025 = vpack.c.b16 %v4605, %v4598
    %v5026 = vpack.c.b16 %v4606, %v4599
    %v5027 = vpack.c.b16 %v4607, %v4600
    %v5028 = vpack.c.b16 %v4615, %v4608
    %v5029 = vpack.c.b16 %v4616, %v4609
    %v5030 = vpack.c.b16 %v4617, %v4610
    %v5031 = vpack.c.b16 %v4618, %v4611
    %v5032 = vpack.c.b16 %v4619, %v4612
    %v5033 = vpack.c.b16 %v4620, %v4613
    %v5034 = vpack.c.b16 %v4621, %v4614
    %v5035 = vpack.c.b16 %v4629, %v4622
    %v5036 = vpack.c.b16 %v4630, %v4623
    %v5037 = vpack.c.b16 %v4631, %v4624
    %v5038 = vpack.c.b16 %v4632, %v4625
    %v5039 = vpack.c.b16 %v4633, %v4626
    %v5040 = vpack.c.b16 %v4634, %v4627
    %v5041 = vpack.c.b16 %v4635, %v4628
    %v5042 = vpack.c.b16 %v4643, %v4636
    %v5043 = vpack.c.b16 %v4644, %v4637
    %v5044 = vpack.c.b16 %v4645, %v4638
    %v5045 = vpack.c.b16 %v4646, %v4639
    %v5046 = vpack.c.b16 %v4647, %v4640
    %v5047 = vpack.c.b16 %v4648, %v4641
    %v5048 = vpack.c.b16 %v4649, %v4642
    %v5049 = vpack.c.b16 %v4657, %v4650
    %v5050 = vpack.c.b16 %v4658, %v4651
    %v5051 = vpack.c.b16 %v4659, %v4652
    %v5052 = vpack.c.b16 %v4660, %v4653
    %v5053 = vpack.c.b16 %v4661, %v4654
    %v5054 = vpack.c.b16 %v4662, %v4655
    %v5055 = vpack.c.b16 %v4663, %v4656
    %5448 = vmatpush.bf16.msra.mxu0 %v4713
    %5449 = vmatpush.bf16.msra.mxu0 %v4706
    %5450 = vmatpush.bf16.msra.mxu0 %v4699
    %5451 = vmatpush.bf16.msra.mxu0 %v4692
    %5452 = vmatpush.bf16.msra.mxu0 %v4685
    %5453 = vmatpush.bf16.msra.mxu0 %v4678
    %5454 = vmatpush.bf16.msra.mxu0 %v4671
    %5455 = vmatpush.bf16.msra.mxu0 %v4664
    %5456 = vmatmul.bf16.gmra.mxu0 %v2962
    %v5457 = vpop.f32.mrf.mxu0
    %v5458 = vadd.f32 %v3418, %v5457
    %v5459 = vpop.f32.mrf.mxu0
    %5460 = vdwg.mxu0
    %5461 = vmatpush.bf16.msra.mxu0 %v4769
    %5462 = vmatpush.bf16.msra.mxu0 %v4762
    %5463 = vmatpush.bf16.msra.mxu0 %v4755
    %5464 = vmatpush.bf16.msra.mxu0 %v4748
    %5465 = vmatpush.bf16.msra.mxu0 %v4741
    %5466 = vmatpush.bf16.msra.mxu0 %v4734
    %5467 = vmatpush.bf16.msra.mxu0 %v4727
    %5468 = vmatpush.bf16.msra.mxu0 %v4720
    %5469 = vmatmul.bf16.gmra.mxu0 %v2963
    %v5470 = vpop.f32.mrf.mxu0
    %v5471 = vadd.f32 %v5458, %v5470
    %v5472 = vpop.f32.mrf.mxu0
    %5473 = vdwg.mxu0
    %5474 = vmatpush.bf16.msra.mxu0 %v4825
    %5475 = vmatpush.bf16.msra.mxu0 %v4818
    %5476 = vmatpush.bf16.msra.mxu0 %v4811
    %5477 = vmatpush.bf16.msra.mxu0 %v4804
    %5478 = vmatpush.bf16.msra.mxu0 %v4797
    %5479 = vmatpush.bf16.msra.mxu0 %v4790
    %5480 = vmatpush.bf16.msra.mxu0 %v4783
    %5481 = vmatpush.bf16.msra.mxu0 %v4776
    %5482 = vmatmul.bf16.gmra.mxu0 %v2964
    %v5483 = vpop.f32.mrf.mxu0
    %v5484 = vadd.f32 %v5471, %v5483
    %v5485 = vpop.f32.mrf.mxu0
    %5486 = vdwg.mxu0
    %5487 = vmatpush.bf16.msra.mxu0 %v4881
    %5488 = vmatpush.bf16.msra.mxu0 %v4874
    %5489 = vmatpush.bf16.msra.mxu0 %v4867
    %5490 = vmatpush.bf16.msra.mxu0 %v4860
    %5491 = vmatpush.bf16.msra.mxu0 %v4853
    %5492 = vmatpush.bf16.msra.mxu0 %v4846
    %5493 = vmatpush.bf16.msra.mxu0 %v4839
    %5494 = vmatpush.bf16.msra.mxu0 %v4832
    %5495 = vmatmul.bf16.gmra.mxu0 %v2965
    %v5496 = vpop.f32.mrf.mxu0
    %v5497 = vadd.f32 %v5484, %v5496
    %v5498 = vpop.f32.mrf.mxu0
    %5499 = vdwg.mxu0
    %5500 = vmatpush.bf16.msra.mxu0 %v4937
    %5501 = vmatpush.bf16.msra.mxu0 %v4930
    %5502 = vmatpush.bf16.msra.mxu0 %v4923
    %5503 = vmatpush.bf16.msra.mxu0 %v4916
    %5504 = vmatpush.bf16.msra.mxu0 %v4909
    %5505 = vmatpush.bf16.msra.mxu0 %v4902
    %5506 = vmatpush.bf16.msra.mxu0 %v4895
    %5507 = vmatpush.bf16.msra.mxu0 %v4888
    %5508 = vmatmul.bf16.gmra.mxu0 %v2966
    %v5509 = vpop.f32.mrf.mxu0
    %v5510 = vadd.f32 %v5497, %v5509
    %v5511 = vpop.f32.mrf.mxu0
    %5512 = vdwg.mxu0
    %5513 = vmatpush.bf16.msra.mxu0 %v4993
    %5514 = vmatpush.bf16.msra.mxu0 %v4986
    %5515 = vmatpush.bf16.msra.mxu0 %v4979
    %5516 = vmatpush.bf16.msra.mxu0 %v4972
    %5517 = vmatpush.bf16.msra.mxu0 %v4965
    %5518 = vmatpush.bf16.msra.mxu0 %v4958
    %5519 = vmatpush.bf16.msra.mxu0 %v4951
    %5520 = vmatpush.bf16.msra.mxu0 %v4944
    %5521 = vmatmul.bf16.gmra.mxu0 %v2967
    %v5522 = vpop.f32.mrf.mxu0
    %v5523 = vadd.f32 %v5510, %v5522
    %v5524 = vpop.f32.mrf.mxu0
    %5525 = vdwg.mxu0
    %5526 = vmatpush.bf16.msra.mxu0 %v5049
    %5527 = vmatpush.bf16.msra.mxu0 %v5042
    %5528 = vmatpush.bf16.msra.mxu0 %v5035
    %5529 = vmatpush.bf16.msra.mxu0 %v5028
    %5530 = vmatpush.bf16.msra.mxu0 %v5021
    %5531 = vmatpush.bf16.msra.mxu0 %v5014
    %5532 = vmatpush.bf16.msra.mxu0 %v5007
    %5533 = vmatpush.bf16.msra.mxu0 %v5000
    %5534 = vmatmul.bf16.gmra.mxu0 %v2968
    %v5535 = vpop.f32.mrf.mxu0
    %v5536 = vadd.f32 %v5523, %v5535
    %v5537 = vpop.f32.mrf.mxu0
    %5538 = vdwg.mxu0
    %5539 = vmatpush.bf16.msra.mxu0 %v4714
    %5540 = vmatpush.bf16.msra.mxu0 %v4707
    %5541 = vmatpush.bf16.msra.mxu0 %v4700
    %5542 = vmatpush.bf16.msra.mxu0 %v4693
    %5543 = vmatpush.bf16.msra.mxu0 %v4686
    %5544 = vmatpush.bf16.msra.mxu0 %v4679
    %5545 = vmatpush.bf16.msra.mxu0 %v4672
    %5546 = vmatpush.bf16.msra.mxu0 %v4665
    %5547 = vmatmul.bf16.gmra.mxu0 %v2962
    %v5548 = vpop.f32.mrf.mxu0
    %v5549 = vadd.f32 %v3419, %v5548
    %v5550 = vpop.f32.mrf.mxu0
    %5551 = vdwg.mxu0
    %5552 = vmatpush.bf16.msra.mxu0 %v4770
    %5553 = vmatpush.bf16.msra.mxu0 %v4763
    %5554 = vmatpush.bf16.msra.mxu0 %v4756
    %5555 = vmatpush.bf16.msra.mxu0 %v4749
    %5556 = vmatpush.bf16.msra.mxu0 %v4742
    %5557 = vmatpush.bf16.msra.mxu0 %v4735
    %5558 = vmatpush.bf16.msra.mxu0 %v4728
    %5559 = vmatpush.bf16.msra.mxu0 %v4721
    %5560 = vmatmul.bf16.gmra.mxu0 %v2963
    %v5561 = vpop.f32.mrf.mxu0
    %v5562 = vadd.f32 %v5549, %v5561
    %v5563 = vpop.f32.mrf.mxu0
    %5564 = vdwg.mxu0
    %5565 = vmatpush.bf16.msra.mxu0 %v4826
    %5566 = vmatpush.bf16.msra.mxu0 %v4819
    %5567 = vmatpush.bf16.msra.mxu0 %v4812
    %5568 = vmatpush.bf16.msra.mxu0 %v4805
    %5569 = vmatpush.bf16.msra.mxu0 %v4798
    %5570 = vmatpush.bf16.msra.mxu0 %v4791
    %5571 = vmatpush.bf16.msra.mxu0 %v4784
    %5572 = vmatpush.bf16.msra.mxu0 %v4777
    %5573 = vmatmul.bf16.gmra.mxu0 %v2964
    %v5574 = vpop.f32.mrf.mxu0
    %v5575 = vadd.f32 %v5562, %v5574
    %v5576 = vpop.f32.mrf.mxu0
    %5577 = vdwg.mxu0
    %5578 = vmatpush.bf16.msra.mxu0 %v4882
    %5579 = vmatpush.bf16.msra.mxu0 %v4875
    %5580 = vmatpush.bf16.msra.mxu0 %v4868
    %5581 = vmatpush.bf16.msra.mxu0 %v4861
    %5582 = vmatpush.bf16.msra.mxu0 %v4854
    %5583 = vmatpush.bf16.msra.mxu0 %v4847
    %5584 = vmatpush.bf16.msra.mxu0 %v4840
    %5585 = vmatpush.bf16.msra.mxu0 %v4833
    %5586 = vmatmul.bf16.gmra.mxu0 %v2965
    %v5587 = vpop.f32.mrf.mxu0
    %v5588 = vadd.f32 %v5575, %v5587
    %v5589 = vpop.f32.mrf.mxu0
    %5590 = vdwg.mxu0
    %5591 = vmatpush.bf16.msra.mxu0 %v4938
    %5592 = vmatpush.bf16.msra.mxu0 %v4931
    %5593 = vmatpush.bf16.msra.mxu0 %v4924
    %5594 = vmatpush.bf16.msra.mxu0 %v4917
    %5595 = vmatpush.bf16.msra.mxu0 %v4910
    %5596 = vmatpush.bf16.msra.mxu0 %v4903
    %5597 = vmatpush.bf16.msra.mxu0 %v4896
    %5598 = vmatpush.bf16.msra.mxu0 %v4889
    %5599 = vmatmul.bf16.gmra.mxu0 %v2966
    %v5600 = vpop.f32.mrf.mxu0
    %v5601 = vadd.f32 %v5588, %v5600
    %v5602 = vpop.f32.mrf.mxu0
    %5603 = vdwg.mxu0
    %5604 = vmatpush.bf16.msra.mxu0 %v4994
    %5605 = vmatpush.bf16.msra.mxu0 %v4987
    %5606 = vmatpush.bf16.msra.mxu0 %v4980
    %5607 = vmatpush.bf16.msra.mxu0 %v4973
    %5608 = vmatpush.bf16.msra.mxu0 %v4966
    %5609 = vmatpush.bf16.msra.mxu0 %v4959
    %5610 = vmatpush.bf16.msra.mxu0 %v4952
    %5611 = vmatpush.bf16.msra.mxu0 %v4945
    %5612 = vmatmul.bf16.gmra.mxu0 %v2967
    %v5613 = vpop.f32.mrf.mxu0
    %v5614 = vadd.f32 %v5601, %v5613
    %v5615 = vpop.f32.mrf.mxu0
    %5616 = vdwg.mxu0
    %5617 = vmatpush.bf16.msra.mxu0 %v5050
    %5618 = vmatpush.bf16.msra.mxu0 %v5043
    %5619 = vmatpush.bf16.msra.mxu0 %v5036
    %5620 = vmatpush.bf16.msra.mxu0 %v5029
    %5621 = vmatpush.bf16.msra.mxu0 %v5022
    %5622 = vmatpush.bf16.msra.mxu0 %v5015
    %5623 = vmatpush.bf16.msra.mxu0 %v5008
    %5624 = vmatpush.bf16.msra.mxu0 %v5001
    %5625 = vmatmul.bf16.gmra.mxu0 %v2968
    %v5626 = vpop.f32.mrf.mxu0
    %v5627 = vadd.f32 %v5614, %v5626
    %v5628 = vpop.f32.mrf.mxu0
    %5629 = vdwg.mxu0
    %5630 = vmatpush.bf16.msra.mxu0 %v4715
    %5631 = vmatpush.bf16.msra.mxu0 %v4708
    %5632 = vmatpush.bf16.msra.mxu0 %v4701
    %5633 = vmatpush.bf16.msra.mxu0 %v4694
    %5634 = vmatpush.bf16.msra.mxu0 %v4687
    %5635 = vmatpush.bf16.msra.mxu0 %v4680
    %5636 = vmatpush.bf16.msra.mxu0 %v4673
    %5637 = vmatpush.bf16.msra.mxu0 %v4666
    %5638 = vmatmul.bf16.gmra.mxu0 %v2962
    %v5639 = vpop.f32.mrf.mxu0
    %v5640 = vadd.f32 %v3420, %v5639
    %v5641 = vpop.f32.mrf.mxu0
    %5642 = vdwg.mxu0
    %5643 = vmatpush.bf16.msra.mxu0 %v4771
    %5644 = vmatpush.bf16.msra.mxu0 %v4764
    %5645 = vmatpush.bf16.msra.mxu0 %v4757
    %5646 = vmatpush.bf16.msra.mxu0 %v4750
    %5647 = vmatpush.bf16.msra.mxu0 %v4743
    %5648 = vmatpush.bf16.msra.mxu0 %v4736
    %5649 = vmatpush.bf16.msra.mxu0 %v4729
    %5650 = vmatpush.bf16.msra.mxu0 %v4722
    %5651 = vmatmul.bf16.gmra.mxu0 %v2963
    %v5652 = vpop.f32.mrf.mxu0
    %v5653 = vadd.f32 %v5640, %v5652
    %v5654 = vpop.f32.mrf.mxu0
    %5655 = vdwg.mxu0
    %5656 = vmatpush.bf16.msra.mxu0 %v4827
    %5657 = vmatpush.bf16.msra.mxu0 %v4820
    %5658 = vmatpush.bf16.msra.mxu0 %v4813
    %5659 = vmatpush.bf16.msra.mxu0 %v4806
    %5660 = vmatpush.bf16.msra.mxu0 %v4799
    %5661 = vmatpush.bf16.msra.mxu0 %v4792
    %5662 = vmatpush.bf16.msra.mxu0 %v4785
    %5663 = vmatpush.bf16.msra.mxu0 %v4778
    %5664 = vmatmul.bf16.gmra.mxu0 %v2964
    %v5665 = vpop.f32.mrf.mxu0
    %v5666 = vadd.f32 %v5653, %v5665
    %v5667 = vpop.f32.mrf.mxu0
    %5668 = vdwg.mxu0
    %5669 = vmatpush.bf16.msra.mxu0 %v4883
    %5670 = vmatpush.bf16.msra.mxu0 %v4876
    %5671 = vmatpush.bf16.msra.mxu0 %v4869
    %5672 = vmatpush.bf16.msra.mxu0 %v4862
    %5673 = vmatpush.bf16.msra.mxu0 %v4855
    %5674 = vmatpush.bf16.msra.mxu0 %v4848
    %5675 = vmatpush.bf16.msra.mxu0 %v4841
    %5676 = vmatpush.bf16.msra.mxu0 %v4834
    %5677 = vmatmul.bf16.gmra.mxu0 %v2965
    %v5678 = vpop.f32.mrf.mxu0
    %v5679 = vadd.f32 %v5666, %v5678
    %v5680 = vpop.f32.mrf.mxu0
    %5681 = vdwg.mxu0
    %5682 = vmatpush.bf16.msra.mxu0 %v4939
    %5683 = vmatpush.bf16.msra.mxu0 %v4932
    %5684 = vmatpush.bf16.msra.mxu0 %v4925
    %5685 = vmatpush.bf16.msra.mxu0 %v4918
    %5686 = vmatpush.bf16.msra.mxu0 %v4911
    %5687 = vmatpush.bf16.msra.mxu0 %v4904
    %5688 = vmatpush.bf16.msra.mxu0 %v4897
    %5689 = vmatpush.bf16.msra.mxu0 %v4890
    %5690 = vmatmul.bf16.gmra.mxu0 %v2966
    %v5691 = vpop.f32.mrf.mxu0
    %v5692 = vadd.f32 %v5679, %v5691
    %v5693 = vpop.f32.mrf.mxu0
    %5694 = vdwg.mxu0
    %5695 = vmatpush.bf16.msra.mxu0 %v4995
    %5696 = vmatpush.bf16.msra.mxu0 %v4988
    %5697 = vmatpush.bf16.msra.mxu0 %v4981
    %5698 = vmatpush.bf16.msra.mxu0 %v4974
    %5699 = vmatpush.bf16.msra.mxu0 %v4967
    %5700 = vmatpush.bf16.msra.mxu0 %v4960
    %5701 = vmatpush.bf16.msra.mxu0 %v4953
    %5702 = vmatpush.bf16.msra.mxu0 %v4946
    %5703 = vmatmul.bf16.gmra.mxu0 %v2967
    %v5704 = vpop.f32.mrf.mxu0
    %v5705 = vadd.f32 %v5692, %v5704
    %v5706 = vpop.f32.mrf.mxu0
    %5707 = vdwg.mxu0
    %5708 = vmatpush.bf16.msra.mxu0 %v5051
    %5709 = vmatpush.bf16.msra.mxu0 %v5044
    %5710 = vmatpush.bf16.msra.mxu0 %v5037
    %5711 = vmatpush.bf16.msra.mxu0 %v5030
    %5712 = vmatpush.bf16.msra.mxu0 %v5023
    %5713 = vmatpush.bf16.msra.mxu0 %v5016
    %5714 = vmatpush.bf16.msra.mxu0 %v5009
    %5715 = vmatpush.bf16.msra.mxu0 %v5002
    %5716 = vmatmul.bf16.gmra.mxu0 %v2968
    %v5717 = vpop.f32.mrf.mxu0
    %v5718 = vadd.f32 %v5705, %v5717
    %v5719 = vpop.f32.mrf.mxu0
    %5720 = vdwg.mxu0
    %5721 = vmatpush.bf16.msra.mxu0 %v4716
    %5722 = vmatpush.bf16.msra.mxu0 %v4709
    %5723 = vmatpush.bf16.msra.mxu0 %v4702
    %5724 = vmatpush.bf16.msra.mxu0 %v4695
    %5725 = vmatpush.bf16.msra.mxu0 %v4688
    %5726 = vmatpush.bf16.msra.mxu0 %v4681
    %5727 = vmatpush.bf16.msra.mxu0 %v4674
    %5728 = vmatpush.bf16.msra.mxu0 %v4667
    %5729 = vmatmul.bf16.gmra.mxu0 %v2962
    %v5730 = vpop.f32.mrf.mxu0
    %v5731 = vadd.f32 %v3421, %v5730
    %v5732 = vpop.f32.mrf.mxu0
    %5733 = vdwg.mxu0
    %5734 = vmatpush.bf16.msra.mxu0 %v4772
    %5735 = vmatpush.bf16.msra.mxu0 %v4765
    %5736 = vmatpush.bf16.msra.mxu0 %v4758
    %5737 = vmatpush.bf16.msra.mxu0 %v4751
    %5738 = vmatpush.bf16.msra.mxu0 %v4744
    %5739 = vmatpush.bf16.msra.mxu0 %v4737
    %5740 = vmatpush.bf16.msra.mxu0 %v4730
    %5741 = vmatpush.bf16.msra.mxu0 %v4723
    %5742 = vmatmul.bf16.gmra.mxu0 %v2963
    %v5743 = vpop.f32.mrf.mxu0
    %v5744 = vadd.f32 %v5731, %v5743
    %v5745 = vpop.f32.mrf.mxu0
    %5746 = vdwg.mxu0
    %5747 = vmatpush.bf16.msra.mxu0 %v4828
    %5748 = vmatpush.bf16.msra.mxu0 %v4821
    %5749 = vmatpush.bf16.msra.mxu0 %v4814
    %5750 = vmatpush.bf16.msra.mxu0 %v4807
    %5751 = vmatpush.bf16.msra.mxu0 %v4800
    %5752 = vmatpush.bf16.msra.mxu0 %v4793
    %5753 = vmatpush.bf16.msra.mxu0 %v4786
    %5754 = vmatpush.bf16.msra.mxu0 %v4779
    %5755 = vmatmul.bf16.gmra.mxu0 %v2964
    %v5756 = vpop.f32.mrf.mxu0
    %v5757 = vadd.f32 %v5744, %v5756
    %v5758 = vpop.f32.mrf.mxu0
    %5759 = vdwg.mxu0
    %5760 = vmatpush.bf16.msra.mxu0 %v4884
    %5761 = vmatpush.bf16.msra.mxu0 %v4877
    %5762 = vmatpush.bf16.msra.mxu0 %v4870
    %5763 = vmatpush.bf16.msra.mxu0 %v4863
    %5764 = vmatpush.bf16.msra.mxu0 %v4856
    %5765 = vmatpush.bf16.msra.mxu0 %v4849
    %5766 = vmatpush.bf16.msra.mxu0 %v4842
    %5767 = vmatpush.bf16.msra.mxu0 %v4835
    %5768 = vmatmul.bf16.gmra.mxu0 %v2965
    %v5769 = vpop.f32.mrf.mxu0
    %v5770 = vadd.f32 %v5757, %v5769
    %v5771 = vpop.f32.mrf.mxu0
    %5772 = vdwg.mxu0
    %5773 = vmatpush.bf16.msra.mxu0 %v4940
    %5774 = vmatpush.bf16.msra.mxu0 %v4933
    %5775 = vmatpush.bf16.msra.mxu0 %v4926
    %5776 = vmatpush.bf16.msra.mxu0 %v4919
    %5777 = vmatpush.bf16.msra.mxu0 %v4912
    %5778 = vmatpush.bf16.msra.mxu0 %v4905
    %5779 = vmatpush.bf16.msra.mxu0 %v4898
    %5780 = vmatpush.bf16.msra.mxu0 %v4891
    %5781 = vmatmul.bf16.gmra.mxu0 %v2966
    %v5782 = vpop.f32.mrf.mxu0
    %v5783 = vadd.f32 %v5770, %v5782
    %v5784 = vpop.f32.mrf.mxu0
    %5785 = vdwg.mxu0
    %5786 = vmatpush.bf16.msra.mxu0 %v4996
    %5787 = vmatpush.bf16.msra.mxu0 %v4989
    %5788 = vmatpush.bf16.msra.mxu0 %v4982
    %5789 = vmatpush.bf16.msra.mxu0 %v4975
    %5790 = vmatpush.bf16.msra.mxu0 %v4968
    %5791 = vmatpush.bf16.msra.mxu0 %v4961
    %5792 = vmatpush.bf16.msra.mxu0 %v4954
    %5793 = vmatpush.bf16.msra.mxu0 %v4947
    %5794 = vmatmul.bf16.gmra.mxu0 %v2967
    %v5795 = vpop.f32.mrf.mxu0
    %v5796 = vadd.f32 %v5783, %v5795
    %v5797 = vpop.f32.mrf.mxu0
    %5798 = vdwg.mxu0
    %5799 = vmatpush.bf16.msra.mxu0 %v5052
    %5800 = vmatpush.bf16.msra.mxu0 %v5045
    %5801 = vmatpush.bf16.msra.mxu0 %v5038
    %5802 = vmatpush.bf16.msra.mxu0 %v5031
    %5803 = vmatpush.bf16.msra.mxu0 %v5024
    %5804 = vmatpush.bf16.msra.mxu0 %v5017
    %5805 = vmatpush.bf16.msra.mxu0 %v5010
    %5806 = vmatpush.bf16.msra.mxu0 %v5003
    %5807 = vmatmul.bf16.gmra.mxu0 %v2968
    %v5808 = vpop.f32.mrf.mxu0
    %v5809 = vadd.f32 %v5796, %v5808
    %v5810 = vpop.f32.mrf.mxu0
    %5811 = vdwg.mxu0
    %5812 = vmatpush.bf16.msra.mxu0 %v4717
    %5813 = vmatpush.bf16.msra.mxu0 %v4710
    %5814 = vmatpush.bf16.msra.mxu0 %v4703
    %5815 = vmatpush.bf16.msra.mxu0 %v4696
    %5816 = vmatpush.bf16.msra.mxu0 %v4689
    %5817 = vmatpush.bf16.msra.mxu0 %v4682
    %5818 = vmatpush.bf16.msra.mxu0 %v4675
    %5819 = vmatpush.bf16.msra.mxu0 %v4668
    %5820 = vmatmul.bf16.gmra.mxu0 %v2962
    %v5821 = vpop.f32.mrf.mxu0
    %v5822 = vadd.f32 %v3422, %v5821
    %v5823 = vpop.f32.mrf.mxu0
    %5824 = vdwg.mxu0
    %5825 = vmatpush.bf16.msra.mxu0 %v4773
    %5826 = vmatpush.bf16.msra.mxu0 %v4766
    %5827 = vmatpush.bf16.msra.mxu0 %v4759
    %5828 = vmatpush.bf16.msra.mxu0 %v4752
    %5829 = vmatpush.bf16.msra.mxu0 %v4745
    %5830 = vmatpush.bf16.msra.mxu0 %v4738
    %5831 = vmatpush.bf16.msra.mxu0 %v4731
    %5832 = vmatpush.bf16.msra.mxu0 %v4724
    %5833 = vmatmul.bf16.gmra.mxu0 %v2963
    %v5834 = vpop.f32.mrf.mxu0
    %v5835 = vadd.f32 %v5822, %v5834
    %v5836 = vpop.f32.mrf.mxu0
    %5837 = vdwg.mxu0
    %5838 = vmatpush.bf16.msra.mxu0 %v4829
    %5839 = vmatpush.bf16.msra.mxu0 %v4822
    %5840 = vmatpush.bf16.msra.mxu0 %v4815
    %5841 = vmatpush.bf16.msra.mxu0 %v4808
    %5842 = vmatpush.bf16.msra.mxu0 %v4801
    %5843 = vmatpush.bf16.msra.mxu0 %v4794
    %5844 = vmatpush.bf16.msra.mxu0 %v4787
    %5845 = vmatpush.bf16.msra.mxu0 %v4780
    %5846 = vmatmul.bf16.gmra.mxu0 %v2964
    %v5847 = vpop.f32.mrf.mxu0
    %v5848 = vadd.f32 %v5835, %v5847
    %v5849 = vpop.f32.mrf.mxu0
    %5850 = vdwg.mxu0
    %5851 = vmatpush.bf16.msra.mxu0 %v4885
    %5852 = vmatpush.bf16.msra.mxu0 %v4878
    %5853 = vmatpush.bf16.msra.mxu0 %v4871
    %5854 = vmatpush.bf16.msra.mxu0 %v4864
    %5855 = vmatpush.bf16.msra.mxu0 %v4857
    %5856 = vmatpush.bf16.msra.mxu0 %v4850
    %5857 = vmatpush.bf16.msra.mxu0 %v4843
    %5858 = vmatpush.bf16.msra.mxu0 %v4836
    %5859 = vmatmul.bf16.gmra.mxu0 %v2965
    %v5860 = vpop.f32.mrf.mxu0
    %v5861 = vadd.f32 %v5848, %v5860
    %v5862 = vpop.f32.mrf.mxu0
    %5863 = vdwg.mxu0
    %5864 = vmatpush.bf16.msra.mxu0 %v4941
    %5865 = vmatpush.bf16.msra.mxu0 %v4934
    %5866 = vmatpush.bf16.msra.mxu0 %v4927
    %5867 = vmatpush.bf16.msra.mxu0 %v4920
    %5868 = vmatpush.bf16.msra.mxu0 %v4913
    %5869 = vmatpush.bf16.msra.mxu0 %v4906
    %5870 = vmatpush.bf16.msra.mxu0 %v4899
    %5871 = vmatpush.bf16.msra.mxu0 %v4892
    %5872 = vmatmul.bf16.gmra.mxu0 %v2966
    %v5873 = vpop.f32.mrf.mxu0
    %v5874 = vadd.f32 %v5861, %v5873
    %v5875 = vpop.f32.mrf.mxu0
    %5876 = vdwg.mxu0
    %5877 = vmatpush.bf16.msra.mxu0 %v4997
    %5878 = vmatpush.bf16.msra.mxu0 %v4990
    %5879 = vmatpush.bf16.msra.mxu0 %v4983
    %5880 = vmatpush.bf16.msra.mxu0 %v4976
    %5881 = vmatpush.bf16.msra.mxu0 %v4969
    %5882 = vmatpush.bf16.msra.mxu0 %v4962
    %5883 = vmatpush.bf16.msra.mxu0 %v4955
    %5884 = vmatpush.bf16.msra.mxu0 %v4948
    %5885 = vmatmul.bf16.gmra.mxu0 %v2967
    %v5886 = vpop.f32.mrf.mxu0
    %v5887 = vadd.f32 %v5874, %v5886
    %v5888 = vpop.f32.mrf.mxu0
    %5889 = vdwg.mxu0
    %5890 = vmatpush.bf16.msra.mxu0 %v5053
    %5891 = vmatpush.bf16.msra.mxu0 %v5046
    %5892 = vmatpush.bf16.msra.mxu0 %v5039
    %5893 = vmatpush.bf16.msra.mxu0 %v5032
    %5894 = vmatpush.bf16.msra.mxu0 %v5025
    %5895 = vmatpush.bf16.msra.mxu0 %v5018
    %5896 = vmatpush.bf16.msra.mxu0 %v5011
    %5897 = vmatpush.bf16.msra.mxu0 %v5004
    %5898 = vmatmul.bf16.gmra.mxu0 %v2968
    %v5899 = vpop.f32.mrf.mxu0
    %v5900 = vadd.f32 %v5887, %v5899
    %v5901 = vpop.f32.mrf.mxu0
    %5902 = vdwg.mxu0
    %5903 = vmatpush.bf16.msra.mxu0 %v4718
    %5904 = vmatpush.bf16.msra.mxu0 %v4711
    %5905 = vmatpush.bf16.msra.mxu0 %v4704
    %5906 = vmatpush.bf16.msra.mxu0 %v4697
    %5907 = vmatpush.bf16.msra.mxu0 %v4690
    %5908 = vmatpush.bf16.msra.mxu0 %v4683
    %5909 = vmatpush.bf16.msra.mxu0 %v4676
    %5910 = vmatpush.bf16.msra.mxu0 %v4669
    %5911 = vmatmul.bf16.gmra.mxu0 %v2962
    %v5912 = vpop.f32.mrf.mxu0
    %v5913 = vadd.f32 %v3423, %v5912
    %v5914 = vpop.f32.mrf.mxu0
    %5915 = vdwg.mxu0
    %5916 = vmatpush.bf16.msra.mxu0 %v4774
    %5917 = vmatpush.bf16.msra.mxu0 %v4767
    %5918 = vmatpush.bf16.msra.mxu0 %v4760
    %5919 = vmatpush.bf16.msra.mxu0 %v4753
    %5920 = vmatpush.bf16.msra.mxu0 %v4746
    %5921 = vmatpush.bf16.msra.mxu0 %v4739
    %5922 = vmatpush.bf16.msra.mxu0 %v4732
    %5923 = vmatpush.bf16.msra.mxu0 %v4725
    %5924 = vmatmul.bf16.gmra.mxu0 %v2963
    %v5925 = vpop.f32.mrf.mxu0
    %v5926 = vadd.f32 %v5913, %v5925
    %v5927 = vpop.f32.mrf.mxu0
    %5928 = vdwg.mxu0
    %5929 = vmatpush.bf16.msra.mxu0 %v4830
    %5930 = vmatpush.bf16.msra.mxu0 %v4823
    %5931 = vmatpush.bf16.msra.mxu0 %v4816
    %5932 = vmatpush.bf16.msra.mxu0 %v4809
    %5933 = vmatpush.bf16.msra.mxu0 %v4802
    %5934 = vmatpush.bf16.msra.mxu0 %v4795
    %5935 = vmatpush.bf16.msra.mxu0 %v4788
    %5936 = vmatpush.bf16.msra.mxu0 %v4781
    %5937 = vmatmul.bf16.gmra.mxu0 %v2964
    %v5938 = vpop.f32.mrf.mxu0
    %v5939 = vadd.f32 %v5926, %v5938
    %v5940 = vpop.f32.mrf.mxu0
    %5941 = vdwg.mxu0
    %5942 = vmatpush.bf16.msra.mxu0 %v4886
    %5943 = vmatpush.bf16.msra.mxu0 %v4879
    %5944 = vmatpush.bf16.msra.mxu0 %v4872
    %5945 = vmatpush.bf16.msra.mxu0 %v4865
    %5946 = vmatpush.bf16.msra.mxu0 %v4858
    %5947 = vmatpush.bf16.msra.mxu0 %v4851
    %5948 = vmatpush.bf16.msra.mxu0 %v4844
    %5949 = vmatpush.bf16.msra.mxu0 %v4837
    %5950 = vmatmul.bf16.gmra.mxu0 %v2965
    %v5951 = vpop.f32.mrf.mxu0
    %v5952 = vadd.f32 %v5939, %v5951
    %v5953 = vpop.f32.mrf.mxu0
    %5954 = vdwg.mxu0
    %5955 = vmatpush.bf16.msra.mxu0 %v4942
    %5956 = vmatpush.bf16.msra.mxu0 %v4935
    %5957 = vmatpush.bf16.msra.mxu0 %v4928
    %5958 = vmatpush.bf16.msra.mxu0 %v4921
    %5959 = vmatpush.bf16.msra.mxu0 %v4914
    %5960 = vmatpush.bf16.msra.mxu0 %v4907
    %5961 = vmatpush.bf16.msra.mxu0 %v4900
    %5962 = vmatpush.bf16.msra.mxu0 %v4893
    %5963 = vmatmul.bf16.gmra.mxu0 %v2966
    %v5964 = vpop.f32.mrf.mxu0
    %v5965 = vadd.f32 %v5952, %v5964
    %v5966 = vpop.f32.mrf.mxu0
    %5967 = vdwg.mxu0
    %5968 = vmatpush.bf16.msra.mxu0 %v4998
    %5969 = vmatpush.bf16.msra.mxu0 %v4991
    %5970 = vmatpush.bf16.msra.mxu0 %v4984
    %5971 = vmatpush.bf16.msra.mxu0 %v4977
    %5972 = vmatpush.bf16.msra.mxu0 %v4970
    %5973 = vmatpush.bf16.msra.mxu0 %v4963
    %5974 = vmatpush.bf16.msra.mxu0 %v4956
    %5975 = vmatpush.bf16.msra.mxu0 %v4949
    %5976 = vmatmul.bf16.gmra.mxu0 %v2967
    %v5977 = vpop.f32.mrf.mxu0
    %v5978 = vadd.f32 %v5965, %v5977
    %v5979 = vpop.f32.mrf.mxu0
    %5980 = vdwg.mxu0
    %5981 = vmatpush.bf16.msra.mxu0 %v5054
    %5982 = vmatpush.bf16.msra.mxu0 %v5047
    %5983 = vmatpush.bf16.msra.mxu0 %v5040
    %5984 = vmatpush.bf16.msra.mxu0 %v5033
    %5985 = vmatpush.bf16.msra.mxu0 %v5026
    %5986 = vmatpush.bf16.msra.mxu0 %v5019
    %5987 = vmatpush.bf16.msra.mxu0 %v5012
    %5988 = vmatpush.bf16.msra.mxu0 %v5005
    %5989 = vmatmul.bf16.gmra.mxu0 %v2968
    %v5990 = vpop.f32.mrf.mxu0
    %v5991 = vadd.f32 %v5978, %v5990
    %v5992 = vpop.f32.mrf.mxu0
    %5993 = vdwg.mxu0
    %5994 = vmatpush.bf16.msra.mxu0 %v4719
    %5995 = vmatpush.bf16.msra.mxu0 %v4712
    %5996 = vmatpush.bf16.msra.mxu0 %v4705
    %5997 = vmatpush.bf16.msra.mxu0 %v4698
    %5998 = vmatpush.bf16.msra.mxu0 %v4691
    %5999 = vmatpush.bf16.msra.mxu0 %v4684
    %6000 = vmatpush.bf16.msra.mxu0 %v4677
    %6001 = vmatpush.bf16.msra.mxu0 %v4670
    %6002 = vmatmul.bf16.gmra.mxu0 %v2962
    %v6003 = vpop.f32.mrf.mxu0
    %v6004 = vadd.f32 %v3424, %v6003
    %v6005 = vpop.f32.mrf.mxu0
    %6006 = vdwg.mxu0
    %6007 = vmatpush.bf16.msra.mxu0 %v4775
    %6008 = vmatpush.bf16.msra.mxu0 %v4768
    %6009 = vmatpush.bf16.msra.mxu0 %v4761
    %6010 = vmatpush.bf16.msra.mxu0 %v4754
    %6011 = vmatpush.bf16.msra.mxu0 %v4747
    %6012 = vmatpush.bf16.msra.mxu0 %v4740
    %6013 = vmatpush.bf16.msra.mxu0 %v4733
    %6014 = vmatpush.bf16.msra.mxu0 %v4726
    %6015 = vmatmul.bf16.gmra.mxu0 %v2963
    %v6016 = vpop.f32.mrf.mxu0
    %v6017 = vadd.f32 %v6004, %v6016
    %v6018 = vpop.f32.mrf.mxu0
    %6019 = vdwg.mxu0
    %6020 = vmatpush.bf16.msra.mxu0 %v4831
    %6021 = vmatpush.bf16.msra.mxu0 %v4824
    %6022 = vmatpush.bf16.msra.mxu0 %v4817
    %6023 = vmatpush.bf16.msra.mxu0 %v4810
    %6024 = vmatpush.bf16.msra.mxu0 %v4803
    %6025 = vmatpush.bf16.msra.mxu0 %v4796
    %6026 = vmatpush.bf16.msra.mxu0 %v4789
    %6027 = vmatpush.bf16.msra.mxu0 %v4782
    %6028 = vmatmul.bf16.gmra.mxu0 %v2964
    %v6029 = vpop.f32.mrf.mxu0
    %v6030 = vadd.f32 %v6017, %v6029
    %v6031 = vpop.f32.mrf.mxu0
    %6032 = vdwg.mxu0
    %6033 = vmatpush.bf16.msra.mxu0 %v4887
    %6034 = vmatpush.bf16.msra.mxu0 %v4880
    %6035 = vmatpush.bf16.msra.mxu0 %v4873
    %6036 = vmatpush.bf16.msra.mxu0 %v4866
    %6037 = vmatpush.bf16.msra.mxu0 %v4859
    %6038 = vmatpush.bf16.msra.mxu0 %v4852
    %6039 = vmatpush.bf16.msra.mxu0 %v4845
    %6040 = vmatpush.bf16.msra.mxu0 %v4838
    %6041 = vmatmul.bf16.gmra.mxu0 %v2965
    %v6042 = vpop.f32.mrf.mxu0
    %v6043 = vadd.f32 %v6030, %v6042
    %v6044 = vpop.f32.mrf.mxu0
    %6045 = vdwg.mxu0
    %6046 = vmatpush.bf16.msra.mxu0 %v4943
    %6047 = vmatpush.bf16.msra.mxu0 %v4936
    %6048 = vmatpush.bf16.msra.mxu0 %v4929
    %6049 = vmatpush.bf16.msra.mxu0 %v4922
    %6050 = vmatpush.bf16.msra.mxu0 %v4915
    %6051 = vmatpush.bf16.msra.mxu0 %v4908
    %6052 = vmatpush.bf16.msra.mxu0 %v4901
    %6053 = vmatpush.bf16.msra.mxu0 %v4894
    %6054 = vmatmul.bf16.gmra.mxu0 %v2966
    %v6055 = vpop.f32.mrf.mxu0
    %v6056 = vadd.f32 %v6043, %v6055
    %v6057 = vpop.f32.mrf.mxu0
    %6058 = vdwg.mxu0
    %6059 = vmatpush.bf16.msra.mxu0 %v4999
    %6060 = vmatpush.bf16.msra.mxu0 %v4992
    %6061 = vmatpush.bf16.msra.mxu0 %v4985
    %6062 = vmatpush.bf16.msra.mxu0 %v4978
    %6063 = vmatpush.bf16.msra.mxu0 %v4971
    %6064 = vmatpush.bf16.msra.mxu0 %v4964
    %6065 = vmatpush.bf16.msra.mxu0 %v4957
    %6066 = vmatpush.bf16.msra.mxu0 %v4950
    %6067 = vmatmul.bf16.gmra.mxu0 %v2967
    %v6068 = vpop.f32.mrf.mxu0
    %v6069 = vadd.f32 %v6056, %v6068
    %v6070 = vpop.f32.mrf.mxu0
    %6071 = vdwg.mxu0
    %6072 = vmatpush.bf16.msra.mxu0 %v5055
    %6073 = vmatpush.bf16.msra.mxu0 %v5048
    %6074 = vmatpush.bf16.msra.mxu0 %v5041
    %6075 = vmatpush.bf16.msra.mxu0 %v5034
    %6076 = vmatpush.bf16.msra.mxu0 %v5027
    %6077 = vmatpush.bf16.msra.mxu0 %v5020
    %6078 = vmatpush.bf16.msra.mxu0 %v5013
    %6079 = vmatpush.bf16.msra.mxu0 %v5006
    %6080 = vmatmul.bf16.gmra.mxu0 %v2968
    %v6081 = vpop.f32.mrf.mxu0
    %v6082 = vadd.f32 %v6069, %v6081
    %v6083 = vpop.f32.mrf.mxu0
    %6084 = vdwg.mxu0
    %v6085 = vpack.c.bf16 %v5627, %v5536
    %v6086 = vpack.c.bf16 %v5809, %v5718
    %v6087 = vpack.c.bf16 %v5991, %v5900
    %v6088 = vpack.c.bf16 %v6082, %v6082
    %v6089 = vunpack.c.l.bf16 %v6085
    %v6090 = vunpack.c.h.bf16 %v6085
    %v6091 = vunpack.c.l.bf16 %v6086
    %v6092 = vunpack.c.h.bf16 %v6086
    %v6093 = vunpack.c.l.bf16 %v6087
    %v6094 = vunpack.c.h.bf16 %v6087
    %v6095 = vunpack.c.l.bf16 %v6088
    %v6096 = vmax.f32 %v6089, 0.0
    %v6097 = vmax.f32 %v6090, 0.0
    %v6098 = vmax.f32 %v6091, 0.0
    %v6099 = vmax.f32 %v6092, 0.0
    %v6100 = vmax.f32 %v6093, 0.0
    %v6101 = vmax.f32 %v6094, 0.0
    %v6102 = vmax.f32 %v6095, 0.0
    %v6103 = vpack.c.bf16 %v6096, %v6096
    %v6104 = vpack.c.bf16 %v6097, %v6097
    %v6105 = vpack.c.bf16 %v6098, %v6098
    %v6106 = vpack.c.bf16 %v6099, %v6099
    %v6107 = vpack.c.bf16 %v6100, %v6100
    %v6108 = vpack.c.bf16 %v6101, %v6101
    %v6109 = vpack.c.bf16 %v6102, %v6102
    %v6110 = vld [vmem:[#allocation7] sm:$0xff]
    %v6111 = vld [vmem:[#allocation7 + $0x8] sm:$0xff]
    %v6112 = vld [vmem:[#allocation7 + $0x10] sm:$0xff]
    %v6113 = vld [vmem:[#allocation7 + $0x18] sm:$0xff]
    %v6114 = vld [vmem:[#allocation7 + $0x20] sm:$0xff]
    %v6115 = vld [vmem:[#allocation7 + $0x28] sm:$0xff]
    %v6116 = vld [vmem:[#allocation7 + $0x30] sm:$0xff]
    %v6117 = vld [vmem:[#allocation7 + $0x38] sm:$0xff]
    %v6118 = vld [vmem:[#allocation7 + $0x40] sm:$0xff]
    %v6119 = vld [vmem:[#allocation7 + $0x48] sm:$0xff]
    %v6120 = vld [vmem:[#allocation7 + $0x50] sm:$0xff]
    %v6121 = vld [vmem:[#allocation7 + $0x58] sm:$0xff]
    %v6122 = vld [vmem:[#allocation7 + $0x60] sm:$0xff]
    %v6123 = vld [vmem:[#allocation7 + $0x68] sm:$0xff]
    %v6124 = vld [vmem:[#allocation7 + $0x70] sm:$0xff]
    %v6125 = vld [vmem:[#allocation7 + $0x78] sm:$0xff]
    %v6126 = vld [vmem:[#allocation7 + $0x80] sm:$0xff]
    %v6127 = vld [vmem:[#allocation7 + $0x88] sm:$0xff]
    %v6128 = vld [vmem:[#allocation7 + $0x90] sm:$0xff]
    %v6129 = vld [vmem:[#allocation7 + $0x98] sm:$0xff]
    %v6130 = vld [vmem:[#allocation7 + $0xa0] sm:$0xff]
    %v6131 = vld [vmem:[#allocation7 + $0xa8] sm:$0xff]
    %v6132 = vld [vmem:[#allocation7 + $0xb0] sm:$0xff]
    %v6133 = vld [vmem:[#allocation7 + $0xb8] sm:$0xff]
    %v6134 = vld [vmem:[#allocation7 + $0xc0] sm:$0xff]
    %v6135 = vld [vmem:[#allocation7 + $0xc8] sm:$0xff]
    %v6136 = vld [vmem:[#allocation7 + $0xd0] sm:$0xff]
    %v6137 = vld [vmem:[#allocation7 + $0xd8] sm:$0xff]
    %v6138 = vld [vmem:[#allocation7 + $0xe0] sm:$0xff]
    %v6139 = vld [vmem:[#allocation7 + $0xe8] sm:$0xff]
    %v6140 = vld [vmem:[#allocation7 + $0xf0] sm:$0xff]
    %v6141 = vld [vmem:[#allocation7 + $0xf8] sm:$0xff]
    %v6142 = vld [vmem:[#allocation7 + $0x100] sm:$0xff]
    %v6143 = vld [vmem:[#allocation7 + $0x108] sm:$0xff]
    %v6144 = vld [vmem:[#allocation7 + $0x110] sm:$0xff]
    %v6145 = vld [vmem:[#allocation7 + $0x118] sm:$0xff]
    %v6146 = vld [vmem:[#allocation7 + $0x120] sm:$0xff]
    %v6147 = vld [vmem:[#allocation7 + $0x128] sm:$0xff]
    %v6148 = vld [vmem:[#allocation7 + $0x130] sm:$0xff]
    %v6149 = vld [vmem:[#allocation7 + $0x138] sm:$0xff]
    %v6150 = vld [vmem:[#allocation7 + $0x140] sm:$0xff]
    %v6151 = vld [vmem:[#allocation7 + $0x148] sm:$0xff]
    %v6152 = vld [vmem:[#allocation7 + $0x150] sm:$0xff]
    %v6153 = vld [vmem:[#allocation7 + $0x158] sm:$0xff]
    %v6154 = vld [vmem:[#allocation7 + $0x160] sm:$0xff]
    %v6155 = vld [vmem:[#allocation7 + $0x168] sm:$0xff]
    %v6156 = vld [vmem:[#allocation7 + $0x170] sm:$0xff]
    %v6157 = vld [vmem:[#allocation7 + $0x178] sm:$0xff]
    %v6158 = vld [vmem:[#allocation7 + $0x180] sm:$0xff]
    %v6159 = vld [vmem:[#allocation7 + $0x188] sm:$0xff]
    %v6160 = vld [vmem:[#allocation7 + $0x190] sm:$0xff]
    %v6161 = vld [vmem:[#allocation7 + $0x198] sm:$0xff]
    %v6162 = vld [vmem:[#allocation7 + $0x1a0] sm:$0xff]
    %v6163 = vld [vmem:[#allocation7 + $0x1a8] sm:$0xff]
    %v6164 = vld [vmem:[#allocation7 + $0x1b0] sm:$0xff]
    %v6165 = vld [vmem:[#allocation7 + $0x1b8] sm:$0xff]
    %v6166 = vld [vmem:[#allocation7 + $0x1c0] sm:$0xff]
    %v6167 = vld [vmem:[#allocation7 + $0x1c8] sm:$0xff]
    %v6168 = vld [vmem:[#allocation7 + $0x1d0] sm:$0xff]
    %v6169 = vld [vmem:[#allocation7 + $0x1d8] sm:$0xff]
    %v6170 = vld [vmem:[#allocation7 + $0x1e0] sm:$0xff]
    %v6171 = vld [vmem:[#allocation7 + $0x1e8] sm:$0xff]
    %v6172 = vld [vmem:[#allocation7 + $0x1f0] sm:$0xff]
    %v6173 = vld [vmem:[#allocation7 + $0x1f8] sm:$0xff]
    %v6174 = vld [vmem:[#allocation7 + $0x200] sm:$0xff]
    %v6175 = vld [vmem:[#allocation7 + $0x208] sm:$0xff]
    %v6176 = vld [vmem:[#allocation7 + $0x210] sm:$0xff]
    %v6177 = vld [vmem:[#allocation7 + $0x218] sm:$0xff]
    %v6178 = vld [vmem:[#allocation7 + $0x220] sm:$0xff]
    %v6179 = vld [vmem:[#allocation7 + $0x228] sm:$0xff]
    %v6180 = vld [vmem:[#allocation7 + $0x230] sm:$0xff]
    %v6181 = vld [vmem:[#allocation7 + $0x238] sm:$0xff]
    %v6182 = vld [vmem:[#allocation7 + $0x240] sm:$0xff]
    %v6183 = vld [vmem:[#allocation7 + $0x248] sm:$0xff]
    %v6184 = vld [vmem:[#allocation7 + $0x250] sm:$0xff]
    %v6185 = vld [vmem:[#allocation7 + $0x258] sm:$0xff]
    %v6186 = vld [vmem:[#allocation7 + $0x260] sm:$0xff]
    %v6187 = vld [vmem:[#allocation7 + $0x268] sm:$0xff]
    %v6188 = vld [vmem:[#allocation7 + $0x270] sm:$0xff]
    %v6189 = vld [vmem:[#allocation7 + $0x278] sm:$0xff]
    %v6190 = vld [vmem:[#allocation7 + $0x280] sm:$0xff]
    %v6191 = vld [vmem:[#allocation7 + $0x288] sm:$0xff]
    %v6192 = vld [vmem:[#allocation7 + $0x290] sm:$0xff]
    %v6193 = vld [vmem:[#allocation7 + $0x298] sm:$0xff]
    %v6194 = vld [vmem:[#allocation7 + $0x2a0] sm:$0xff]
    %v6195 = vld [vmem:[#allocation7 + $0x2a8] sm:$0xff]
    %v6196 = vld [vmem:[#allocation7 + $0x2b0] sm:$0xff]
    %v6197 = vld [vmem:[#allocation7 + $0x2b8] sm:$0xff]
    %v6198 = vld [vmem:[#allocation7 + $0x2c0] sm:$0xff]
    %v6199 = vld [vmem:[#allocation7 + $0x2c8] sm:$0xff]
    %v6200 = vld [vmem:[#allocation7 + $0x2d0] sm:$0xff]
    %v6201 = vld [vmem:[#allocation7 + $0x2d8] sm:$0xff]
    %v6202 = vld [vmem:[#allocation7 + $0x2e0] sm:$0xff]
    %v6203 = vld [vmem:[#allocation7 + $0x2e8] sm:$0xff]
    %v6204 = vld [vmem:[#allocation7 + $0x2f0] sm:$0xff]
    %v6205 = vld [vmem:[#allocation7 + $0x2f8] sm:$0xff]
    %v6206 = vld [vmem:[#allocation7 + $0x300] sm:$0xff]
    %v6207 = vld [vmem:[#allocation7 + $0x308] sm:$0xff]
    %v6208 = vld [vmem:[#allocation7 + $0x310] sm:$0xff]
    %v6209 = vld [vmem:[#allocation7 + $0x318] sm:$0xff]
    %v6210 = vld [vmem:[#allocation7 + $0x320] sm:$0xff]
    %v6211 = vld [vmem:[#allocation7 + $0x328] sm:$0xff]
    %v6212 = vld [vmem:[#allocation7 + $0x330] sm:$0xff]
    %v6213 = vld [vmem:[#allocation7 + $0x338] sm:$0xff]
    %v6214 = vld [vmem:[#allocation7 + $0x340] sm:$0xff]
    %v6215 = vld [vmem:[#allocation7 + $0x348] sm:$0xff]
    %v6216 = vld [vmem:[#allocation7 + $0x350] sm:$0xff]
    %v6217 = vld [vmem:[#allocation7 + $0x358] sm:$0xff]
    %v6218 = vld [vmem:[#allocation7 + $0x360] sm:$0xff]
    %v6219 = vld [vmem:[#allocation7 + $0x368] sm:$0xff]
    %v6220 = vld [vmem:[#allocation7 + $0x370] sm:$0xff]
    %v6221 = vld [vmem:[#allocation7 + $0x378] sm:$0xff]
    %v6223 = vperm.slane %v130, 0
    %v6224 = vperm.slane %v130, 1
    %v6339 = vunpack.c.l.b16 %v6110
    %v6340 = vunpack.c.h.b16 %v6110
    %v6341 = vunpack.c.l.b16 %v6111
    %v6342 = vunpack.c.h.b16 %v6111
    %v6343 = vunpack.c.l.b16 %v6112
    %v6344 = vunpack.c.h.b16 %v6112
    %v6345 = vunpack.c.l.b16 %v6113
    %v6346 = vunpack.c.h.b16 %v6113
    %v6347 = vunpack.c.l.b16 %v6114
    %v6348 = vunpack.c.h.b16 %v6114
    %v6349 = vunpack.c.l.b16 %v6115
    %v6350 = vunpack.c.h.b16 %v6115
    %v6351 = vunpack.c.l.b16 %v6116
    %v6352 = vunpack.c.h.b16 %v6116
    %v6353 = vunpack.c.l.b16 %v6117
    %v6354 = vunpack.c.h.b16 %v6117
    %v6355 = vunpack.c.l.b16 %v6118
    %v6356 = vunpack.c.h.b16 %v6118
    %v6357 = vunpack.c.l.b16 %v6119
    %v6358 = vunpack.c.h.b16 %v6119
    %v6359 = vunpack.c.l.b16 %v6120
    %v6360 = vunpack.c.h.b16 %v6120
    %v6361 = vunpack.c.l.b16 %v6121
    %v6362 = vunpack.c.h.b16 %v6121
    %v6363 = vunpack.c.l.b16 %v6122
    %v6364 = vunpack.c.h.b16 %v6122
    %v6365 = vunpack.c.l.b16 %v6123
    %v6366 = vunpack.c.h.b16 %v6123
    %v6367 = vunpack.c.l.b16 %v6124
    %v6368 = vunpack.c.h.b16 %v6124
    %v6369 = vunpack.c.l.b16 %v6125
    %v6370 = vunpack.c.h.b16 %v6125
    %v6371 = vunpack.c.l.b16 %v6126
    %v6372 = vunpack.c.h.b16 %v6126
    %v6373 = vunpack.c.l.b16 %v6127
    %v6374 = vunpack.c.h.b16 %v6127
    %v6375 = vunpack.c.l.b16 %v6128
    %v6376 = vunpack.c.h.b16 %v6128
    %v6377 = vunpack.c.l.b16 %v6129
    %v6378 = vunpack.c.h.b16 %v6129
    %v6379 = vunpack.c.l.b16 %v6130
    %v6380 = vunpack.c.h.b16 %v6130
    %v6381 = vunpack.c.l.b16 %v6131
    %v6382 = vunpack.c.h.b16 %v6131
    %v6383 = vunpack.c.l.b16 %v6132
    %v6384 = vunpack.c.h.b16 %v6132
    %v6385 = vunpack.c.l.b16 %v6133
    %v6386 = vunpack.c.h.b16 %v6133
    %v6387 = vunpack.c.l.b16 %v6134
    %v6388 = vunpack.c.h.b16 %v6134
    %v6389 = vunpack.c.l.b16 %v6135
    %v6390 = vunpack.c.h.b16 %v6135
    %v6391 = vunpack.c.l.b16 %v6136
    %v6392 = vunpack.c.h.b16 %v6136
    %v6393 = vunpack.c.l.b16 %v6137
    %v6394 = vunpack.c.h.b16 %v6137
    %v6395 = vunpack.c.l.b16 %v6138
    %v6396 = vunpack.c.h.b16 %v6138
    %v6397 = vunpack.c.l.b16 %v6139
    %v6398 = vunpack.c.h.b16 %v6139
    %v6399 = vunpack.c.l.b16 %v6140
    %v6400 = vunpack.c.h.b16 %v6140
    %v6401 = vunpack.c.l.b16 %v6141
    %v6402 = vunpack.c.h.b16 %v6141
    %v6403 = vunpack.c.l.b16 %v6142
    %v6404 = vunpack.c.h.b16 %v6142
    %v6405 = vunpack.c.l.b16 %v6143
    %v6406 = vunpack.c.h.b16 %v6143
    %v6407 = vunpack.c.l.b16 %v6144
    %v6408 = vunpack.c.h.b16 %v6144
    %v6409 = vunpack.c.l.b16 %v6145
    %v6410 = vunpack.c.h.b16 %v6145
    %v6411 = vunpack.c.l.b16 %v6146
    %v6412 = vunpack.c.h.b16 %v6146
    %v6413 = vunpack.c.l.b16 %v6147
    %v6414 = vunpack.c.h.b16 %v6147
    %v6415 = vunpack.c.l.b16 %v6148
    %v6416 = vunpack.c.h.b16 %v6148
    %v6417 = vunpack.c.l.b16 %v6149
    %v6418 = vunpack.c.h.b16 %v6149
    %v6419 = vunpack.c.l.b16 %v6150
    %v6420 = vunpack.c.h.b16 %v6150
    %v6421 = vunpack.c.l.b16 %v6151
    %v6422 = vunpack.c.h.b16 %v6151
    %v6423 = vunpack.c.l.b16 %v6152
    %v6424 = vunpack.c.h.b16 %v6152
    %v6425 = vunpack.c.l.b16 %v6153
    %v6426 = vunpack.c.h.b16 %v6153
    %v6427 = vunpack.c.l.b16 %v6154
    %v6428 = vunpack.c.h.b16 %v6154
    %v6429 = vunpack.c.l.b16 %v6155
    %v6430 = vunpack.c.h.b16 %v6155
    %v6431 = vunpack.c.l.b16 %v6156
    %v6432 = vunpack.c.h.b16 %v6156
    %v6433 = vunpack.c.l.b16 %v6157
    %v6434 = vunpack.c.h.b16 %v6157
    %v6435 = vunpack.c.l.b16 %v6158
    %v6436 = vunpack.c.h.b16 %v6158
    %v6437 = vunpack.c.l.b16 %v6159
    %v6438 = vunpack.c.h.b16 %v6159
    %v6439 = vunpack.c.l.b16 %v6160
    %v6440 = vunpack.c.h.b16 %v6160
    %v6441 = vunpack.c.l.b16 %v6161
    %v6442 = vunpack.c.h.b16 %v6161
    %v6443 = vunpack.c.l.b16 %v6162
    %v6444 = vunpack.c.h.b16 %v6162
    %v6445 = vunpack.c.l.b16 %v6163
    %v6446 = vunpack.c.h.b16 %v6163
    %v6447 = vunpack.c.l.b16 %v6164
    %v6448 = vunpack.c.h.b16 %v6164
    %v6449 = vunpack.c.l.b16 %v6165
    %v6450 = vunpack.c.h.b16 %v6165
    %v6451 = vunpack.c.l.b16 %v6166
    %v6452 = vunpack.c.h.b16 %v6166
    %v6453 = vunpack.c.l.b16 %v6167
    %v6454 = vunpack.c.h.b16 %v6167
    %v6455 = vunpack.c.l.b16 %v6168
    %v6456 = vunpack.c.h.b16 %v6168
    %v6457 = vunpack.c.l.b16 %v6169
    %v6458 = vunpack.c.h.b16 %v6169
    %v6459 = vunpack.c.l.b16 %v6170
    %v6460 = vunpack.c.h.b16 %v6170
    %v6461 = vunpack.c.l.b16 %v6171
    %v6462 = vunpack.c.h.b16 %v6171
    %v6463 = vunpack.c.l.b16 %v6172
    %v6464 = vunpack.c.h.b16 %v6172
    %v6465 = vunpack.c.l.b16 %v6173
    %v6466 = vunpack.c.h.b16 %v6173
    %v6467 = vunpack.c.l.b16 %v6174
    %v6468 = vunpack.c.h.b16 %v6174
    %v6469 = vunpack.c.l.b16 %v6175
    %v6470 = vunpack.c.h.b16 %v6175
    %v6471 = vunpack.c.l.b16 %v6176
    %v6472 = vunpack.c.h.b16 %v6176
    %v6473 = vunpack.c.l.b16 %v6177
    %v6474 = vunpack.c.h.b16 %v6177
    %v6475 = vunpack.c.l.b16 %v6178
    %v6476 = vunpack.c.h.b16 %v6178
    %v6477 = vunpack.c.l.b16 %v6179
    %v6478 = vunpack.c.h.b16 %v6179
    %v6479 = vunpack.c.l.b16 %v6180
    %v6480 = vunpack.c.h.b16 %v6180
    %v6481 = vunpack.c.l.b16 %v6181
    %v6482 = vunpack.c.h.b16 %v6181
    %v6483 = vunpack.c.l.b16 %v6182
    %v6484 = vunpack.c.h.b16 %v6182
    %v6485 = vunpack.c.l.b16 %v6183
    %v6486 = vunpack.c.h.b16 %v6183
    %v6487 = vunpack.c.l.b16 %v6184
    %v6488 = vunpack.c.h.b16 %v6184
    %v6489 = vunpack.c.l.b16 %v6185
    %v6490 = vunpack.c.h.b16 %v6185
    %v6491 = vunpack.c.l.b16 %v6186
    %v6492 = vunpack.c.h.b16 %v6186
    %v6493 = vunpack.c.l.b16 %v6187
    %v6494 = vunpack.c.h.b16 %v6187
    %v6495 = vunpack.c.l.b16 %v6188
    %v6496 = vunpack.c.h.b16 %v6188
    %v6497 = vunpack.c.l.b16 %v6189
    %v6498 = vunpack.c.h.b16 %v6189
    %v6499 = vunpack.c.l.b16 %v6190
    %v6500 = vunpack.c.h.b16 %v6190
    %v6501 = vunpack.c.l.b16 %v6191
    %v6502 = vunpack.c.h.b16 %v6191
    %v6503 = vunpack.c.l.b16 %v6192
    %v6504 = vunpack.c.h.b16 %v6192
    %v6505 = vunpack.c.l.b16 %v6193
    %v6506 = vunpack.c.h.b16 %v6193
    %v6507 = vunpack.c.l.b16 %v6194
    %v6508 = vunpack.c.h.b16 %v6194
    %v6509 = vunpack.c.l.b16 %v6195
    %v6510 = vunpack.c.h.b16 %v6195
    %v6511 = vunpack.c.l.b16 %v6196
    %v6512 = vunpack.c.h.b16 %v6196
    %v6513 = vunpack.c.l.b16 %v6197
    %v6514 = vunpack.c.h.b16 %v6197
    %v6515 = vunpack.c.l.b16 %v6198
    %v6516 = vunpack.c.h.b16 %v6198
    %v6517 = vunpack.c.l.b16 %v6199
    %v6518 = vunpack.c.h.b16 %v6199
    %v6519 = vunpack.c.l.b16 %v6200
    %v6520 = vunpack.c.h.b16 %v6200
    %v6521 = vunpack.c.l.b16 %v6201
    %v6522 = vunpack.c.h.b16 %v6201
    %v6523 = vunpack.c.l.b16 %v6202
    %v6524 = vunpack.c.h.b16 %v6202
    %v6525 = vunpack.c.l.b16 %v6203
    %v6526 = vunpack.c.h.b16 %v6203
    %v6527 = vunpack.c.l.b16 %v6204
    %v6528 = vunpack.c.h.b16 %v6204
    %v6529 = vunpack.c.l.b16 %v6205
    %v6530 = vunpack.c.h.b16 %v6205
    %v6531 = vunpack.c.l.b16 %v6206
    %v6532 = vunpack.c.h.b16 %v6206
    %v6533 = vunpack.c.l.b16 %v6207
    %v6534 = vunpack.c.h.b16 %v6207
    %v6535 = vunpack.c.l.b16 %v6208
    %v6536 = vunpack.c.h.b16 %v6208
    %v6537 = vunpack.c.l.b16 %v6209
    %v6538 = vunpack.c.h.b16 %v6209
    %v6539 = vunpack.c.l.b16 %v6210
    %v6540 = vunpack.c.h.b16 %v6210
    %v6541 = vunpack.c.l.b16 %v6211
    %v6542 = vunpack.c.h.b16 %v6211
    %v6543 = vunpack.c.l.b16 %v6212
    %v6544 = vunpack.c.h.b16 %v6212
    %v6545 = vunpack.c.l.b16 %v6213
    %v6546 = vunpack.c.h.b16 %v6213
    %v6547 = vunpack.c.l.b16 %v6214
    %v6548 = vunpack.c.h.b16 %v6214
    %v6549 = vunpack.c.l.b16 %v6215
    %v6550 = vunpack.c.h.b16 %v6215
    %v6551 = vunpack.c.l.b16 %v6216
    %v6552 = vunpack.c.h.b16 %v6216
    %v6553 = vunpack.c.l.b16 %v6217
    %v6554 = vunpack.c.h.b16 %v6217
    %v6555 = vunpack.c.l.b16 %v6218
    %v6556 = vunpack.c.h.b16 %v6218
    %v6557 = vunpack.c.l.b16 %v6219
    %v6558 = vunpack.c.h.b16 %v6219
    %v6559 = vunpack.c.l.b16 %v6220
    %v6560 = vunpack.c.h.b16 %v6220
    %v6561 = vunpack.c.l.b16 %v6221
    %v6562 = vunpack.c.h.b16 %v6221
    %v6563 = vpack.c.b16 %v6341, %v6339
    %v6564 = vpack.c.b16 %v6342, %v6340
    %v6565 = vpack.c.b16 %v6345, %v6343
    %v6566 = vpack.c.b16 %v6346, %v6344
    %v6567 = vpack.c.b16 %v6349, %v6347
    %v6568 = vpack.c.b16 %v6350, %v6348
    %v6569 = vpack.c.b16 %v6353, %v6351
    %v6570 = vpack.c.b16 %v6354, %v6352
    %v6571 = vpack.c.b16 %v6357, %v6355
    %v6572 = vpack.c.b16 %v6358, %v6356
    %v6573 = vpack.c.b16 %v6361, %v6359
    %v6574 = vpack.c.b16 %v6362, %v6360
    %v6575 = vpack.c.b16 %v6365, %v6363
    %v6576 = vpack.c.b16 %v6366, %v6364
    %v6577 = vpack.c.b16 %v6369, %v6367
    %v6578 = vpack.c.b16 %v6370, %v6368
    %v6579 = vpack.c.b16 %v6373, %v6371
    %v6580 = vpack.c.b16 %v6374, %v6372
    %v6581 = vpack.c.b16 %v6377, %v6375
    %v6582 = vpack.c.b16 %v6378, %v6376
    %v6583 = vpack.c.b16 %v6381, %v6379
    %v6584 = vpack.c.b16 %v6382, %v6380
    %v6585 = vpack.c.b16 %v6385, %v6383
    %v6586 = vpack.c.b16 %v6386, %v6384
    %v6587 = vpack.c.b16 %v6389, %v6387
    %v6588 = vpack.c.b16 %v6390, %v6388
    %v6589 = vpack.c.b16 %v6393, %v6391
    %v6590 = vpack.c.b16 %v6394, %v6392
    %v6591 = vpack.c.b16 %v6397, %v6395
    %v6592 = vpack.c.b16 %v6398, %v6396
    %v6593 = vpack.c.b16 %v6401, %v6399
    %v6594 = vpack.c.b16 %v6402, %v6400
    %v6595 = vpack.c.b16 %v6405, %v6403
    %v6596 = vpack.c.b16 %v6406, %v6404
    %v6597 = vpack.c.b16 %v6409, %v6407
    %v6598 = vpack.c.b16 %v6410, %v6408
    %v6599 = vpack.c.b16 %v6413, %v6411
    %v6600 = vpack.c.b16 %v6414, %v6412
    %v6601 = vpack.c.b16 %v6417, %v6415
    %v6602 = vpack.c.b16 %v6418, %v6416
    %v6603 = vpack.c.b16 %v6421, %v6419
    %v6604 = vpack.c.b16 %v6422, %v6420
    %v6605 = vpack.c.b16 %v6425, %v6423
    %v6606 = vpack.c.b16 %v6426, %v6424
    %v6607 = vpack.c.b16 %v6429, %v6427
    %v6608 = vpack.c.b16 %v6430, %v6428
    %v6609 = vpack.c.b16 %v6433, %v6431
    %v6610 = vpack.c.b16 %v6434, %v6432
    %v6611 = vpack.c.b16 %v6437, %v6435
    %v6612 = vpack.c.b16 %v6438, %v6436
    %v6613 = vpack.c.b16 %v6441, %v6439
    %v6614 = vpack.c.b16 %v6442, %v6440
    %v6615 = vpack.c.b16 %v6445, %v6443
    %v6616 = vpack.c.b16 %v6446, %v6444
    %v6617 = vpack.c.b16 %v6449, %v6447
    %v6618 = vpack.c.b16 %v6450, %v6448
    %v6619 = vpack.c.b16 %v6453, %v6451
    %v6620 = vpack.c.b16 %v6454, %v6452
    %v6621 = vpack.c.b16 %v6457, %v6455
    %v6622 = vpack.c.b16 %v6458, %v6456
    %v6623 = vpack.c.b16 %v6461, %v6459
    %v6624 = vpack.c.b16 %v6462, %v6460
    %v6625 = vpack.c.b16 %v6465, %v6463
    %v6626 = vpack.c.b16 %v6466, %v6464
    %v6627 = vpack.c.b16 %v6469, %v6467
    %v6628 = vpack.c.b16 %v6470, %v6468
    %v6629 = vpack.c.b16 %v6473, %v6471
    %v6630 = vpack.c.b16 %v6474, %v6472
    %v6631 = vpack.c.b16 %v6477, %v6475
    %v6632 = vpack.c.b16 %v6478, %v6476
    %v6633 = vpack.c.b16 %v6481, %v6479
    %v6634 = vpack.c.b16 %v6482, %v6480
    %v6635 = vpack.c.b16 %v6485, %v6483
    %v6636 = vpack.c.b16 %v6486, %v6484
    %v6637 = vpack.c.b16 %v6489, %v6487
    %v6638 = vpack.c.b16 %v6490, %v6488
    %v6639 = vpack.c.b16 %v6493, %v6491
    %v6640 = vpack.c.b16 %v6494, %v6492
    %v6641 = vpack.c.b16 %v6497, %v6495
    %v6642 = vpack.c.b16 %v6498, %v6496
    %v6643 = vpack.c.b16 %v6501, %v6499
    %v6644 = vpack.c.b16 %v6502, %v6500
    %v6645 = vpack.c.b16 %v6505, %v6503
    %v6646 = vpack.c.b16 %v6506, %v6504
    %v6647 = vpack.c.b16 %v6509, %v6507
    %v6648 = vpack.c.b16 %v6510, %v6508
    %v6649 = vpack.c.b16 %v6513, %v6511
    %v6650 = vpack.c.b16 %v6514, %v6512
    %v6651 = vpack.c.b16 %v6517, %v6515
    %v6652 = vpack.c.b16 %v6518, %v6516
    %v6653 = vpack.c.b16 %v6521, %v6519
    %v6654 = vpack.c.b16 %v6522, %v6520
    %v6655 = vpack.c.b16 %v6525, %v6523
    %v6656 = vpack.c.b16 %v6526, %v6524
    %v6657 = vpack.c.b16 %v6529, %v6527
    %v6658 = vpack.c.b16 %v6530, %v6528
    %v6659 = vpack.c.b16 %v6533, %v6531
    %v6660 = vpack.c.b16 %v6534, %v6532
    %v6661 = vpack.c.b16 %v6537, %v6535
    %v6662 = vpack.c.b16 %v6538, %v6536
    %v6663 = vpack.c.b16 %v6541, %v6539
    %v6664 = vpack.c.b16 %v6542, %v6540
    %v6665 = vpack.c.b16 %v6545, %v6543
    %v6666 = vpack.c.b16 %v6546, %v6544
    %v6667 = vpack.c.b16 %v6549, %v6547
    %v6668 = vpack.c.b16 %v6550, %v6548
    %v6669 = vpack.c.b16 %v6553, %v6551
    %v6670 = vpack.c.b16 %v6554, %v6552
    %v6671 = vpack.c.b16 %v6557, %v6555
    %v6672 = vpack.c.b16 %v6558, %v6556
    %v6673 = vpack.c.b16 %v6561, %v6559
    %v6674 = vpack.c.b16 %v6562, %v6560
    %6787 = vmatpush.bf16.msra.mxu0 %v6577
    %6788 = vmatpush.bf16.msra.mxu0 %v6575
    %6789 = vmatpush.bf16.msra.mxu0 %v6573
    %6790 = vmatpush.bf16.msra.mxu0 %v6571
    %6791 = vmatpush.bf16.msra.mxu0 %v6569
    %6792 = vmatpush.bf16.msra.mxu0 %v6567
    %6793 = vmatpush.bf16.msra.mxu0 %v6565
    %6794 = vmatpush.bf16.msra.mxu0 %v6563
    %6795 = vmatmul.bf16.gmra.mxu0 %v6103
    %v6796 = vpop.f32.mrf.mxu0
    %v6797 = vadd.f32 %v6223, %v6796
    %v6798 = vpop.f32.mrf.mxu0
    %6799 = vdwg.mxu0
    %6800 = vmatpush.bf16.msra.mxu0 %v6593
    %6801 = vmatpush.bf16.msra.mxu0 %v6591
    %6802 = vmatpush.bf16.msra.mxu0 %v6589
    %6803 = vmatpush.bf16.msra.mxu0 %v6587
    %6804 = vmatpush.bf16.msra.mxu0 %v6585
    %6805 = vmatpush.bf16.msra.mxu0 %v6583
    %6806 = vmatpush.bf16.msra.mxu0 %v6581
    %6807 = vmatpush.bf16.msra.mxu0 %v6579
    %6808 = vmatmul.bf16.gmra.mxu0 %v6104
    %v6809 = vpop.f32.mrf.mxu0
    %v6810 = vadd.f32 %v6797, %v6809
    %v6811 = vpop.f32.mrf.mxu0
    %6812 = vdwg.mxu0
    %6813 = vmatpush.bf16.msra.mxu0 %v6609
    %6814 = vmatpush.bf16.msra.mxu0 %v6607
    %6815 = vmatpush.bf16.msra.mxu0 %v6605
    %6816 = vmatpush.bf16.msra.mxu0 %v6603
    %6817 = vmatpush.bf16.msra.mxu0 %v6601
    %6818 = vmatpush.bf16.msra.mxu0 %v6599
    %6819 = vmatpush.bf16.msra.mxu0 %v6597
    %6820 = vmatpush.bf16.msra.mxu0 %v6595
    %6821 = vmatmul.bf16.gmra.mxu0 %v6105
    %v6822 = vpop.f32.mrf.mxu0
    %v6823 = vadd.f32 %v6810, %v6822
    %v6824 = vpop.f32.mrf.mxu0
    %6825 = vdwg.mxu0
    %6826 = vmatpush.bf16.msra.mxu0 %v6625
    %6827 = vmatpush.bf16.msra.mxu0 %v6623
    %6828 = vmatpush.bf16.msra.mxu0 %v6621
    %6829 = vmatpush.bf16.msra.mxu0 %v6619
    %6830 = vmatpush.bf16.msra.mxu0 %v6617
    %6831 = vmatpush.bf16.msra.mxu0 %v6615
    %6832 = vmatpush.bf16.msra.mxu0 %v6613
    %6833 = vmatpush.bf16.msra.mxu0 %v6611
    %6834 = vmatmul.bf16.gmra.mxu0 %v6106
    %v6835 = vpop.f32.mrf.mxu0
    %v6836 = vadd.f32 %v6823, %v6835
    %v6837 = vpop.f32.mrf.mxu0
    %6838 = vdwg.mxu0
    %6839 = vmatpush.bf16.msra.mxu0 %v6641
    %6840 = vmatpush.bf16.msra.mxu0 %v6639
    %6841 = vmatpush.bf16.msra.mxu0 %v6637
    %6842 = vmatpush.bf16.msra.mxu0 %v6635
    %6843 = vmatpush.bf16.msra.mxu0 %v6633
    %6844 = vmatpush.bf16.msra.mxu0 %v6631
    %6845 = vmatpush.bf16.msra.mxu0 %v6629
    %6846 = vmatpush.bf16.msra.mxu0 %v6627
    %6847 = vmatmul.bf16.gmra.mxu0 %v6107
    %v6848 = vpop.f32.mrf.mxu0
    %v6849 = vadd.f32 %v6836, %v6848
    %v6850 = vpop.f32.mrf.mxu0
    %6851 = vdwg.mxu0
    %6852 = vmatpush.bf16.msra.mxu0 %v6657
    %6853 = vmatpush.bf16.msra.mxu0 %v6655
    %6854 = vmatpush.bf16.msra.mxu0 %v6653
    %6855 = vmatpush.bf16.msra.mxu0 %v6651
    %6856 = vmatpush.bf16.msra.mxu0 %v6649
    %6857 = vmatpush.bf16.msra.mxu0 %v6647
    %6858 = vmatpush.bf16.msra.mxu0 %v6645
    %6859 = vmatpush.bf16.msra.mxu0 %v6643
    %6860 = vmatmul.bf16.gmra.mxu0 %v6108
    %v6861 = vpop.f32.mrf.mxu0
    %v6862 = vadd.f32 %v6849, %v6861
    %v6863 = vpop.f32.mrf.mxu0
    %6864 = vdwg.mxu0
    %6865 = vmatpush.bf16.msra.mxu0 %v6673
    %6866 = vmatpush.bf16.msra.mxu0 %v6671
    %6867 = vmatpush.bf16.msra.mxu0 %v6669
    %6868 = vmatpush.bf16.msra.mxu0 %v6667
    %6869 = vmatpush.bf16.msra.mxu0 %v6665
    %6870 = vmatpush.bf16.msra.mxu0 %v6663
    %6871 = vmatpush.bf16.msra.mxu0 %v6661
    %6872 = vmatpush.bf16.msra.mxu0 %v6659
    %6873 = vmatmul.bf16.gmra.mxu0 %v6109
    %v6874 = vpop.f32.mrf.mxu0
    %v6875 = vadd.f32 %v6862, %v6874
    %v6876 = vpop.f32.mrf.mxu0
    %6877 = vdwg.mxu0
    %6878 = vmatpush.bf16.msra.mxu0 %v6578
    %6879 = vmatpush.bf16.msra.mxu0 %v6576
    %6880 = vmatpush.bf16.msra.mxu0 %v6574
    %6881 = vmatpush.bf16.msra.mxu0 %v6572
    %6882 = vmatpush.bf16.msra.mxu0 %v6570
    %6883 = vmatpush.bf16.msra.mxu0 %v6568
    %6884 = vmatpush.bf16.msra.mxu0 %v6566
    %6885 = vmatpush.bf16.msra.mxu0 %v6564
    %6886 = vmatmul.bf16.gmra.mxu0 %v6103
    %v6887 = vpop.f32.mrf.mxu0
    %v6888 = vadd.f32 %v6224, %v6887
    %v6889 = vpop.f32.mrf.mxu0
    %6890 = vdwg.mxu0
    %6891 = vmatpush.bf16.msra.mxu0 %v6594
    %6892 = vmatpush.bf16.msra.mxu0 %v6592
    %6893 = vmatpush.bf16.msra.mxu0 %v6590
    %6894 = vmatpush.bf16.msra.mxu0 %v6588
    %6895 = vmatpush.bf16.msra.mxu0 %v6586
    %6896 = vmatpush.bf16.msra.mxu0 %v6584
    %6897 = vmatpush.bf16.msra.mxu0 %v6582
    %6898 = vmatpush.bf16.msra.mxu0 %v6580
    %6899 = vmatmul.bf16.gmra.mxu0 %v6104
    %v6900 = vpop.f32.mrf.mxu0
    %v6901 = vadd.f32 %v6888, %v6900
    %v6902 = vpop.f32.mrf.mxu0
    %6903 = vdwg.mxu0
    %6904 = vmatpush.bf16.msra.mxu0 %v6610
    %6905 = vmatpush.bf16.msra.mxu0 %v6608
    %6906 = vmatpush.bf16.msra.mxu0 %v6606
    %6907 = vmatpush.bf16.msra.mxu0 %v6604
    %6908 = vmatpush.bf16.msra.mxu0 %v6602
    %6909 = vmatpush.bf16.msra.mxu0 %v6600
    %6910 = vmatpush.bf16.msra.mxu0 %v6598
    %6911 = vmatpush.bf16.msra.mxu0 %v6596
    %6912 = vmatmul.bf16.gmra.mxu0 %v6105
    %v6913 = vpop.f32.mrf.mxu0
    %v6914 = vadd.f32 %v6901, %v6913
    %v6915 = vpop.f32.mrf.mxu0
    %6916 = vdwg.mxu0
    %6917 = vmatpush.bf16.msra.mxu0 %v6626
    %6918 = vmatpush.bf16.msra.mxu0 %v6624
    %6919 = vmatpush.bf16.msra.mxu0 %v6622
    %6920 = vmatpush.bf16.msra.mxu0 %v6620
    %6921 = vmatpush.bf16.msra.mxu0 %v6618
    %6922 = vmatpush.bf16.msra.mxu0 %v6616
    %6923 = vmatpush.bf16.msra.mxu0 %v6614
    %6924 = vmatpush.bf16.msra.mxu0 %v6612
    %6925 = vmatmul.bf16.gmra.mxu0 %v6106
    %v6926 = vpop.f32.mrf.mxu0
    %v6927 = vadd.f32 %v6914, %v6926
    %v6928 = vpop.f32.mrf.mxu0
    %6929 = vdwg.mxu0
    %6930 = vmatpush.bf16.msra.mxu0 %v6642
    %6931 = vmatpush.bf16.msra.mxu0 %v6640
    %6932 = vmatpush.bf16.msra.mxu0 %v6638
    %6933 = vmatpush.bf16.msra.mxu0 %v6636
    %6934 = vmatpush.bf16.msra.mxu0 %v6634
    %6935 = vmatpush.bf16.msra.mxu0 %v6632
    %6936 = vmatpush.bf16.msra.mxu0 %v6630
    %6937 = vmatpush.bf16.msra.mxu0 %v6628
    %6938 = vmatmul.bf16.gmra.mxu0 %v6107
    %v6939 = vpop.f32.mrf.mxu0
    %v6940 = vadd.f32 %v6927, %v6939
    %v6941 = vpop.f32.mrf.mxu0
    %6942 = vdwg.mxu0
    %6943 = vmatpush.bf16.msra.mxu0 %v6658
    %6944 = vmatpush.bf16.msra.mxu0 %v6656
    %6945 = vmatpush.bf16.msra.mxu0 %v6654
    %6946 = vmatpush.bf16.msra.mxu0 %v6652
    %6947 = vmatpush.bf16.msra.mxu0 %v6650
    %6948 = vmatpush.bf16.msra.mxu0 %v6648
    %6949 = vmatpush.bf16.msra.mxu0 %v6646
    %6950 = vmatpush.bf16.msra.mxu0 %v6644
    %6951 = vmatmul.bf16.gmra.mxu0 %v6108
    %v6952 = vpop.f32.mrf.mxu0
    %v6953 = vadd.f32 %v6940, %v6952
    %v6954 = vpop.f32.mrf.mxu0
    %6955 = vdwg.mxu0
    %6956 = vmatpush.bf16.msra.mxu0 %v6674
    %6957 = vmatpush.bf16.msra.mxu0 %v6672
    %6958 = vmatpush.bf16.msra.mxu0 %v6670
    %6959 = vmatpush.bf16.msra.mxu0 %v6668
    %6960 = vmatpush.bf16.msra.mxu0 %v6666
    %6961 = vmatpush.bf16.msra.mxu0 %v6664
    %6962 = vmatpush.bf16.msra.mxu0 %v6662
    %6963 = vmatpush.bf16.msra.mxu0 %v6660
    %6964 = vmatmul.bf16.gmra.mxu0 %v6109
    %v6965 = vpop.f32.mrf.mxu0
    %v6966 = vadd.f32 %v6953, %v6965
    %v6967 = vpop.f32.mrf.mxu0
    %6968 = vdwg.mxu0
    %v6969 = vpack.c.bf16 %v6966, %v6875
    %v6970 = vunpack.c.l.bf16 %v6969
    %v6971 = vunpack.c.h.bf16 %v6969
    %v6972 = vmax.f32 %v6970, 0.0
    %v6973 = vmax.f32 %v6971, 0.0
    %v6974 = vpack.c.bf16 %v6972, %v6972
    %v6975 = vpack.c.bf16 %v6973, %v6973
    %v6976 = vld [vmem:[#allocation9] sm:$0xf]
    %v6977 = vld [vmem:[#allocation9 + $0x4] sm:$0xf]
    %v6978 = vld [vmem:[#allocation9 + $0x8] sm:$0xf]
    %v6979 = vld [vmem:[#allocation9 + $0xc] sm:$0xf]
    %v6980 = vld [vmem:[#allocation9 + $0x10] sm:$0xf]
    %v6981 = vld [vmem:[#allocation9 + $0x14] sm:$0xf]
    %v6982 = vld [vmem:[#allocation9 + $0x18] sm:$0xf]
    %v6983 = vld [vmem:[#allocation9 + $0x1c] sm:$0xf]
    %v6984 = vld [vmem:[#allocation9 + $0x20] sm:$0xf]
    %v6985 = vld [vmem:[#allocation9 + $0x24] sm:$0xf]
    %v6986 = vld [vmem:[#allocation9 + $0x28] sm:$0xf]
    %v6987 = vld [vmem:[#allocation9 + $0x2c] sm:$0xf]
    %v6988 = vld [vmem:[#allocation9 + $0x30] sm:$0xf]
    %v6989 = vld [vmem:[#allocation9 + $0x34] sm:$0xf]
    %v6990 = vld [vmem:[#allocation9 + $0x38] sm:$0xf]
    %v6991 = vld [vmem:[#allocation9 + $0x3c] sm:$0xf]
    %v6992 = vld [vmem:[#allocation9 + $0x40] sm:$0xf]
    %v6993 = vld [vmem:[#allocation9 + $0x44] sm:$0xf]
    %v6994 = vld [vmem:[#allocation9 + $0x48] sm:$0xf]
    %v6995 = vld [vmem:[#allocation9 + $0x4c] sm:$0xf]
    %v6996 = vld [vmem:[#allocation9 + $0x50] sm:$0xf]
    %v6997 = vld [vmem:[#allocation9 + $0x54] sm:$0xf]
    %v6998 = vld [vmem:[#allocation9 + $0x58] sm:$0xf]
    %v6999 = vld [vmem:[#allocation9 + $0x5c] sm:$0xf]
    %v7000 = vld [vmem:[#allocation9 + $0x60] sm:$0xf]
    %v7001 = vld [vmem:[#allocation9 + $0x64] sm:$0xf]
    %v7002 = vld [vmem:[#allocation9 + $0x68] sm:$0xf]
    %v7003 = vld [vmem:[#allocation9 + $0x6c] sm:$0xf]
    %v7004 = vld [vmem:[#allocation9 + $0x70] sm:$0xf]
    %v7005 = vld [vmem:[#allocation9 + $0x74] sm:$0xf]
    %v7006 = vld [vmem:[#allocation9 + $0x78] sm:$0xf]
    %v7007 = vld [vmem:[#allocation9 + $0x7c] sm:$0xf]
    %v7040 = vunpack.c.l.b16 %v6976
    %v7041 = vunpack.c.l.b16 %v6977
    %v7042 = vunpack.c.l.b16 %v6978
    %v7043 = vunpack.c.l.b16 %v6979
    %v7044 = vunpack.c.l.b16 %v6980
    %v7045 = vunpack.c.l.b16 %v6981
    %v7046 = vunpack.c.l.b16 %v6982
    %v7047 = vunpack.c.l.b16 %v6983
    %v7048 = vunpack.c.l.b16 %v6984
    %v7049 = vunpack.c.l.b16 %v6985
    %v7050 = vunpack.c.l.b16 %v6986
    %v7051 = vunpack.c.l.b16 %v6987
    %v7052 = vunpack.c.l.b16 %v6988
    %v7053 = vunpack.c.l.b16 %v6989
    %v7054 = vunpack.c.l.b16 %v6990
    %v7055 = vunpack.c.l.b16 %v6991
    %v7056 = vunpack.c.l.b16 %v6992
    %v7057 = vunpack.c.l.b16 %v6993
    %v7058 = vunpack.c.l.b16 %v6994
    %v7059 = vunpack.c.l.b16 %v6995
    %v7060 = vunpack.c.l.b16 %v6996
    %v7061 = vunpack.c.l.b16 %v6997
    %v7062 = vunpack.c.l.b16 %v6998
    %v7063 = vunpack.c.l.b16 %v6999
    %v7064 = vunpack.c.l.b16 %v7000
    %v7065 = vunpack.c.l.b16 %v7001
    %v7066 = vunpack.c.l.b16 %v7002
    %v7067 = vunpack.c.l.b16 %v7003
    %v7068 = vunpack.c.l.b16 %v7004
    %v7069 = vunpack.c.l.b16 %v7005
    %v7070 = vunpack.c.l.b16 %v7006
    %v7071 = vunpack.c.l.b16 %v7007
    %v7072 = vpack.c.b16 %v7041, %v7040
    %v7073 = vpack.c.b16 %v7043, %v7042
    %v7074 = vpack.c.b16 %v7045, %v7044
    %v7075 = vpack.c.b16 %v7047, %v7046
    %v7076 = vpack.c.b16 %v7049, %v7048
    %v7077 = vpack.c.b16 %v7051, %v7050
    %v7078 = vpack.c.b16 %v7053, %v7052
    %v7079 = vpack.c.b16 %v7055, %v7054
    %v7080 = vpack.c.b16 %v7057, %v7056
    %v7081 = vpack.c.b16 %v7059, %v7058
    %v7082 = vpack.c.b16 %v7061, %v7060
    %v7083 = vpack.c.b16 %v7063, %v7062
    %v7084 = vpack.c.b16 %v7065, %v7064
    %v7085 = vpack.c.b16 %v7067, %v7066
    %v7086 = vpack.c.b16 %v7069, %v7068
    %v7087 = vpack.c.b16 %v7071, %v7070
    %7104 = vmatpush.bf16.msra.mxu0 %v7079
    %7105 = vmatpush.bf16.msra.mxu0 %v7078
    %7106 = vmatpush.bf16.msra.mxu0 %v7077
    %7107 = vmatpush.bf16.msra.mxu0 %v7076
    %7108 = vmatpush.bf16.msra.mxu0 %v7075
    %7109 = vmatpush.bf16.msra.mxu0 %v7074
    %7110 = vmatpush.bf16.msra.mxu0 %v7073
    %7111 = vmatpush.bf16.msra.mxu0 %v7072
    %7112 = vmatmul.bf16.gmra.mxu0 %v6974
    %v7113 = vpop.f32.mrf.mxu0
    %v7114 = vadd.f32 0.0, %v7113
    %v7115 = vpop.f32.mrf.mxu0
    %7116 = vdwg.mxu0
    %7117 = vmatpush.bf16.msra.mxu0 %v7087
    %7118 = vmatpush.bf16.msra.mxu0 %v7086
    %7119 = vmatpush.bf16.msra.mxu0 %v7085
    %7120 = vmatpush.bf16.msra.mxu0 %v7084
    %7121 = vmatpush.bf16.msra.mxu0 %v7083
    %7122 = vmatpush.bf16.msra.mxu0 %v7082
    %7123 = vmatpush.bf16.msra.mxu0 %v7081
    %7124 = vmatpush.bf16.msra.mxu0 %v7080
    %7125 = vmatmul.bf16.gmra.mxu0 %v6975
    %v7126 = vpop.f32.mrf.mxu0
    %v7127 = vadd.f32 %v7114, %v7126
    %v7128 = vpop.f32.mrf.mxu0
    %7129 = vdwg.mxu0
    %v7131 = vperm.slane %v131, 0
    %v7133 = vadd.f32 %v7127, %v7131
    %v7134 = vxor.u32 %v7133, 2147483648
    %v7135 = vmul.f32 %v7134, 1.442695
    %v7136 = vpow.pop %v7135
    %v7137 = vadd.f32 %v7136, 1.0
    %v7138 = vrcp.pop %v7137
    %v7139 = vmul.f32 %v7137, %v7138
    %v7140 = vsub.f32 1.0, %v7139
    %v7141 = vmul.f32 %v7138, %v7140
    %v7142 = vadd.f32 %v7138, %v7141
    %vm7143 = vweird.f32 %v7137
    %vm7144 = vweird.f32 %v7138
    %vm7145 = vmor %vm7143, %vm7144
    %v7146 = vsel %vm7145, %v7138, %v7142
    %v7147 = vand.u32 2147483647, %v7137
    %vm7148 = vcmp.eq.f32.partialorder %v7147, 8.507059e+37
    %v7149 = vand.u32 %v7137, 2147483648
    %v7150 = vor.u32 1.1754944e-38, %v7149
    %v7151 = vsel %vm7148, %v7150, %v7146
    %v7152 = vmul.f32 1.0, %v7151
    %vm7153 = vcmask 7168
    %7154 = vst.msk [vmem:[%s6] sm:$0xff] %vm7153, %v7152
    // Predicated region
    $region50: #{discriminator_forward.1} parent=1 // pred_check
      _
    $region51: #{discriminator_forward.1} parent=1 // pred_check_branch
      %7156 = sbr.rel (0) target = $region53
    $region52: #{discriminator_forward.1} parent=1 // pred_region
      _
    $region53: #{discriminator_forward.1} parent=1 // pred_fallthru
      _
    // Predicated region
    $region54: #{discriminator_forward.1} parent=1 // pred_check
      _
    $region55: #{discriminator_forward.1} parent=1 // pred_check_branch
      %7158 = sbr.rel (0) target = $region57
    $region56: #{discriminator_forward.1} parent=1 // pred_region
      _
    $region57: #{discriminator_forward.1} parent=1 // pred_fallthru
      _
    %7159 = vsyncpa [#allocation3], 1
    %7160 = vsyncpa [#allocation5], 1
    %7161 = vsyncpa [#allocation8], 1
    %7162 = vsyncpa [#allocation11], 1

</llo_original>
